<compile_context>
chip_gen: v6e
topology: v6e:2x2x1
jax: 0.10.0
libtpu: 0.0.40
codegen_flags: <defaults>
</compile_context>

<pallas_src>
import jax
import jax.numpy as jnp
from jax.experimental import pallas as pl
from jax.experimental.pallas import tpu as pltpu

_LANE = 128
_MAX_BLOCK_ROWS = 8192          # (8192, 128) f32 block = 4 MiB tile
_MIN_BLOCK_ROWS = _MAX_BLOCK_ROWS // 2
_PALLAS_MIN_ELEMS = 1 << 23     # below this, the fused XLA multiply wins


# ----------------------------------------------------------------------------
# Kernel bodies
# ----------------------------------------------------------------------------
def _neg_scale_kernel_native(alpha_ref, g_ref, o_ref):
    # Multiply in the gradient's native dtype (f32 everywhere; bf16 on v6e/v7x).
    neg_alpha = (-alpha_ref[0]).astype(o_ref.dtype)
    o_ref[...] = g_ref[...] * neg_alpha


def _neg_scale_kernel_f32(alpha_ref, g_ref, o_ref):
    # Upcast path: kept for sub-32-bit grads on v5e (no bf16 VPU).
    o_ref[...] = (g_ref[...].astype(jnp.float32) * (-alpha_ref[0])).astype(o_ref.dtype)


# ----------------------------------------------------------------------------
# Trace-time hardware / tiling decisions
# ----------------------------------------------------------------------------
def _device_kind():
    try:
        return jax.devices()[0].device_kind.lower()
    except Exception:
        return ""


def _select_kernel(dtype):
    if dtype == jnp.float32:
        return _neg_scale_kernel_native
    kind = _device_kind()
    if "v5e" in kind or "v5 lite" in kind:
        return _neg_scale_kernel_f32          # no bf16 VPU on v5e
    return _neg_scale_kernel_native


def _dim_semantics(num_blocks):
    kind = _device_kind()
    if "v7" in kind and num_blocks >= 2:
        # Shard the streaming grid across both TensorCores on v7x.
        return (getattr(pltpu, "CORE_PARALLEL", "parallel"),)
    return ("parallel",)


def _pick_block_rows(rows):
    """Pick the largest block_rows <= _MAX_BLOCK_ROWS; prefer one that divides
    rows (no masked tail) when it can be found cheaply."""
    if rows <= _MAX_BLOCK_ROWS:
        return rows                           # single full-dim block
    for br in range(_MAX_BLOCK_ROWS, _MIN_BLOCK_ROWS - 1, -8):
        if rows % br == 0:
            return br
    return _MAX_BLOCK_ROWS                    # accept a masked tail block


# ----------------------------------------------------------------------------
# Pallas backward kernel wrapper
# ----------------------------------------------------------------------------
def _neg_scale_pallas(g, alpha):
    """Compute -alpha * g with a tiled Pallas kernel. Requires g.size % 128 == 0."""
    orig_shape = g.shape
    n = g.size
    rows = n // _LANE
    slab = g.reshape(rows, _LANE)             # lane-dense view, no padding
    block_rows = _pick_block_rows(rows)
    num_blocks = pl.cdiv(rows, block_rows)
    alpha_arr = jnp.asarray(alpha, dtype=jnp.float32).reshape((1,))
    kernel = _select_kernel(g.dtype)

    out = pl.pallas_call(
        kernel,
        out_shape=jax.ShapeDtypeStruct((rows, _LANE), g.dtype),
        grid=(num_blocks,),
        in_specs=[
            pl.BlockSpec(memory_space=pltpu.MemorySpace.SMEM),       # alpha scalar
            pl.BlockSpec((block_rows, _LANE), lambda i: (i, 0)),     # grad tile
        ],
        out_specs=pl.BlockSpec((block_rows, _LANE), lambda i: (i, 0)),
        input_output_aliases={1: 0},          # donate the incoming grad buffer
        compiler_params=pltpu.CompilerParams(
            dimension_semantics=_dim_semantics(num_blocks),
            vmem_limit_bytes=32 * 1024 * 1024,  # needed for 4 MiB tiles on v5e;
                                                # within v7x's scoped budget
        ),
        cost_estimate=pl.CostEstimate(
            flops=n,
            transcendentals=0,
            bytes_accessed=2 * n * g.dtype.itemsize,
        ),
    )(alpha_arr, slab)
    return out.reshape(orig_shape)


def _reverse_grad(g, alpha):
    """Dispatch: Pallas kernel only for very large lane-aligned grads; otherwise
    emit the plain expression so XLA fuses the scale into neighbouring ops."""
    n = g.size
    if n >= _PALLAS_MIN_ELEMS and n % _LANE == 0:
        return _neg_scale_pallas(g, alpha)
    return (g.astype(jnp.float32) * (-jnp.asarray(alpha, jnp.float32))).astype(g.dtype)


# ----------------------------------------------------------------------------
# custom_vjp identity with reversed gradient
# ----------------------------------------------------------------------------
@jax.custom_vjp
def gradient_reversal(x, alpha=1.0):
    """Forward: identity (no kernel). Backward: -alpha * grad."""
    return x


def _grl_fwd(x, alpha):
    return x, (jnp.asarray(alpha, dtype=jnp.float32),)


def _grl_bwd(res, g):
    (alpha,) = res
    return _reverse_grad(g, alpha), jnp.zeros_like(alpha)


gradient_reversal.defvjp(_grl_fwd, _grl_bwd)


class GradientReversal:
    """JAX/Pallas analogue of the PyTorch GradientReversal module."""

    def __init__(self, alpha=1.0):
        self.alpha = jnp.asarray(alpha, dtype=jnp.float32)

    def __call__(self, x):
        return gradient_reversal(x, self.alpha)

    def update_alpha(self, alpha):
        # alpha may be a Python float or a (traced) JAX scalar — no recompile of
        # the backward kernel either way, since it is read from SMEM at runtime.
        self.alpha = jnp.asarray(alpha, dtype=jnp.float32)


if __name__ == "__main__":
    key = jax.random.PRNGKey(0)

    # --- Small NCHW example matching the PyTorch module (2, 4, 16, 16) -------
    x = jax.random.normal(key, (2, 4, 16, 16), dtype=jnp.float32)
    grl = GradientReversal(alpha=2.0)

    y = jax.block_until_ready(grl(x))
    assert y.shape == x.shape and y.dtype == x.dtype
    assert jnp.allclose(y, x), "forward is not identity"

    g_small = jax.block_until_ready(jax.grad(lambda v: jnp.sum(grl(v)))(x))
    assert jnp.allclose(g_small, jnp.full_like(x, -2.0)), "backward is not -alpha * grad"

    # --- Medium grad: stays on the fused XLA path (below Pallas threshold) ---
    kb, kg, kt = jax.random.split(key, 3)
    med = jax.random.normal(kb, (1024, 2048), dtype=jnp.float32)
    grl.update_alpha(3.5)
    g_med = jax.block_until_ready(jax.grad(lambda v: jnp.sum(grl(v)))(med))
    assert jnp.allclose(g_med, jnp.full_like(med, -3.5)), "fused backward wrong"

    # --- Large grad: exercises the Pallas backward kernel through custom_vjp -
    big = jnp.ones((2048, 4096), dtype=jnp.float32)          # 2^23 elems -> Pallas path
    grl.update_alpha(1.25)
    g_big = jax.block_until_ready(jax.grad(lambda v: jnp.sum(grl(v)))(big))
    assert jnp.allclose(g_big, jnp.full_like(big, -1.25)), "Pallas backward (grad) wrong"

    # --- Direct kernel check against the reference elementwise formula -------
    g_rand = jax.random.normal(kg, (1024, 2048), dtype=jnp.float32)   # rows=16384, grid=2
    out = jax.block_until_ready(_neg_scale_pallas(g_rand, 3.5))
    assert jnp.allclose(out, -3.5 * g_rand, rtol=1e-6, atol=1e-6), "Pallas kernel wrong"

    # --- Masked-tail check: rows not a multiple of block_rows ----------------
    g_tail = jax.random.normal(kt, (9000, _LANE), dtype=jnp.float32)  # 9000 % 8192 != 0
    out_tail = jax.block_until_ready(_neg_scale_pallas(g_tail, 0.75))
    assert jnp.allclose(out_tail, -0.75 * g_tail, rtol=1e-6, atol=1e-6), \
        "Pallas masked-tail block wrong"

    print("KERNEL_OK")
</pallas_src>

<mosaic_0001>
module attributes {stable_mosaic.version = 11 : i64} {
  func.func @_neg_scale_kernel_native(%arg0: i32, %arg1: memref<1xf32, #tpu.memory_space<smem>>, %arg2: memref<8192x128xf32, #tpu.memory_space<vmem>>, %arg3: memref<8192x128xf32, #tpu.memory_space<vmem>>) attributes {dimension_semantics = [#tpu.dimension_semantics<parallel>], iteration_bounds = array<i64: 8>, scalar_prefetch = 0 : i64, scratch_operands = 0 : i64, tpu.core_type = #tpu.core_type<tc>, window_params = [{transform_indices = @transform_0, window_bounds = array<i64: 1>}, {transform_indices = @transform_1, window_bounds = array<i64: 8192, 128>}, {transform_indices = @transform_2, window_bounds = array<i64: 8192, 128>}]} {
    %c0 = arith.constant 0 : index
    %0 = memref.load %arg1[%c0] : memref<1xf32, #tpu.memory_space<smem>>
    %cst = arith.constant 0.000000e+00 : f32
    %1 = arith.subf %cst, %0 : f32
    %c0_0 = arith.constant 0 : index
    %c0_1 = arith.constant 0 : index
    %2 = vector.load %arg2[%c0_0, %c0_1] : memref<8192x128xf32, #tpu.memory_space<vmem>>, vector<8192x128xf32>
    %3 = vector.broadcast %1 : f32 to vector<8192x128xf32>
    %4 = arith.mulf %2, %3 : vector<8192x128xf32>
    %c0_2 = arith.constant 0 : index
    %c0_3 = arith.constant 0 : index
    %5 = vector.load %arg3[%c0_2, %c0_3] : memref<8192x128xf32, #tpu.memory_space<vmem>>, vector<8192x128xf32>
    tpu.vector_store %arg3[%c0_2, %c0_3], %4 {strides = array<i32>} : memref<8192x128xf32, #tpu.memory_space<vmem>>, vector<8192x128xf32>,
    return
  }
  func.func @transform_0(%arg0: i32) -> i32 {
    %c0_i32 = arith.constant 0 : i32
    %c0_i32_0 = arith.constant 0 : i32
    return %c0_i32 : i32
  }
  func.func @transform_1(%arg0: i32) -> (i32, i32) {
    %c0_i32 = arith.constant 0 : i32
    %c0_i32_0 = arith.constant 0 : i32
    return %arg0, %c0_i32 : i32, i32
  }
  func.func @transform_2(%arg0: i32) -> (i32, i32) {
    %c0_i32 = arith.constant 0 : i32
    %c0_i32_0 = arith.constant 0 : i32
    return %arg0, %c0_i32 : i32, i32
  }
}

</mosaic_0001>

<llo_original>
// kernel: tpu_custom_call.1
$region0: #{tpu_custom_call.1}
  #allocation0 [shape = 'u32[]', space=smem, size = 0x4, offset = 0x4, fixed_abs, tag = 'smem constant byte address 0x4 - core index']
  #allocation1 [shape = 'u32[144,128]{1,0:T(1,128)}', space=vmem, size = 0x12000, scoped, tag = 'internal scratch']
  #allocation2 [shape = 'f32[1]{0:T(128)S(6)}', space=smem, size = 0x200, scoped, tag = 'scoped memory for tpu_custom_call.1']
  %s0 = inlined_call_operand.<no memory space> [shape: f32[1], index: 0, kind: input, shape index: {}]
  %s1 = inlined_call_operand.hbm [shape: f32[65536,128], index: 1, kind: input, shape index: {}, may-alias: {1,2}]
  %s2 = inlined_call_operand.hbm [shape: f32[65536,128], index: 2, kind: output, shape index: {}, may-alias: {1,2}]
  %s3 = sld [smem:[#allocation0]]
  $region45: #{tpu_custom_call.1} parent=0
    _
  %s5 = ssub.s32 1, %s3
  %s6 = scalar_select 0, %s5, %s3
  %7 = sst [smem:[#allocation2]] %s0
  $region1: #{tpu_custom_call.1} parent=0
    #allocation3 [shape = 'u8[8388608]{0}', space=vmem, size = 0x800000, scoped, tag = 'input window, operand 1']
    #allocation4 [shape = 's32[2]{0}', space=sflag, size = 0x8, scoped, tag = 'scoped memory for tpu_custom_call.1']
    #allocation5 [shape = 's32[2]{0}', space=sflag, size = 0x8, scoped, tag = 'scoped memory for tpu_custom_call.1']
    #allocation6 [shape = 'u8[8388608]{0}', space=vmem, size = 0x800000, scoped, tag = 'output window, operand 0']
    %8 = vsyncpa [#allocation4], 0
    %s9 = scalar_lea.sflag [#allocation4], 1
    %10 = vsyncpa %s9, 0
    %11 = vsyncpa [#allocation5], 0
    %s12 = scalar_lea.sflag [#allocation5], 1
    %13 = vsyncpa %s12, 0
    loop: start=0, step=1, limit=10
    $region2: #{tpu_custom_call.1} parent=1 // loop_pre_header
      _
    $region3: #{tpu_custom_call.1} parent=1 // loop_header
      %s15 = sphi 0, %s19
      %p16 = scmp.ge.s32.totalorder %s15, 10
      %s23 = sphi 0, %s23
      %s25 = sphi 0, %s23
      %s26 = sphi 0, %s25
      %s40 = sphi 0, %s26
      %s46 = sphi 0, %s48
      %s49 = sphi 0, %s46
      %s50 = sphi 0, %s49
      %s66 = sphi 0, %s50
      %s72 = sphi 0, %s74
      %s75 = sphi 0, %s72
      %s76 = sphi 0, %s75
      %s92 = sphi 0, %s76
    $region4: #{tpu_custom_call.1} parent=1 // loop_header_branch
      %18 = sbr.rel (%p16) target = $region8
    $region5: #{tpu_custom_call.1} parent=1 // loop_body
      %s20 = ssub.s32 %s15, 1
      %s21 = ssub.s32 %s15, 2
      %s22 = sadd.s32 %s15, 1
      %s24 = sadd.s32 %s23, 1
      %p27 = scmp.eq.s32.totalorder %s15, 7
      %p28 = scmp.ne.s32.totalorder %s23, %s25
      %p29 = scmp.eq.s32.totalorder %s15, 0
      %p30 = por %p28, %p29
      %p31 = scmp.ne.s32.totalorder %s23, %s25
      %p32 = scmp.eq.s32.totalorder %s20, 7
      %p33 = por %p31, %p32
      %p34 = scmp.ne.s32.totalorder %s25, %s26
      %p35 = scmp.eq.s32.totalorder %s20, 0
      %p36 = por %p34, %p35
      %p37 = scmp.ne.s32.totalorder %s25, %s26
      %p38 = scmp.eq.s32.totalorder %s21, 7
      %p39 = por %p37, %p38
      %p41 = scmp.ne.s32.totalorder %s26, %s40
      %p42 = scmp.eq.s32.totalorder %s21, 0
      %p43 = por %p41, %p42
      %s44 = ssub.s32 %s15, %s22
      %p45 = scmp.eq.s32.totalorder %s44, 0
      %s47 = sadd.s32 %s46, 1
      %s48 = scalar_select %p45, %s46, %s47
      %p51 = pneg %p45
      %p52 = scmp.eq.s32.totalorder %s15, 7
      %p53 = por %p51, %p52
      %p54 = scmp.ne.s32.totalorder %s46, %s49
      %p55 = scmp.eq.s32.totalorder %s15, 0
      %p56 = por %p54, %p55
      %p57 = scmp.ne.s32.totalorder %s46, %s49
      %p58 = scmp.eq.s32.totalorder %s20, 7
      %p59 = por %p57, %p58
      %p60 = scmp.ne.s32.totalorder %s49, %s50
      %p61 = scmp.eq.s32.totalorder %s20, 0
      %p62 = por %p60, %p61
      %p63 = scmp.ne.s32.totalorder %s49, %s50
      %p64 = scmp.eq.s32.totalorder %s21, 7
      %p65 = por %p63, %p64
      %p67 = scmp.ne.s32.totalorder %s50, %s66
      %p68 = scmp.eq.s32.totalorder %s21, 0
      %p69 = por %p67, %p68
      %s70 = ssub.s32 %s15, %s22
      %p71 = scmp.eq.s32.totalorder %s70, 0
      %s73 = sadd.s32 %s72, 1
      %s74 = scalar_select %p71, %s72, %s73
      %p77 = pneg %p71
      %p78 = scmp.eq.s32.totalorder %s15, 7
      %p79 = por %p77, %p78
      %p80 = scmp.ne.s32.totalorder %s72, %s75
      %p81 = scmp.eq.s32.totalorder %s15, 0
      %p82 = por %p80, %p81
      %p83 = scmp.ne.s32.totalorder %s72, %s75
      %p84 = scmp.eq.s32.totalorder %s20, 7
      %p85 = por %p83, %p84
      %p86 = scmp.ne.s32.totalorder %s75, %s76
      %p87 = scmp.eq.s32.totalorder %s20, 0
      %p88 = por %p86, %p87
      %p89 = scmp.ne.s32.totalorder %s75, %s76
      %p90 = scmp.eq.s32.totalorder %s21, 7
      %p91 = por %p89, %p90
      %p93 = scmp.ne.s32.totalorder %s76, %s92
      %p94 = scmp.eq.s32.totalorder %s21, 0
      %p95 = por %p93, %p94
      %p96 = scmp.le.s32.totalorder 1, %s15
      %p97 = scmp.lt.s32.totalorder %s15, 9
      %p98 = pnand %p96, %p97
      %p99 = pneg %p98
      // Predicated region
      $region9: #{tpu_custom_call.1} parent=5 // pred_check
        _
      $region10: #{tpu_custom_call.1} parent=5 // pred_check_branch
        %101 = sbr.rel (%p98) target = $region12
      $region11: #{tpu_custom_call.1} parent=5 // pred_region
        %s102 = ssub.s32 %s15, 1
        // Predicated region
        $region13: #{tpu_custom_call.1} parent=11 // pred_check
          %p103 = pneg %p36
        $region14: #{tpu_custom_call.1} parent=11 // pred_check_branch
          %105 = sbr.rel (%p103) target = $region16
        $region15: #{tpu_custom_call.1} parent=11 // pred_region
          _
        $region16: #{tpu_custom_call.1} parent=11 // pred_fallthru
          _
      $region12: #{tpu_custom_call.1} parent=5 // pred_fallthru
        _
      %p106 = scmp.lt.s32.totalorder %s15, 8
      // Predicated region
      $region17: #{tpu_custom_call.1} parent=5 // pred_check
        %p107 = pneg %p106
      $region18: #{tpu_custom_call.1} parent=5 // pred_check_branch
        %109 = sbr.rel (%p107) target = $region20
      $region19: #{tpu_custom_call.1} parent=5 // pred_region
        // Predicated region
        $region21: #{tpu_custom_call.1} parent=19 // pred_check
          %p110 = pneg %p56
        $region22: #{tpu_custom_call.1} parent=19 // pred_check_branch
          %112 = sbr.rel (%p110) target = $region24
        $region23: #{tpu_custom_call.1} parent=19 // pred_region
          %s113 = sand.u32 %s46, 1
          %s114 = scalar_lea.sflag [#allocation4], %s113
          %s115 = sand.u32 %s46, 1
          %s116 = smul.addr %s115, 8192
          %s117 = scalar_lea.vmem [#allocation3], %s116
          %s118 = smul.u32 1024, %s15
          %s120 = ssub.s32 131072, 131072
          %121 = vsyncadd %s114, %s120
          %s122 = smul.addr %s118, 128
          %s123 = scalar_lea.hbm %s1, %s122
          %s124 = sshll.u32 %s117, 4
          %s125 = int_to_ptr.vmem [resolvable:$true] %s124
          %130 = dma.hbm_to_vmem [thread:$0]  %s123, 131072, %s125, %s114, 128, 128, 8
        $region24: #{tpu_custom_call.1} parent=19 // pred_fallthru
          _
      $region20: #{tpu_custom_call.1} parent=5 // pred_fallthru
        _
      %p131 = scmp.le.s32.totalorder 1, %s15
      %p132 = scmp.lt.s32.totalorder %s15, 9
      %p133 = pnand %p131, %p132
      %p134 = pneg %p133
      // Predicated region
      $region25: #{tpu_custom_call.1} parent=5 // pred_check
        _
      $region26: #{tpu_custom_call.1} parent=5 // pred_check_branch
        %136 = sbr.rel (%p133) target = $region28
      $region27: #{tpu_custom_call.1} parent=5 // pred_region
        %s137 = ssub.s32 %s15, 1
        %s138 = sand.u32 %s49, 1
        %s139 = scalar_lea.sflag [#allocation4], %s138
        %s140 = sand.u32 %s49, 1
        %s141 = smul.addr %s140, 8192
        %s142 = scalar_lea.vmem [#allocation3], %s141
        // Predicated region
        $region29: #{tpu_custom_call.1} parent=27 // pred_check
          %p143 = pneg %p62
        $region30: #{tpu_custom_call.1} parent=27 // pred_check_branch
          %145 = sbr.rel (%p143) target = $region32
        $region31: #{tpu_custom_call.1} parent=27 // pred_region
          %146 = dma.done %s139, 131072
        $region32: #{tpu_custom_call.1} parent=27 // pred_fallthru
          _
        %p147 = pneg %p36
        %p148 = pneg %p33
        %s149 = sand.u32 %s49, 1
        %s150 = scalar_lea.sflag [#allocation4], %s149
        %s151 = sand.u32 %s49, 1
        %s152 = smul.addr %s151, 8192
        %s153 = scalar_lea.vmem [#allocation3], %s152
        %p154 = pneg %p62
        %p155 = pneg %p59
        %p156 = pneg %p88
        %p157 = pneg %p85
        %s158 = sand.u32 %s75, 1
        %s159 = scalar_lea.sflag [#allocation5], %s158
        %s160 = sand.u32 %s75, 1
        %s161 = smul.addr %s160, 8192
        %s162 = scalar_lea.vmem [#allocation6], %s161
        %s163 = smul.u32 1024, %s20
        %s164 = smul.u32 1024, %s20
        %s165 = sld [smem:[#allocation2]]
        %s166 = ssub.f32 0.0, %s165
        %v167 = vld [vmem:[%s142] sm:$0xff]
        %v168 = vld [vmem:[%s142 + $0x8] sm:$0xff]
        %v169 = vld [vmem:[%s142 + $0x10] sm:$0xff]
        %v170 = vld [vmem:[%s142 + $0x18] sm:$0xff]
        %v171 = vld [vmem:[%s142 + $0x20] sm:$0xff]
        %v172 = vld [vmem:[%s142 + $0x28] sm:$0xff]
        %v173 = vld [vmem:[%s142 + $0x30] sm:$0xff]
        %v174 = vld [vmem:[%s142 + $0x38] sm:$0xff]
        %v175 = vld [vmem:[%s142 + $0x40] sm:$0xff]
        %v176 = vld [vmem:[%s142 + $0x48] sm:$0xff]
        %v177 = vld [vmem:[%s142 + $0x50] sm:$0xff]
        %v178 = vld [vmem:[%s142 + $0x58] sm:$0xff]
        %v179 = vld [vmem:[%s142 + $0x60] sm:$0xff]
        %v180 = vld [vmem:[%s142 + $0x68] sm:$0xff]
        %v181 = vld [vmem:[%s142 + $0x70] sm:$0xff]
        %v182 = vld [vmem:[%s142 + $0x78] sm:$0xff]
        %v183 = vld [vmem:[%s142 + $0x80] sm:$0xff]
        %v184 = vld [vmem:[%s142 + $0x88] sm:$0xff]
        %v185 = vld [vmem:[%s142 + $0x90] sm:$0xff]
        %v186 = vld [vmem:[%s142 + $0x98] sm:$0xff]
        %v187 = vld [vmem:[%s142 + $0xa0] sm:$0xff]
        %v188 = vld [vmem:[%s142 + $0xa8] sm:$0xff]
        %v189 = vld [vmem:[%s142 + $0xb0] sm:$0xff]
        %v190 = vld [vmem:[%s142 + $0xb8] sm:$0xff]
        %v191 = vld [vmem:[%s142 + $0xc0] sm:$0xff]
        %v192 = vld [vmem:[%s142 + $0xc8] sm:$0xff]
        %v193 = vld [vmem:[%s142 + $0xd0] sm:$0xff]
        %v194 = vld [vmem:[%s142 + $0xd8] sm:$0xff]
        %v195 = vld [vmem:[%s142 + $0xe0] sm:$0xff]
        %v196 = vld [vmem:[%s142 + $0xe8] sm:$0xff]
        %v197 = vld [vmem:[%s142 + $0xf0] sm:$0xff]
        %v198 = vld [vmem:[%s142 + $0xf8] sm:$0xff]
        %v199 = vld [vmem:[%s142 + $0x100] sm:$0xff]
        %v200 = vld [vmem:[%s142 + $0x108] sm:$0xff]
        %v201 = vld [vmem:[%s142 + $0x110] sm:$0xff]
        %v202 = vld [vmem:[%s142 + $0x118] sm:$0xff]
        %v203 = vld [vmem:[%s142 + $0x120] sm:$0xff]
        %v204 = vld [vmem:[%s142 + $0x128] sm:$0xff]
        %v205 = vld [vmem:[%s142 + $0x130] sm:$0xff]
        %v206 = vld [vmem:[%s142 + $0x138] sm:$0xff]
        %v207 = vld [vmem:[%s142 + $0x140] sm:$0xff]
        %v208 = vld [vmem:[%s142 + $0x148] sm:$0xff]
        %v209 = vld [vmem:[%s142 + $0x150] sm:$0xff]
        %v210 = vld [vmem:[%s142 + $0x158] sm:$0xff]
        %v211 = vld [vmem:[%s142 + $0x160] sm:$0xff]
        %v212 = vld [vmem:[%s142 + $0x168] sm:$0xff]
        %v213 = vld [vmem:[%s142 + $0x170] sm:$0xff]
        %v214 = vld [vmem:[%s142 + $0x178] sm:$0xff]
        %v215 = vld [vmem:[%s142 + $0x180] sm:$0xff]
        %v216 = vld [vmem:[%s142 + $0x188] sm:$0xff]
        %v217 = vld [vmem:[%s142 + $0x190] sm:$0xff]
        %v218 = vld [vmem:[%s142 + $0x198] sm:$0xff]
        %v219 = vld [vmem:[%s142 + $0x1a0] sm:$0xff]
        %v220 = vld [vmem:[%s142 + $0x1a8] sm:$0xff]
        %v221 = vld [vmem:[%s142 + $0x1b0] sm:$0xff]
        %v222 = vld [vmem:[%s142 + $0x1b8] sm:$0xff]
        %v223 = vld [vmem:[%s142 + $0x1c0] sm:$0xff]
        %v224 = vld [vmem:[%s142 + $0x1c8] sm:$0xff]
        %v225 = vld [vmem:[%s142 + $0x1d0] sm:$0xff]
        %v226 = vld [vmem:[%s142 + $0x1d8] sm:$0xff]
        %v227 = vld [vmem:[%s142 + $0x1e0] sm:$0xff]
        %v228 = vld [vmem:[%s142 + $0x1e8] sm:$0xff]
        %v229 = vld [vmem:[%s142 + $0x1f0] sm:$0xff]
        %v230 = vld [vmem:[%s142 + $0x1f8] sm:$0xff]
        %v231 = vld [vmem:[%s142 + $0x200] sm:$0xff]
        %v232 = vld [vmem:[%s142 + $0x208] sm:$0xff]
        %v233 = vld [vmem:[%s142 + $0x210] sm:$0xff]
        %v234 = vld [vmem:[%s142 + $0x218] sm:$0xff]
        %v235 = vld [vmem:[%s142 + $0x220] sm:$0xff]
        %v236 = vld [vmem:[%s142 + $0x228] sm:$0xff]
        %v237 = vld [vmem:[%s142 + $0x230] sm:$0xff]
        %v238 = vld [vmem:[%s142 + $0x238] sm:$0xff]
        %v239 = vld [vmem:[%s142 + $0x240] sm:$0xff]
        %v240 = vld [vmem:[%s142 + $0x248] sm:$0xff]
        %v241 = vld [vmem:[%s142 + $0x250] sm:$0xff]
        %v242 = vld [vmem:[%s142 + $0x258] sm:$0xff]
        %v243 = vld [vmem:[%s142 + $0x260] sm:$0xff]
        %v244 = vld [vmem:[%s142 + $0x268] sm:$0xff]
        %v245 = vld [vmem:[%s142 + $0x270] sm:$0xff]
        %v246 = vld [vmem:[%s142 + $0x278] sm:$0xff]
        %v247 = vld [vmem:[%s142 + $0x280] sm:$0xff]
        %v248 = vld [vmem:[%s142 + $0x288] sm:$0xff]
        %v249 = vld [vmem:[%s142 + $0x290] sm:$0xff]
        %v250 = vld [vmem:[%s142 + $0x298] sm:$0xff]
        %v251 = vld [vmem:[%s142 + $0x2a0] sm:$0xff]
        %v252 = vld [vmem:[%s142 + $0x2a8] sm:$0xff]
        %v253 = vld [vmem:[%s142 + $0x2b0] sm:$0xff]
        %v254 = vld [vmem:[%s142 + $0x2b8] sm:$0xff]
        %v255 = vld [vmem:[%s142 + $0x2c0] sm:$0xff]
        %v256 = vld [vmem:[%s142 + $0x2c8] sm:$0xff]
        %v257 = vld [vmem:[%s142 + $0x2d0] sm:$0xff]
        %v258 = vld [vmem:[%s142 + $0x2d8] sm:$0xff]
        %v259 = vld [vmem:[%s142 + $0x2e0] sm:$0xff]
        %v260 = vld [vmem:[%s142 + $0x2e8] sm:$0xff]
        %v261 = vld [vmem:[%s142 + $0x2f0] sm:$0xff]
        %v262 = vld [vmem:[%s142 + $0x2f8] sm:$0xff]
        %v263 = vld [vmem:[%s142 + $0x300] sm:$0xff]
        %v264 = vld [vmem:[%s142 + $0x308] sm:$0xff]
        %v265 = vld [vmem:[%s142 + $0x310] sm:$0xff]
        %v266 = vld [vmem:[%s142 + $0x318] sm:$0xff]
        %v267 = vld [vmem:[%s142 + $0x320] sm:$0xff]
        %v268 = vld [vmem:[%s142 + $0x328] sm:$0xff]
        %v269 = vld [vmem:[%s142 + $0x330] sm:$0xff]
        %v270 = vld [vmem:[%s142 + $0x338] sm:$0xff]
        %v271 = vld [vmem:[%s142 + $0x340] sm:$0xff]
        %v272 = vld [vmem:[%s142 + $0x348] sm:$0xff]
        %v273 = vld [vmem:[%s142 + $0x350] sm:$0xff]
        %v274 = vld [vmem:[%s142 + $0x358] sm:$0xff]
        %v275 = vld [vmem:[%s142 + $0x360] sm:$0xff]
        %v276 = vld [vmem:[%s142 + $0x368] sm:$0xff]
        %v277 = vld [vmem:[%s142 + $0x370] sm:$0xff]
        %v278 = vld [vmem:[%s142 + $0x378] sm:$0xff]
        %v279 = vld [vmem:[%s142 + $0x380] sm:$0xff]
        %v280 = vld [vmem:[%s142 + $0x388] sm:$0xff]
        %v281 = vld [vmem:[%s142 + $0x390] sm:$0xff]
        %v282 = vld [vmem:[%s142 + $0x398] sm:$0xff]
        %v283 = vld [vmem:[%s142 + $0x3a0] sm:$0xff]
        %v284 = vld [vmem:[%s142 + $0x3a8] sm:$0xff]
        %v285 = vld [vmem:[%s142 + $0x3b0] sm:$0xff]
        %v286 = vld [vmem:[%s142 + $0x3b8] sm:$0xff]
        %v287 = vld [vmem:[%s142 + $0x3c0] sm:$0xff]
        %v288 = vld [vmem:[%s142 + $0x3c8] sm:$0xff]
        %v289 = vld [vmem:[%s142 + $0x3d0] sm:$0xff]
        %v290 = vld [vmem:[%s142 + $0x3d8] sm:$0xff]
        %v291 = vld [vmem:[%s142 + $0x3e0] sm:$0xff]
        %v292 = vld [vmem:[%s142 + $0x3e8] sm:$0xff]
        %v293 = vld [vmem:[%s142 + $0x3f0] sm:$0xff]
        %v294 = vld [vmem:[%s142 + $0x3f8] sm:$0xff]
        %v295 = vld [vmem:[%s142 + $0x400] sm:$0xff]
        %v296 = vld [vmem:[%s142 + $0x408] sm:$0xff]
        %v297 = vld [vmem:[%s142 + $0x410] sm:$0xff]
        %v298 = vld [vmem:[%s142 + $0x418] sm:$0xff]
        %v299 = vld [vmem:[%s142 + $0x420] sm:$0xff]
        %v300 = vld [vmem:[%s142 + $0x428] sm:$0xff]
        %v301 = vld [vmem:[%s142 + $0x430] sm:$0xff]
        %v302 = vld [vmem:[%s142 + $0x438] sm:$0xff]
        %v303 = vld [vmem:[%s142 + $0x440] sm:$0xff]
        %v304 = vld [vmem:[%s142 + $0x448] sm:$0xff]
        %v305 = vld [vmem:[%s142 + $0x450] sm:$0xff]
        %v306 = vld [vmem:[%s142 + $0x458] sm:$0xff]
        %v307 = vld [vmem:[%s142 + $0x460] sm:$0xff]
        %v308 = vld [vmem:[%s142 + $0x468] sm:$0xff]
        %v309 = vld [vmem:[%s142 + $0x470] sm:$0xff]
        %v310 = vld [vmem:[%s142 + $0x478] sm:$0xff]
        %v311 = vld [vmem:[%s142 + $0x480] sm:$0xff]
        %v312 = vld [vmem:[%s142 + $0x488] sm:$0xff]
        %v313 = vld [vmem:[%s142 + $0x490] sm:$0xff]
        %v314 = vld [vmem:[%s142 + $0x498] sm:$0xff]
        %v315 = vld [vmem:[%s142 + $0x4a0] sm:$0xff]
        %v316 = vld [vmem:[%s142 + $0x4a8] sm:$0xff]
        %v317 = vld [vmem:[%s142 + $0x4b0] sm:$0xff]
        %v318 = vld [vmem:[%s142 + $0x4b8] sm:$0xff]
        %v319 = vld [vmem:[%s142 + $0x4c0] sm:$0xff]
        %v320 = vld [vmem:[%s142 + $0x4c8] sm:$0xff]
        %v321 = vld [vmem:[%s142 + $0x4d0] sm:$0xff]
        %v322 = vld [vmem:[%s142 + $0x4d8] sm:$0xff]
        %v323 = vld [vmem:[%s142 + $0x4e0] sm:$0xff]
        %v324 = vld [vmem:[%s142 + $0x4e8] sm:$0xff]
        %v325 = vld [vmem:[%s142 + $0x4f0] sm:$0xff]
        %v326 = vld [vmem:[%s142 + $0x4f8] sm:$0xff]
        %v327 = vld [vmem:[%s142 + $0x500] sm:$0xff]
        %v328 = vld [vmem:[%s142 + $0x508] sm:$0xff]
        %v329 = vld [vmem:[%s142 + $0x510] sm:$0xff]
        %v330 = vld [vmem:[%s142 + $0x518] sm:$0xff]
        %v331 = vld [vmem:[%s142 + $0x520] sm:$0xff]
        %v332 = vld [vmem:[%s142 + $0x528] sm:$0xff]
        %v333 = vld [vmem:[%s142 + $0x530] sm:$0xff]
        %v334 = vld [vmem:[%s142 + $0x538] sm:$0xff]
        %v335 = vld [vmem:[%s142 + $0x540] sm:$0xff]
        %v336 = vld [vmem:[%s142 + $0x548] sm:$0xff]
        %v337 = vld [vmem:[%s142 + $0x550] sm:$0xff]
        %v338 = vld [vmem:[%s142 + $0x558] sm:$0xff]
        %v339 = vld [vmem:[%s142 + $0x560] sm:$0xff]
        %v340 = vld [vmem:[%s142 + $0x568] sm:$0xff]
        %v341 = vld [vmem:[%s142 + $0x570] sm:$0xff]
        %v342 = vld [vmem:[%s142 + $0x578] sm:$0xff]
        %v343 = vld [vmem:[%s142 + $0x580] sm:$0xff]
        %v344 = vld [vmem:[%s142 + $0x588] sm:$0xff]
        %v345 = vld [vmem:[%s142 + $0x590] sm:$0xff]
        %v346 = vld [vmem:[%s142 + $0x598] sm:$0xff]
        %v347 = vld [vmem:[%s142 + $0x5a0] sm:$0xff]
        %v348 = vld [vmem:[%s142 + $0x5a8] sm:$0xff]
        %v349 = vld [vmem:[%s142 + $0x5b0] sm:$0xff]
        %v350 = vld [vmem:[%s142 + $0x5b8] sm:$0xff]
        %v351 = vld [vmem:[%s142 + $0x5c0] sm:$0xff]
        %v352 = vld [vmem:[%s142 + $0x5c8] sm:$0xff]
        %v353 = vld [vmem:[%s142 + $0x5d0] sm:$0xff]
        %v354 = vld [vmem:[%s142 + $0x5d8] sm:$0xff]
        %v355 = vld [vmem:[%s142 + $0x5e0] sm:$0xff]
        %v356 = vld [vmem:[%s142 + $0x5e8] sm:$0xff]
        %v357 = vld [vmem:[%s142 + $0x5f0] sm:$0xff]
        %v358 = vld [vmem:[%s142 + $0x5f8] sm:$0xff]
        %v359 = vld [vmem:[%s142 + $0x600] sm:$0xff]
        %v360 = vld [vmem:[%s142 + $0x608] sm:$0xff]
        %v361 = vld [vmem:[%s142 + $0x610] sm:$0xff]
        %v362 = vld [vmem:[%s142 + $0x618] sm:$0xff]
        %v363 = vld [vmem:[%s142 + $0x620] sm:$0xff]
        %v364 = vld [vmem:[%s142 + $0x628] sm:$0xff]
        %v365 = vld [vmem:[%s142 + $0x630] sm:$0xff]
        %v366 = vld [vmem:[%s142 + $0x638] sm:$0xff]
        %v367 = vld [vmem:[%s142 + $0x640] sm:$0xff]
        %v368 = vld [vmem:[%s142 + $0x648] sm:$0xff]
        %v369 = vld [vmem:[%s142 + $0x650] sm:$0xff]
        %v370 = vld [vmem:[%s142 + $0x658] sm:$0xff]
        %v371 = vld [vmem:[%s142 + $0x660] sm:$0xff]
        %v372 = vld [vmem:[%s142 + $0x668] sm:$0xff]
        %v373 = vld [vmem:[%s142 + $0x670] sm:$0xff]
        %v374 = vld [vmem:[%s142 + $0x678] sm:$0xff]
        %v375 = vld [vmem:[%s142 + $0x680] sm:$0xff]
        %v376 = vld [vmem:[%s142 + $0x688] sm:$0xff]
        %v377 = vld [vmem:[%s142 + $0x690] sm:$0xff]
        %v378 = vld [vmem:[%s142 + $0x698] sm:$0xff]
        %v379 = vld [vmem:[%s142 + $0x6a0] sm:$0xff]
        %v380 = vld [vmem:[%s142 + $0x6a8] sm:$0xff]
        %v381 = vld [vmem:[%s142 + $0x6b0] sm:$0xff]
        %v382 = vld [vmem:[%s142 + $0x6b8] sm:$0xff]
        %v383 = vld [vmem:[%s142 + $0x6c0] sm:$0xff]
        %v384 = vld [vmem:[%s142 + $0x6c8] sm:$0xff]
        %v385 = vld [vmem:[%s142 + $0x6d0] sm:$0xff]
        %v386 = vld [vmem:[%s142 + $0x6d8] sm:$0xff]
        %v387 = vld [vmem:[%s142 + $0x6e0] sm:$0xff]
        %v388 = vld [vmem:[%s142 + $0x6e8] sm:$0xff]
        %v389 = vld [vmem:[%s142 + $0x6f0] sm:$0xff]
        %v390 = vld [vmem:[%s142 + $0x6f8] sm:$0xff]
        %v391 = vld [vmem:[%s142 + $0x700] sm:$0xff]
        %v392 = vld [vmem:[%s142 + $0x708] sm:$0xff]
        %v393 = vld [vmem:[%s142 + $0x710] sm:$0xff]
        %v394 = vld [vmem:[%s142 + $0x718] sm:$0xff]
        %v395 = vld [vmem:[%s142 + $0x720] sm:$0xff]
        %v396 = vld [vmem:[%s142 + $0x728] sm:$0xff]
        %v397 = vld [vmem:[%s142 + $0x730] sm:$0xff]
        %v398 = vld [vmem:[%s142 + $0x738] sm:$0xff]
        %v399 = vld [vmem:[%s142 + $0x740] sm:$0xff]
        %v400 = vld [vmem:[%s142 + $0x748] sm:$0xff]
        %v401 = vld [vmem:[%s142 + $0x750] sm:$0xff]
        %v402 = vld [vmem:[%s142 + $0x758] sm:$0xff]
        %v403 = vld [vmem:[%s142 + $0x760] sm:$0xff]
        %v404 = vld [vmem:[%s142 + $0x768] sm:$0xff]
        %v405 = vld [vmem:[%s142 + $0x770] sm:$0xff]
        %v406 = vld [vmem:[%s142 + $0x778] sm:$0xff]
        %v407 = vld [vmem:[%s142 + $0x780] sm:$0xff]
        %v408 = vld [vmem:[%s142 + $0x788] sm:$0xff]
        %v409 = vld [vmem:[%s142 + $0x790] sm:$0xff]
        %v410 = vld [vmem:[%s142 + $0x798] sm:$0xff]
        %v411 = vld [vmem:[%s142 + $0x7a0] sm:$0xff]
        %v412 = vld [vmem:[%s142 + $0x7a8] sm:$0xff]
        %v413 = vld [vmem:[%s142 + $0x7b0] sm:$0xff]
        %v414 = vld [vmem:[%s142 + $0x7b8] sm:$0xff]
        %v415 = vld [vmem:[%s142 + $0x7c0] sm:$0xff]
        %v416 = vld [vmem:[%s142 + $0x7c8] sm:$0xff]
        %v417 = vld [vmem:[%s142 + $0x7d0] sm:$0xff]
        %v418 = vld [vmem:[%s142 + $0x7d8] sm:$0xff]
        %v419 = vld [vmem:[%s142 + $0x7e0] sm:$0xff]
        %v420 = vld [vmem:[%s142 + $0x7e8] sm:$0xff]
        %v421 = vld [vmem:[%s142 + $0x7f0] sm:$0xff]
        %v422 = vld [vmem:[%s142 + $0x7f8] sm:$0xff]
        %v423 = vld [vmem:[%s142 + $0x800] sm:$0xff]
        %v424 = vld [vmem:[%s142 + $0x808] sm:$0xff]
        %v425 = vld [vmem:[%s142 + $0x810] sm:$0xff]
        %v426 = vld [vmem:[%s142 + $0x818] sm:$0xff]
        %v427 = vld [vmem:[%s142 + $0x820] sm:$0xff]
        %v428 = vld [vmem:[%s142 + $0x828] sm:$0xff]
        %v429 = vld [vmem:[%s142 + $0x830] sm:$0xff]
        %v430 = vld [vmem:[%s142 + $0x838] sm:$0xff]
        %v431 = vld [vmem:[%s142 + $0x840] sm:$0xff]
        %v432 = vld [vmem:[%s142 + $0x848] sm:$0xff]
        %v433 = vld [vmem:[%s142 + $0x850] sm:$0xff]
        %v434 = vld [vmem:[%s142 + $0x858] sm:$0xff]
        %v435 = vld [vmem:[%s142 + $0x860] sm:$0xff]
        %v436 = vld [vmem:[%s142 + $0x868] sm:$0xff]
        %v437 = vld [vmem:[%s142 + $0x870] sm:$0xff]
        %v438 = vld [vmem:[%s142 + $0x878] sm:$0xff]
        %v439 = vld [vmem:[%s142 + $0x880] sm:$0xff]
        %v440 = vld [vmem:[%s142 + $0x888] sm:$0xff]
        %v441 = vld [vmem:[%s142 + $0x890] sm:$0xff]
        %v442 = vld [vmem:[%s142 + $0x898] sm:$0xff]
        %v443 = vld [vmem:[%s142 + $0x8a0] sm:$0xff]
        %v444 = vld [vmem:[%s142 + $0x8a8] sm:$0xff]
        %v445 = vld [vmem:[%s142 + $0x8b0] sm:$0xff]
        %v446 = vld [vmem:[%s142 + $0x8b8] sm:$0xff]
        %v447 = vld [vmem:[%s142 + $0x8c0] sm:$0xff]
        %v448 = vld [vmem:[%s142 + $0x8c8] sm:$0xff]
        %v449 = vld [vmem:[%s142 + $0x8d0] sm:$0xff]
        %v450 = vld [vmem:[%s142 + $0x8d8] sm:$0xff]
        %v451 = vld [vmem:[%s142 + $0x8e0] sm:$0xff]
        %v452 = vld [vmem:[%s142 + $0x8e8] sm:$0xff]
        %v453 = vld [vmem:[%s142 + $0x8f0] sm:$0xff]
        %v454 = vld [vmem:[%s142 + $0x8f8] sm:$0xff]
        %v455 = vld [vmem:[%s142 + $0x900] sm:$0xff]
        %v456 = vld [vmem:[%s142 + $0x908] sm:$0xff]
        %v457 = vld [vmem:[%s142 + $0x910] sm:$0xff]
        %v458 = vld [vmem:[%s142 + $0x918] sm:$0xff]
        %v459 = vld [vmem:[%s142 + $0x920] sm:$0xff]
        %v460 = vld [vmem:[%s142 + $0x928] sm:$0xff]
        %v461 = vld [vmem:[%s142 + $0x930] sm:$0xff]
        %v462 = vld [vmem:[%s142 + $0x938] sm:$0xff]
        %v463 = vld [vmem:[%s142 + $0x940] sm:$0xff]
        %v464 = vld [vmem:[%s142 + $0x948] sm:$0xff]
        %v465 = vld [vmem:[%s142 + $0x950] sm:$0xff]
        %v466 = vld [vmem:[%s142 + $0x958] sm:$0xff]
        %v467 = vld [vmem:[%s142 + $0x960] sm:$0xff]
        %v468 = vld [vmem:[%s142 + $0x968] sm:$0xff]
        %v469 = vld [vmem:[%s142 + $0x970] sm:$0xff]
        %v470 = vld [vmem:[%s142 + $0x978] sm:$0xff]
        %v471 = vld [vmem:[%s142 + $0x980] sm:$0xff]
        %v472 = vld [vmem:[%s142 + $0x988] sm:$0xff]
        %v473 = vld [vmem:[%s142 + $0x990] sm:$0xff]
        %v474 = vld [vmem:[%s142 + $0x998] sm:$0xff]
        %v475 = vld [vmem:[%s142 + $0x9a0] sm:$0xff]
        %v476 = vld [vmem:[%s142 + $0x9a8] sm:$0xff]
        %v477 = vld [vmem:[%s142 + $0x9b0] sm:$0xff]
        %v478 = vld [vmem:[%s142 + $0x9b8] sm:$0xff]
        %v479 = vld [vmem:[%s142 + $0x9c0] sm:$0xff]
        %v480 = vld [vmem:[%s142 + $0x9c8] sm:$0xff]
        %v481 = vld [vmem:[%s142 + $0x9d0] sm:$0xff]
        %v482 = vld [vmem:[%s142 + $0x9d8] sm:$0xff]
        %v483 = vld [vmem:[%s142 + $0x9e0] sm:$0xff]
        %v484 = vld [vmem:[%s142 + $0x9e8] sm:$0xff]
        %v485 = vld [vmem:[%s142 + $0x9f0] sm:$0xff]
        %v486 = vld [vmem:[%s142 + $0x9f8] sm:$0xff]
        %v487 = vld [vmem:[%s142 + $0xa00] sm:$0xff]
        %v488 = vld [vmem:[%s142 + $0xa08] sm:$0xff]
        %v489 = vld [vmem:[%s142 + $0xa10] sm:$0xff]
        %v490 = vld [vmem:[%s142 + $0xa18] sm:$0xff]
        %v491 = vld [vmem:[%s142 + $0xa20] sm:$0xff]
        %v492 = vld [vmem:[%s142 + $0xa28] sm:$0xff]
        %v493 = vld [vmem:[%s142 + $0xa30] sm:$0xff]
        %v494 = vld [vmem:[%s142 + $0xa38] sm:$0xff]
        %v495 = vld [vmem:[%s142 + $0xa40] sm:$0xff]
        %v496 = vld [vmem:[%s142 + $0xa48] sm:$0xff]
        %v497 = vld [vmem:[%s142 + $0xa50] sm:$0xff]
        %v498 = vld [vmem:[%s142 + $0xa58] sm:$0xff]
        %v499 = vld [vmem:[%s142 + $0xa60] sm:$0xff]
        %v500 = vld [vmem:[%s142 + $0xa68] sm:$0xff]
        %v501 = vld [vmem:[%s142 + $0xa70] sm:$0xff]
        %v502 = vld [vmem:[%s142 + $0xa78] sm:$0xff]
        %v503 = vld [vmem:[%s142 + $0xa80] sm:$0xff]
        %v504 = vld [vmem:[%s142 + $0xa88] sm:$0xff]
        %v505 = vld [vmem:[%s142 + $0xa90] sm:$0xff]
        %v506 = vld [vmem:[%s142 + $0xa98] sm:$0xff]
        %v507 = vld [vmem:[%s142 + $0xaa0] sm:$0xff]
        %v508 = vld [vmem:[%s142 + $0xaa8] sm:$0xff]
        %v509 = vld [vmem:[%s142 + $0xab0] sm:$0xff]
        %v510 = vld [vmem:[%s142 + $0xab8] sm:$0xff]
        %v511 = vld [vmem:[%s142 + $0xac0] sm:$0xff]
        %v512 = vld [vmem:[%s142 + $0xac8] sm:$0xff]
        %v513 = vld [vmem:[%s142 + $0xad0] sm:$0xff]
        %v514 = vld [vmem:[%s142 + $0xad8] sm:$0xff]
        %v515 = vld [vmem:[%s142 + $0xae0] sm:$0xff]
        %v516 = vld [vmem:[%s142 + $0xae8] sm:$0xff]
        %v517 = vld [vmem:[%s142 + $0xaf0] sm:$0xff]
        %v518 = vld [vmem:[%s142 + $0xaf8] sm:$0xff]
        %v519 = vld [vmem:[%s142 + $0xb00] sm:$0xff]
        %v520 = vld [vmem:[%s142 + $0xb08] sm:$0xff]
        %v521 = vld [vmem:[%s142 + $0xb10] sm:$0xff]
        %v522 = vld [vmem:[%s142 + $0xb18] sm:$0xff]
        %v523 = vld [vmem:[%s142 + $0xb20] sm:$0xff]
        %v524 = vld [vmem:[%s142 + $0xb28] sm:$0xff]
        %v525 = vld [vmem:[%s142 + $0xb30] sm:$0xff]
        %v526 = vld [vmem:[%s142 + $0xb38] sm:$0xff]
        %v527 = vld [vmem:[%s142 + $0xb40] sm:$0xff]
        %v528 = vld [vmem:[%s142 + $0xb48] sm:$0xff]
        %v529 = vld [vmem:[%s142 + $0xb50] sm:$0xff]
        %v530 = vld [vmem:[%s142 + $0xb58] sm:$0xff]
        %v531 = vld [vmem:[%s142 + $0xb60] sm:$0xff]
        %v532 = vld [vmem:[%s142 + $0xb68] sm:$0xff]
        %v533 = vld [vmem:[%s142 + $0xb70] sm:$0xff]
        %v534 = vld [vmem:[%s142 + $0xb78] sm:$0xff]
        %v535 = vld [vmem:[%s142 + $0xb80] sm:$0xff]
        %v536 = vld [vmem:[%s142 + $0xb88] sm:$0xff]
        %v537 = vld [vmem:[%s142 + $0xb90] sm:$0xff]
        %v538 = vld [vmem:[%s142 + $0xb98] sm:$0xff]
        %v539 = vld [vmem:[%s142 + $0xba0] sm:$0xff]
        %v540 = vld [vmem:[%s142 + $0xba8] sm:$0xff]
        %v541 = vld [vmem:[%s142 + $0xbb0] sm:$0xff]
        %v542 = vld [vmem:[%s142 + $0xbb8] sm:$0xff]
        %v543 = vld [vmem:[%s142 + $0xbc0] sm:$0xff]
        %v544 = vld [vmem:[%s142 + $0xbc8] sm:$0xff]
        %v545 = vld [vmem:[%s142 + $0xbd0] sm:$0xff]
        %v546 = vld [vmem:[%s142 + $0xbd8] sm:$0xff]
        %v547 = vld [vmem:[%s142 + $0xbe0] sm:$0xff]
        %v548 = vld [vmem:[%s142 + $0xbe8] sm:$0xff]
        %v549 = vld [vmem:[%s142 + $0xbf0] sm:$0xff]
        %v550 = vld [vmem:[%s142 + $0xbf8] sm:$0xff]
        %v551 = vld [vmem:[%s142 + $0xc00] sm:$0xff]
        %v552 = vld [vmem:[%s142 + $0xc08] sm:$0xff]
        %v553 = vld [vmem:[%s142 + $0xc10] sm:$0xff]
        %v554 = vld [vmem:[%s142 + $0xc18] sm:$0xff]
        %v555 = vld [vmem:[%s142 + $0xc20] sm:$0xff]
        %v556 = vld [vmem:[%s142 + $0xc28] sm:$0xff]
        %v557 = vld [vmem:[%s142 + $0xc30] sm:$0xff]
        %v558 = vld [vmem:[%s142 + $0xc38] sm:$0xff]
        %v559 = vld [vmem:[%s142 + $0xc40] sm:$0xff]
        %v560 = vld [vmem:[%s142 + $0xc48] sm:$0xff]
        %v561 = vld [vmem:[%s142 + $0xc50] sm:$0xff]
        %v562 = vld [vmem:[%s142 + $0xc58] sm:$0xff]
        %v563 = vld [vmem:[%s142 + $0xc60] sm:$0xff]
        %v564 = vld [vmem:[%s142 + $0xc68] sm:$0xff]
        %v565 = vld [vmem:[%s142 + $0xc70] sm:$0xff]
        %v566 = vld [vmem:[%s142 + $0xc78] sm:$0xff]
        %v567 = vld [vmem:[%s142 + $0xc80] sm:$0xff]
        %v568 = vld [vmem:[%s142 + $0xc88] sm:$0xff]
        %v569 = vld [vmem:[%s142 + $0xc90] sm:$0xff]
        %v570 = vld [vmem:[%s142 + $0xc98] sm:$0xff]
        %v571 = vld [vmem:[%s142 + $0xca0] sm:$0xff]
        %v572 = vld [vmem:[%s142 + $0xca8] sm:$0xff]
        %v573 = vld [vmem:[%s142 + $0xcb0] sm:$0xff]
        %v574 = vld [vmem:[%s142 + $0xcb8] sm:$0xff]
        %v575 = vld [vmem:[%s142 + $0xcc0] sm:$0xff]
        %v576 = vld [vmem:[%s142 + $0xcc8] sm:$0xff]
        %v577 = vld [vmem:[%s142 + $0xcd0] sm:$0xff]
        %v578 = vld [vmem:[%s142 + $0xcd8] sm:$0xff]
        %v579 = vld [vmem:[%s142 + $0xce0] sm:$0xff]
        %v580 = vld [vmem:[%s142 + $0xce8] sm:$0xff]
        %v581 = vld [vmem:[%s142 + $0xcf0] sm:$0xff]
        %v582 = vld [vmem:[%s142 + $0xcf8] sm:$0xff]
        %v583 = vld [vmem:[%s142 + $0xd00] sm:$0xff]
        %v584 = vld [vmem:[%s142 + $0xd08] sm:$0xff]
        %v585 = vld [vmem:[%s142 + $0xd10] sm:$0xff]
        %v586 = vld [vmem:[%s142 + $0xd18] sm:$0xff]
        %v587 = vld [vmem:[%s142 + $0xd20] sm:$0xff]
        %v588 = vld [vmem:[%s142 + $0xd28] sm:$0xff]
        %v589 = vld [vmem:[%s142 + $0xd30] sm:$0xff]
        %v590 = vld [vmem:[%s142 + $0xd38] sm:$0xff]
        %v591 = vld [vmem:[%s142 + $0xd40] sm:$0xff]
        %v592 = vld [vmem:[%s142 + $0xd48] sm:$0xff]
        %v593 = vld [vmem:[%s142 + $0xd50] sm:$0xff]
        %v594 = vld [vmem:[%s142 + $0xd58] sm:$0xff]
        %v595 = vld [vmem:[%s142 + $0xd60] sm:$0xff]
        %v596 = vld [vmem:[%s142 + $0xd68] sm:$0xff]
        %v597 = vld [vmem:[%s142 + $0xd70] sm:$0xff]
        %v598 = vld [vmem:[%s142 + $0xd78] sm:$0xff]
        %v599 = vld [vmem:[%s142 + $0xd80] sm:$0xff]
        %v600 = vld [vmem:[%s142 + $0xd88] sm:$0xff]
        %v601 = vld [vmem:[%s142 + $0xd90] sm:$0xff]
        %v602 = vld [vmem:[%s142 + $0xd98] sm:$0xff]
        %v603 = vld [vmem:[%s142 + $0xda0] sm:$0xff]
        %v604 = vld [vmem:[%s142 + $0xda8] sm:$0xff]
        %v605 = vld [vmem:[%s142 + $0xdb0] sm:$0xff]
        %v606 = vld [vmem:[%s142 + $0xdb8] sm:$0xff]
        %v607 = vld [vmem:[%s142 + $0xdc0] sm:$0xff]
        %v608 = vld [vmem:[%s142 + $0xdc8] sm:$0xff]
        %v609 = vld [vmem:[%s142 + $0xdd0] sm:$0xff]
        %v610 = vld [vmem:[%s142 + $0xdd8] sm:$0xff]
        %v611 = vld [vmem:[%s142 + $0xde0] sm:$0xff]
        %v612 = vld [vmem:[%s142 + $0xde8] sm:$0xff]
        %v613 = vld [vmem:[%s142 + $0xdf0] sm:$0xff]
        %v614 = vld [vmem:[%s142 + $0xdf8] sm:$0xff]
        %v615 = vld [vmem:[%s142 + $0xe00] sm:$0xff]
        %v616 = vld [vmem:[%s142 + $0xe08] sm:$0xff]
        %v617 = vld [vmem:[%s142 + $0xe10] sm:$0xff]
        %v618 = vld [vmem:[%s142 + $0xe18] sm:$0xff]
        %v619 = vld [vmem:[%s142 + $0xe20] sm:$0xff]
        %v620 = vld [vmem:[%s142 + $0xe28] sm:$0xff]
        %v621 = vld [vmem:[%s142 + $0xe30] sm:$0xff]
        %v622 = vld [vmem:[%s142 + $0xe38] sm:$0xff]
        %v623 = vld [vmem:[%s142 + $0xe40] sm:$0xff]
        %v624 = vld [vmem:[%s142 + $0xe48] sm:$0xff]
        %v625 = vld [vmem:[%s142 + $0xe50] sm:$0xff]
        %v626 = vld [vmem:[%s142 + $0xe58] sm:$0xff]
        %v627 = vld [vmem:[%s142 + $0xe60] sm:$0xff]
        %v628 = vld [vmem:[%s142 + $0xe68] sm:$0xff]
        %v629 = vld [vmem:[%s142 + $0xe70] sm:$0xff]
        %v630 = vld [vmem:[%s142 + $0xe78] sm:$0xff]
        %v631 = vld [vmem:[%s142 + $0xe80] sm:$0xff]
        %v632 = vld [vmem:[%s142 + $0xe88] sm:$0xff]
        %v633 = vld [vmem:[%s142 + $0xe90] sm:$0xff]
        %v634 = vld [vmem:[%s142 + $0xe98] sm:$0xff]
        %v635 = vld [vmem:[%s142 + $0xea0] sm:$0xff]
        %v636 = vld [vmem:[%s142 + $0xea8] sm:$0xff]
        %v637 = vld [vmem:[%s142 + $0xeb0] sm:$0xff]
        %v638 = vld [vmem:[%s142 + $0xeb8] sm:$0xff]
        %v639 = vld [vmem:[%s142 + $0xec0] sm:$0xff]
        %v640 = vld [vmem:[%s142 + $0xec8] sm:$0xff]
        %v641 = vld [vmem:[%s142 + $0xed0] sm:$0xff]
        %v642 = vld [vmem:[%s142 + $0xed8] sm:$0xff]
        %v643 = vld [vmem:[%s142 + $0xee0] sm:$0xff]
        %v644 = vld [vmem:[%s142 + $0xee8] sm:$0xff]
        %v645 = vld [vmem:[%s142 + $0xef0] sm:$0xff]
        %v646 = vld [vmem:[%s142 + $0xef8] sm:$0xff]
        %v647 = vld [vmem:[%s142 + $0xf00] sm:$0xff]
        %v648 = vld [vmem:[%s142 + $0xf08] sm:$0xff]
        %v649 = vld [vmem:[%s142 + $0xf10] sm:$0xff]
        %v650 = vld [vmem:[%s142 + $0xf18] sm:$0xff]
        %v651 = vld [vmem:[%s142 + $0xf20] sm:$0xff]
        %v652 = vld [vmem:[%s142 + $0xf28] sm:$0xff]
        %v653 = vld [vmem:[%s142 + $0xf30] sm:$0xff]
        %v654 = vld [vmem:[%s142 + $0xf38] sm:$0xff]
        %v655 = vld [vmem:[%s142 + $0xf40] sm:$0xff]
        %v656 = vld [vmem:[%s142 + $0xf48] sm:$0xff]
        %v657 = vld [vmem:[%s142 + $0xf50] sm:$0xff]
        %v658 = vld [vmem:[%s142 + $0xf58] sm:$0xff]
        %v659 = vld [vmem:[%s142 + $0xf60] sm:$0xff]
        %v660 = vld [vmem:[%s142 + $0xf68] sm:$0xff]
        %v661 = vld [vmem:[%s142 + $0xf70] sm:$0xff]
        %v662 = vld [vmem:[%s142 + $0xf78] sm:$0xff]
        %v663 = vld [vmem:[%s142 + $0xf80] sm:$0xff]
        %v664 = vld [vmem:[%s142 + $0xf88] sm:$0xff]
        %v665 = vld [vmem:[%s142 + $0xf90] sm:$0xff]
        %v666 = vld [vmem:[%s142 + $0xf98] sm:$0xff]
        %v667 = vld [vmem:[%s142 + $0xfa0] sm:$0xff]
        %v668 = vld [vmem:[%s142 + $0xfa8] sm:$0xff]
        %v669 = vld [vmem:[%s142 + $0xfb0] sm:$0xff]
        %v670 = vld [vmem:[%s142 + $0xfb8] sm:$0xff]
        %v671 = vld [vmem:[%s142 + $0xfc0] sm:$0xff]
        %v672 = vld [vmem:[%s142 + $0xfc8] sm:$0xff]
        %v673 = vld [vmem:[%s142 + $0xfd0] sm:$0xff]
        %v674 = vld [vmem:[%s142 + $0xfd8] sm:$0xff]
        %v675 = vld [vmem:[%s142 + $0xfe0] sm:$0xff]
        %v676 = vld [vmem:[%s142 + $0xfe8] sm:$0xff]
        %v677 = vld [vmem:[%s142 + $0xff0] sm:$0xff]
        %v678 = vld [vmem:[%s142 + $0xff8] sm:$0xff]
        %v679 = vld [vmem:[%s142 + $0x1000] sm:$0xff]
        %v680 = vld [vmem:[%s142 + $0x1008] sm:$0xff]
        %v681 = vld [vmem:[%s142 + $0x1010] sm:$0xff]
        %v682 = vld [vmem:[%s142 + $0x1018] sm:$0xff]
        %v683 = vld [vmem:[%s142 + $0x1020] sm:$0xff]
        %v684 = vld [vmem:[%s142 + $0x1028] sm:$0xff]
        %v685 = vld [vmem:[%s142 + $0x1030] sm:$0xff]
        %v686 = vld [vmem:[%s142 + $0x1038] sm:$0xff]
        %v687 = vld [vmem:[%s142 + $0x1040] sm:$0xff]
        %v688 = vld [vmem:[%s142 + $0x1048] sm:$0xff]
        %v689 = vld [vmem:[%s142 + $0x1050] sm:$0xff]
        %v690 = vld [vmem:[%s142 + $0x1058] sm:$0xff]
        %v691 = vld [vmem:[%s142 + $0x1060] sm:$0xff]
        %v692 = vld [vmem:[%s142 + $0x1068] sm:$0xff]
        %v693 = vld [vmem:[%s142 + $0x1070] sm:$0xff]
        %v694 = vld [vmem:[%s142 + $0x1078] sm:$0xff]
        %v695 = vld [vmem:[%s142 + $0x1080] sm:$0xff]
        %v696 = vld [vmem:[%s142 + $0x1088] sm:$0xff]
        %v697 = vld [vmem:[%s142 + $0x1090] sm:$0xff]
        %v698 = vld [vmem:[%s142 + $0x1098] sm:$0xff]
        %v699 = vld [vmem:[%s142 + $0x10a0] sm:$0xff]
        %v700 = vld [vmem:[%s142 + $0x10a8] sm:$0xff]
        %v701 = vld [vmem:[%s142 + $0x10b0] sm:$0xff]
        %v702 = vld [vmem:[%s142 + $0x10b8] sm:$0xff]
        %v703 = vld [vmem:[%s142 + $0x10c0] sm:$0xff]
        %v704 = vld [vmem:[%s142 + $0x10c8] sm:$0xff]
        %v705 = vld [vmem:[%s142 + $0x10d0] sm:$0xff]
        %v706 = vld [vmem:[%s142 + $0x10d8] sm:$0xff]
        %v707 = vld [vmem:[%s142 + $0x10e0] sm:$0xff]
        %v708 = vld [vmem:[%s142 + $0x10e8] sm:$0xff]
        %v709 = vld [vmem:[%s142 + $0x10f0] sm:$0xff]
        %v710 = vld [vmem:[%s142 + $0x10f8] sm:$0xff]
        %v711 = vld [vmem:[%s142 + $0x1100] sm:$0xff]
        %v712 = vld [vmem:[%s142 + $0x1108] sm:$0xff]
        %v713 = vld [vmem:[%s142 + $0x1110] sm:$0xff]
        %v714 = vld [vmem:[%s142 + $0x1118] sm:$0xff]
        %v715 = vld [vmem:[%s142 + $0x1120] sm:$0xff]
        %v716 = vld [vmem:[%s142 + $0x1128] sm:$0xff]
        %v717 = vld [vmem:[%s142 + $0x1130] sm:$0xff]
        %v718 = vld [vmem:[%s142 + $0x1138] sm:$0xff]
        %v719 = vld [vmem:[%s142 + $0x1140] sm:$0xff]
        %v720 = vld [vmem:[%s142 + $0x1148] sm:$0xff]
        %v721 = vld [vmem:[%s142 + $0x1150] sm:$0xff]
        %v722 = vld [vmem:[%s142 + $0x1158] sm:$0xff]
        %v723 = vld [vmem:[%s142 + $0x1160] sm:$0xff]
        %v724 = vld [vmem:[%s142 + $0x1168] sm:$0xff]
        %v725 = vld [vmem:[%s142 + $0x1170] sm:$0xff]
        %v726 = vld [vmem:[%s142 + $0x1178] sm:$0xff]
        %v727 = vld [vmem:[%s142 + $0x1180] sm:$0xff]
        %v728 = vld [vmem:[%s142 + $0x1188] sm:$0xff]
        %v729 = vld [vmem:[%s142 + $0x1190] sm:$0xff]
        %v730 = vld [vmem:[%s142 + $0x1198] sm:$0xff]
        %v731 = vld [vmem:[%s142 + $0x11a0] sm:$0xff]
        %v732 = vld [vmem:[%s142 + $0x11a8] sm:$0xff]
        %v733 = vld [vmem:[%s142 + $0x11b0] sm:$0xff]
        %v734 = vld [vmem:[%s142 + $0x11b8] sm:$0xff]
        %v735 = vld [vmem:[%s142 + $0x11c0] sm:$0xff]
        %v736 = vld [vmem:[%s142 + $0x11c8] sm:$0xff]
        %v737 = vld [vmem:[%s142 + $0x11d0] sm:$0xff]
        %v738 = vld [vmem:[%s142 + $0x11d8] sm:$0xff]
        %v739 = vld [vmem:[%s142 + $0x11e0] sm:$0xff]
        %v740 = vld [vmem:[%s142 + $0x11e8] sm:$0xff]
        %v741 = vld [vmem:[%s142 + $0x11f0] sm:$0xff]
        %v742 = vld [vmem:[%s142 + $0x11f8] sm:$0xff]
        %v743 = vld [vmem:[%s142 + $0x1200] sm:$0xff]
        %v744 = vld [vmem:[%s142 + $0x1208] sm:$0xff]
        %v745 = vld [vmem:[%s142 + $0x1210] sm:$0xff]
        %v746 = vld [vmem:[%s142 + $0x1218] sm:$0xff]
        %v747 = vld [vmem:[%s142 + $0x1220] sm:$0xff]
        %v748 = vld [vmem:[%s142 + $0x1228] sm:$0xff]
        %v749 = vld [vmem:[%s142 + $0x1230] sm:$0xff]
        %v750 = vld [vmem:[%s142 + $0x1238] sm:$0xff]
        %v751 = vld [vmem:[%s142 + $0x1240] sm:$0xff]
        %v752 = vld [vmem:[%s142 + $0x1248] sm:$0xff]
        %v753 = vld [vmem:[%s142 + $0x1250] sm:$0xff]
        %v754 = vld [vmem:[%s142 + $0x1258] sm:$0xff]
        %v755 = vld [vmem:[%s142 + $0x1260] sm:$0xff]
        %v756 = vld [vmem:[%s142 + $0x1268] sm:$0xff]
        %v757 = vld [vmem:[%s142 + $0x1270] sm:$0xff]
        %v758 = vld [vmem:[%s142 + $0x1278] sm:$0xff]
        %v759 = vld [vmem:[%s142 + $0x1280] sm:$0xff]
        %v760 = vld [vmem:[%s142 + $0x1288] sm:$0xff]
        %v761 = vld [vmem:[%s142 + $0x1290] sm:$0xff]
        %v762 = vld [vmem:[%s142 + $0x1298] sm:$0xff]
        %v763 = vld [vmem:[%s142 + $0x12a0] sm:$0xff]
        %v764 = vld [vmem:[%s142 + $0x12a8] sm:$0xff]
        %v765 = vld [vmem:[%s142 + $0x12b0] sm:$0xff]
        %v766 = vld [vmem:[%s142 + $0x12b8] sm:$0xff]
        %v767 = vld [vmem:[%s142 + $0x12c0] sm:$0xff]
        %v768 = vld [vmem:[%s142 + $0x12c8] sm:$0xff]
        %v769 = vld [vmem:[%s142 + $0x12d0] sm:$0xff]
        %v770 = vld [vmem:[%s142 + $0x12d8] sm:$0xff]
        %v771 = vld [vmem:[%s142 + $0x12e0] sm:$0xff]
        %v772 = vld [vmem:[%s142 + $0x12e8] sm:$0xff]
        %v773 = vld [vmem:[%s142 + $0x12f0] sm:$0xff]
        %v774 = vld [vmem:[%s142 + $0x12f8] sm:$0xff]
        %v775 = vld [vmem:[%s142 + $0x1300] sm:$0xff]
        %v776 = vld [vmem:[%s142 + $0x1308] sm:$0xff]
        %v777 = vld [vmem:[%s142 + $0x1310] sm:$0xff]
        %v778 = vld [vmem:[%s142 + $0x1318] sm:$0xff]
        %v779 = vld [vmem:[%s142 + $0x1320] sm:$0xff]
        %v780 = vld [vmem:[%s142 + $0x1328] sm:$0xff]
        %v781 = vld [vmem:[%s142 + $0x1330] sm:$0xff]
        %v782 = vld [vmem:[%s142 + $0x1338] sm:$0xff]
        %v783 = vld [vmem:[%s142 + $0x1340] sm:$0xff]
        %v784 = vld [vmem:[%s142 + $0x1348] sm:$0xff]
        %v785 = vld [vmem:[%s142 + $0x1350] sm:$0xff]
        %v786 = vld [vmem:[%s142 + $0x1358] sm:$0xff]
        %v787 = vld [vmem:[%s142 + $0x1360] sm:$0xff]
        %v788 = vld [vmem:[%s142 + $0x1368] sm:$0xff]
        %v789 = vld [vmem:[%s142 + $0x1370] sm:$0xff]
        %v790 = vld [vmem:[%s142 + $0x1378] sm:$0xff]
        %v791 = vld [vmem:[%s142 + $0x1380] sm:$0xff]
        %v792 = vld [vmem:[%s142 + $0x1388] sm:$0xff]
        %v793 = vld [vmem:[%s142 + $0x1390] sm:$0xff]
        %v794 = vld [vmem:[%s142 + $0x1398] sm:$0xff]
        %v795 = vld [vmem:[%s142 + $0x13a0] sm:$0xff]
        %v796 = vld [vmem:[%s142 + $0x13a8] sm:$0xff]
        %v797 = vld [vmem:[%s142 + $0x13b0] sm:$0xff]
        %v798 = vld [vmem:[%s142 + $0x13b8] sm:$0xff]
        %v799 = vld [vmem:[%s142 + $0x13c0] sm:$0xff]
        %v800 = vld [vmem:[%s142 + $0x13c8] sm:$0xff]
        %v801 = vld [vmem:[%s142 + $0x13d0] sm:$0xff]
        %v802 = vld [vmem:[%s142 + $0x13d8] sm:$0xff]
        %v803 = vld [vmem:[%s142 + $0x13e0] sm:$0xff]
        %v804 = vld [vmem:[%s142 + $0x13e8] sm:$0xff]
        %v805 = vld [vmem:[%s142 + $0x13f0] sm:$0xff]
        %v806 = vld [vmem:[%s142 + $0x13f8] sm:$0xff]
        %v807 = vld [vmem:[%s142 + $0x1400] sm:$0xff]
        %v808 = vld [vmem:[%s142 + $0x1408] sm:$0xff]
        %v809 = vld [vmem:[%s142 + $0x1410] sm:$0xff]
        %v810 = vld [vmem:[%s142 + $0x1418] sm:$0xff]
        %v811 = vld [vmem:[%s142 + $0x1420] sm:$0xff]
        %v812 = vld [vmem:[%s142 + $0x1428] sm:$0xff]
        %v813 = vld [vmem:[%s142 + $0x1430] sm:$0xff]
        %v814 = vld [vmem:[%s142 + $0x1438] sm:$0xff]
        %v815 = vld [vmem:[%s142 + $0x1440] sm:$0xff]
        %v816 = vld [vmem:[%s142 + $0x1448] sm:$0xff]
        %v817 = vld [vmem:[%s142 + $0x1450] sm:$0xff]
        %v818 = vld [vmem:[%s142 + $0x1458] sm:$0xff]
        %v819 = vld [vmem:[%s142 + $0x1460] sm:$0xff]
        %v820 = vld [vmem:[%s142 + $0x1468] sm:$0xff]
        %v821 = vld [vmem:[%s142 + $0x1470] sm:$0xff]
        %v822 = vld [vmem:[%s142 + $0x1478] sm:$0xff]
        %v823 = vld [vmem:[%s142 + $0x1480] sm:$0xff]
        %v824 = vld [vmem:[%s142 + $0x1488] sm:$0xff]
        %v825 = vld [vmem:[%s142 + $0x1490] sm:$0xff]
        %v826 = vld [vmem:[%s142 + $0x1498] sm:$0xff]
        %v827 = vld [vmem:[%s142 + $0x14a0] sm:$0xff]
        %v828 = vld [vmem:[%s142 + $0x14a8] sm:$0xff]
        %v829 = vld [vmem:[%s142 + $0x14b0] sm:$0xff]
        %v830 = vld [vmem:[%s142 + $0x14b8] sm:$0xff]
        %v831 = vld [vmem:[%s142 + $0x14c0] sm:$0xff]
        %v832 = vld [vmem:[%s142 + $0x14c8] sm:$0xff]
        %v833 = vld [vmem:[%s142 + $0x14d0] sm:$0xff]
        %v834 = vld [vmem:[%s142 + $0x14d8] sm:$0xff]
        %v835 = vld [vmem:[%s142 + $0x14e0] sm:$0xff]
        %v836 = vld [vmem:[%s142 + $0x14e8] sm:$0xff]
        %v837 = vld [vmem:[%s142 + $0x14f0] sm:$0xff]
        %v838 = vld [vmem:[%s142 + $0x14f8] sm:$0xff]
        %v839 = vld [vmem:[%s142 + $0x1500] sm:$0xff]
        %v840 = vld [vmem:[%s142 + $0x1508] sm:$0xff]
        %v841 = vld [vmem:[%s142 + $0x1510] sm:$0xff]
        %v842 = vld [vmem:[%s142 + $0x1518] sm:$0xff]
        %v843 = vld [vmem:[%s142 + $0x1520] sm:$0xff]
        %v844 = vld [vmem:[%s142 + $0x1528] sm:$0xff]
        %v845 = vld [vmem:[%s142 + $0x1530] sm:$0xff]
        %v846 = vld [vmem:[%s142 + $0x1538] sm:$0xff]
        %v847 = vld [vmem:[%s142 + $0x1540] sm:$0xff]
        %v848 = vld [vmem:[%s142 + $0x1548] sm:$0xff]
        %v849 = vld [vmem:[%s142 + $0x1550] sm:$0xff]
        %v850 = vld [vmem:[%s142 + $0x1558] sm:$0xff]
        %v851 = vld [vmem:[%s142 + $0x1560] sm:$0xff]
        %v852 = vld [vmem:[%s142 + $0x1568] sm:$0xff]
        %v853 = vld [vmem:[%s142 + $0x1570] sm:$0xff]
        %v854 = vld [vmem:[%s142 + $0x1578] sm:$0xff]
        %v855 = vld [vmem:[%s142 + $0x1580] sm:$0xff]
        %v856 = vld [vmem:[%s142 + $0x1588] sm:$0xff]
        %v857 = vld [vmem:[%s142 + $0x1590] sm:$0xff]
        %v858 = vld [vmem:[%s142 + $0x1598] sm:$0xff]
        %v859 = vld [vmem:[%s142 + $0x15a0] sm:$0xff]
        %v860 = vld [vmem:[%s142 + $0x15a8] sm:$0xff]
        %v861 = vld [vmem:[%s142 + $0x15b0] sm:$0xff]
        %v862 = vld [vmem:[%s142 + $0x15b8] sm:$0xff]
        %v863 = vld [vmem:[%s142 + $0x15c0] sm:$0xff]
        %v864 = vld [vmem:[%s142 + $0x15c8] sm:$0xff]
        %v865 = vld [vmem:[%s142 + $0x15d0] sm:$0xff]
        %v866 = vld [vmem:[%s142 + $0x15d8] sm:$0xff]
        %v867 = vld [vmem:[%s142 + $0x15e0] sm:$0xff]
        %v868 = vld [vmem:[%s142 + $0x15e8] sm:$0xff]
        %v869 = vld [vmem:[%s142 + $0x15f0] sm:$0xff]
        %v870 = vld [vmem:[%s142 + $0x15f8] sm:$0xff]
        %v871 = vld [vmem:[%s142 + $0x1600] sm:$0xff]
        %v872 = vld [vmem:[%s142 + $0x1608] sm:$0xff]
        %v873 = vld [vmem:[%s142 + $0x1610] sm:$0xff]
        %v874 = vld [vmem:[%s142 + $0x1618] sm:$0xff]
        %v875 = vld [vmem:[%s142 + $0x1620] sm:$0xff]
        %v876 = vld [vmem:[%s142 + $0x1628] sm:$0xff]
        %v877 = vld [vmem:[%s142 + $0x1630] sm:$0xff]
        %v878 = vld [vmem:[%s142 + $0x1638] sm:$0xff]
        %v879 = vld [vmem:[%s142 + $0x1640] sm:$0xff]
        %v880 = vld [vmem:[%s142 + $0x1648] sm:$0xff]
        %v881 = vld [vmem:[%s142 + $0x1650] sm:$0xff]
        %v882 = vld [vmem:[%s142 + $0x1658] sm:$0xff]
        %v883 = vld [vmem:[%s142 + $0x1660] sm:$0xff]
        %v884 = vld [vmem:[%s142 + $0x1668] sm:$0xff]
        %v885 = vld [vmem:[%s142 + $0x1670] sm:$0xff]
        %v886 = vld [vmem:[%s142 + $0x1678] sm:$0xff]
        %v887 = vld [vmem:[%s142 + $0x1680] sm:$0xff]
        %v888 = vld [vmem:[%s142 + $0x1688] sm:$0xff]
        %v889 = vld [vmem:[%s142 + $0x1690] sm:$0xff]
        %v890 = vld [vmem:[%s142 + $0x1698] sm:$0xff]
        %v891 = vld [vmem:[%s142 + $0x16a0] sm:$0xff]
        %v892 = vld [vmem:[%s142 + $0x16a8] sm:$0xff]
        %v893 = vld [vmem:[%s142 + $0x16b0] sm:$0xff]
        %v894 = vld [vmem:[%s142 + $0x16b8] sm:$0xff]
        %v895 = vld [vmem:[%s142 + $0x16c0] sm:$0xff]
        %v896 = vld [vmem:[%s142 + $0x16c8] sm:$0xff]
        %v897 = vld [vmem:[%s142 + $0x16d0] sm:$0xff]
        %v898 = vld [vmem:[%s142 + $0x16d8] sm:$0xff]
        %v899 = vld [vmem:[%s142 + $0x16e0] sm:$0xff]
        %v900 = vld [vmem:[%s142 + $0x16e8] sm:$0xff]
        %v901 = vld [vmem:[%s142 + $0x16f0] sm:$0xff]
        %v902 = vld [vmem:[%s142 + $0x16f8] sm:$0xff]
        %v903 = vld [vmem:[%s142 + $0x1700] sm:$0xff]
        %v904 = vld [vmem:[%s142 + $0x1708] sm:$0xff]
        %v905 = vld [vmem:[%s142 + $0x1710] sm:$0xff]
        %v906 = vld [vmem:[%s142 + $0x1718] sm:$0xff]
        %v907 = vld [vmem:[%s142 + $0x1720] sm:$0xff]
        %v908 = vld [vmem:[%s142 + $0x1728] sm:$0xff]
        %v909 = vld [vmem:[%s142 + $0x1730] sm:$0xff]
        %v910 = vld [vmem:[%s142 + $0x1738] sm:$0xff]
        %v911 = vld [vmem:[%s142 + $0x1740] sm:$0xff]
        %v912 = vld [vmem:[%s142 + $0x1748] sm:$0xff]
        %v913 = vld [vmem:[%s142 + $0x1750] sm:$0xff]
        %v914 = vld [vmem:[%s142 + $0x1758] sm:$0xff]
        %v915 = vld [vmem:[%s142 + $0x1760] sm:$0xff]
        %v916 = vld [vmem:[%s142 + $0x1768] sm:$0xff]
        %v917 = vld [vmem:[%s142 + $0x1770] sm:$0xff]
        %v918 = vld [vmem:[%s142 + $0x1778] sm:$0xff]
        %v919 = vld [vmem:[%s142 + $0x1780] sm:$0xff]
        %v920 = vld [vmem:[%s142 + $0x1788] sm:$0xff]
        %v921 = vld [vmem:[%s142 + $0x1790] sm:$0xff]
        %v922 = vld [vmem:[%s142 + $0x1798] sm:$0xff]
        %v923 = vld [vmem:[%s142 + $0x17a0] sm:$0xff]
        %v924 = vld [vmem:[%s142 + $0x17a8] sm:$0xff]
        %v925 = vld [vmem:[%s142 + $0x17b0] sm:$0xff]
        %v926 = vld [vmem:[%s142 + $0x17b8] sm:$0xff]
        %v927 = vld [vmem:[%s142 + $0x17c0] sm:$0xff]
        %v928 = vld [vmem:[%s142 + $0x17c8] sm:$0xff]
        %v929 = vld [vmem:[%s142 + $0x17d0] sm:$0xff]
        %v930 = vld [vmem:[%s142 + $0x17d8] sm:$0xff]
        %v931 = vld [vmem:[%s142 + $0x17e0] sm:$0xff]
        %v932 = vld [vmem:[%s142 + $0x17e8] sm:$0xff]
        %v933 = vld [vmem:[%s142 + $0x17f0] sm:$0xff]
        %v934 = vld [vmem:[%s142 + $0x17f8] sm:$0xff]
        %v935 = vld [vmem:[%s142 + $0x1800] sm:$0xff]
        %v936 = vld [vmem:[%s142 + $0x1808] sm:$0xff]
        %v937 = vld [vmem:[%s142 + $0x1810] sm:$0xff]
        %v938 = vld [vmem:[%s142 + $0x1818] sm:$0xff]
        %v939 = vld [vmem:[%s142 + $0x1820] sm:$0xff]
        %v940 = vld [vmem:[%s142 + $0x1828] sm:$0xff]
        %v941 = vld [vmem:[%s142 + $0x1830] sm:$0xff]
        %v942 = vld [vmem:[%s142 + $0x1838] sm:$0xff]
        %v943 = vld [vmem:[%s142 + $0x1840] sm:$0xff]
        %v944 = vld [vmem:[%s142 + $0x1848] sm:$0xff]
        %v945 = vld [vmem:[%s142 + $0x1850] sm:$0xff]
        %v946 = vld [vmem:[%s142 + $0x1858] sm:$0xff]
        %v947 = vld [vmem:[%s142 + $0x1860] sm:$0xff]
        %v948 = vld [vmem:[%s142 + $0x1868] sm:$0xff]
        %v949 = vld [vmem:[%s142 + $0x1870] sm:$0xff]
        %v950 = vld [vmem:[%s142 + $0x1878] sm:$0xff]
        %v951 = vld [vmem:[%s142 + $0x1880] sm:$0xff]
        %v952 = vld [vmem:[%s142 + $0x1888] sm:$0xff]
        %v953 = vld [vmem:[%s142 + $0x1890] sm:$0xff]
        %v954 = vld [vmem:[%s142 + $0x1898] sm:$0xff]
        %v955 = vld [vmem:[%s142 + $0x18a0] sm:$0xff]
        %v956 = vld [vmem:[%s142 + $0x18a8] sm:$0xff]
        %v957 = vld [vmem:[%s142 + $0x18b0] sm:$0xff]
        %v958 = vld [vmem:[%s142 + $0x18b8] sm:$0xff]
        %v959 = vld [vmem:[%s142 + $0x18c0] sm:$0xff]
        %v960 = vld [vmem:[%s142 + $0x18c8] sm:$0xff]
        %v961 = vld [vmem:[%s142 + $0x18d0] sm:$0xff]
        %v962 = vld [vmem:[%s142 + $0x18d8] sm:$0xff]
        %v963 = vld [vmem:[%s142 + $0x18e0] sm:$0xff]
        %v964 = vld [vmem:[%s142 + $0x18e8] sm:$0xff]
        %v965 = vld [vmem:[%s142 + $0x18f0] sm:$0xff]
        %v966 = vld [vmem:[%s142 + $0x18f8] sm:$0xff]
        %v967 = vld [vmem:[%s142 + $0x1900] sm:$0xff]
        %v968 = vld [vmem:[%s142 + $0x1908] sm:$0xff]
        %v969 = vld [vmem:[%s142 + $0x1910] sm:$0xff]
        %v970 = vld [vmem:[%s142 + $0x1918] sm:$0xff]
        %v971 = vld [vmem:[%s142 + $0x1920] sm:$0xff]
        %v972 = vld [vmem:[%s142 + $0x1928] sm:$0xff]
        %v973 = vld [vmem:[%s142 + $0x1930] sm:$0xff]
        %v974 = vld [vmem:[%s142 + $0x1938] sm:$0xff]
        %v975 = vld [vmem:[%s142 + $0x1940] sm:$0xff]
        %v976 = vld [vmem:[%s142 + $0x1948] sm:$0xff]
        %v977 = vld [vmem:[%s142 + $0x1950] sm:$0xff]
        %v978 = vld [vmem:[%s142 + $0x1958] sm:$0xff]
        %v979 = vld [vmem:[%s142 + $0x1960] sm:$0xff]
        %v980 = vld [vmem:[%s142 + $0x1968] sm:$0xff]
        %v981 = vld [vmem:[%s142 + $0x1970] sm:$0xff]
        %v982 = vld [vmem:[%s142 + $0x1978] sm:$0xff]
        %v983 = vld [vmem:[%s142 + $0x1980] sm:$0xff]
        %v984 = vld [vmem:[%s142 + $0x1988] sm:$0xff]
        %v985 = vld [vmem:[%s142 + $0x1990] sm:$0xff]
        %v986 = vld [vmem:[%s142 + $0x1998] sm:$0xff]
        %v987 = vld [vmem:[%s142 + $0x19a0] sm:$0xff]
        %v988 = vld [vmem:[%s142 + $0x19a8] sm:$0xff]
        %v989 = vld [vmem:[%s142 + $0x19b0] sm:$0xff]
        %v990 = vld [vmem:[%s142 + $0x19b8] sm:$0xff]
        %v991 = vld [vmem:[%s142 + $0x19c0] sm:$0xff]
        %v992 = vld [vmem:[%s142 + $0x19c8] sm:$0xff]
        %v993 = vld [vmem:[%s142 + $0x19d0] sm:$0xff]
        %v994 = vld [vmem:[%s142 + $0x19d8] sm:$0xff]
        %v995 = vld [vmem:[%s142 + $0x19e0] sm:$0xff]
        %v996 = vld [vmem:[%s142 + $0x19e8] sm:$0xff]
        %v997 = vld [vmem:[%s142 + $0x19f0] sm:$0xff]
        %v998 = vld [vmem:[%s142 + $0x19f8] sm:$0xff]
        %v999 = vld [vmem:[%s142 + $0x1a00] sm:$0xff]
        %v1000 = vld [vmem:[%s142 + $0x1a08] sm:$0xff]
        %v1001 = vld [vmem:[%s142 + $0x1a10] sm:$0xff]
        %v1002 = vld [vmem:[%s142 + $0x1a18] sm:$0xff]
        %v1003 = vld [vmem:[%s142 + $0x1a20] sm:$0xff]
        %v1004 = vld [vmem:[%s142 + $0x1a28] sm:$0xff]
        %v1005 = vld [vmem:[%s142 + $0x1a30] sm:$0xff]
        %v1006 = vld [vmem:[%s142 + $0x1a38] sm:$0xff]
        %v1007 = vld [vmem:[%s142 + $0x1a40] sm:$0xff]
        %v1008 = vld [vmem:[%s142 + $0x1a48] sm:$0xff]
        %v1009 = vld [vmem:[%s142 + $0x1a50] sm:$0xff]
        %v1010 = vld [vmem:[%s142 + $0x1a58] sm:$0xff]
        %v1011 = vld [vmem:[%s142 + $0x1a60] sm:$0xff]
        %v1012 = vld [vmem:[%s142 + $0x1a68] sm:$0xff]
        %v1013 = vld [vmem:[%s142 + $0x1a70] sm:$0xff]
        %v1014 = vld [vmem:[%s142 + $0x1a78] sm:$0xff]
        %v1015 = vld [vmem:[%s142 + $0x1a80] sm:$0xff]
        %v1016 = vld [vmem:[%s142 + $0x1a88] sm:$0xff]
        %v1017 = vld [vmem:[%s142 + $0x1a90] sm:$0xff]
        %v1018 = vld [vmem:[%s142 + $0x1a98] sm:$0xff]
        %v1019 = vld [vmem:[%s142 + $0x1aa0] sm:$0xff]
        %v1020 = vld [vmem:[%s142 + $0x1aa8] sm:$0xff]
        %v1021 = vld [vmem:[%s142 + $0x1ab0] sm:$0xff]
        %v1022 = vld [vmem:[%s142 + $0x1ab8] sm:$0xff]
        %v1023 = vld [vmem:[%s142 + $0x1ac0] sm:$0xff]
        %v1024 = vld [vmem:[%s142 + $0x1ac8] sm:$0xff]
        %v1025 = vld [vmem:[%s142 + $0x1ad0] sm:$0xff]
        %v1026 = vld [vmem:[%s142 + $0x1ad8] sm:$0xff]
        %v1027 = vld [vmem:[%s142 + $0x1ae0] sm:$0xff]
        %v1028 = vld [vmem:[%s142 + $0x1ae8] sm:$0xff]
        %v1029 = vld [vmem:[%s142 + $0x1af0] sm:$0xff]
        %v1030 = vld [vmem:[%s142 + $0x1af8] sm:$0xff]
        %v1031 = vld [vmem:[%s142 + $0x1b00] sm:$0xff]
        %v1032 = vld [vmem:[%s142 + $0x1b08] sm:$0xff]
        %v1033 = vld [vmem:[%s142 + $0x1b10] sm:$0xff]
        %v1034 = vld [vmem:[%s142 + $0x1b18] sm:$0xff]
        %v1035 = vld [vmem:[%s142 + $0x1b20] sm:$0xff]
        %v1036 = vld [vmem:[%s142 + $0x1b28] sm:$0xff]
        %v1037 = vld [vmem:[%s142 + $0x1b30] sm:$0xff]
        %v1038 = vld [vmem:[%s142 + $0x1b38] sm:$0xff]
        %v1039 = vld [vmem:[%s142 + $0x1b40] sm:$0xff]
        %v1040 = vld [vmem:[%s142 + $0x1b48] sm:$0xff]
        %v1041 = vld [vmem:[%s142 + $0x1b50] sm:$0xff]
        %v1042 = vld [vmem:[%s142 + $0x1b58] sm:$0xff]
        %v1043 = vld [vmem:[%s142 + $0x1b60] sm:$0xff]
        %v1044 = vld [vmem:[%s142 + $0x1b68] sm:$0xff]
        %v1045 = vld [vmem:[%s142 + $0x1b70] sm:$0xff]
        %v1046 = vld [vmem:[%s142 + $0x1b78] sm:$0xff]
        %v1047 = vld [vmem:[%s142 + $0x1b80] sm:$0xff]
        %v1048 = vld [vmem:[%s142 + $0x1b88] sm:$0xff]
        %v1049 = vld [vmem:[%s142 + $0x1b90] sm:$0xff]
        %v1050 = vld [vmem:[%s142 + $0x1b98] sm:$0xff]
        %v1051 = vld [vmem:[%s142 + $0x1ba0] sm:$0xff]
        %v1052 = vld [vmem:[%s142 + $0x1ba8] sm:$0xff]
        %v1053 = vld [vmem:[%s142 + $0x1bb0] sm:$0xff]
        %v1054 = vld [vmem:[%s142 + $0x1bb8] sm:$0xff]
        %v1055 = vld [vmem:[%s142 + $0x1bc0] sm:$0xff]
        %v1056 = vld [vmem:[%s142 + $0x1bc8] sm:$0xff]
        %v1057 = vld [vmem:[%s142 + $0x1bd0] sm:$0xff]
        %v1058 = vld [vmem:[%s142 + $0x1bd8] sm:$0xff]
        %v1059 = vld [vmem:[%s142 + $0x1be0] sm:$0xff]
        %v1060 = vld [vmem:[%s142 + $0x1be8] sm:$0xff]
        %v1061 = vld [vmem:[%s142 + $0x1bf0] sm:$0xff]
        %v1062 = vld [vmem:[%s142 + $0x1bf8] sm:$0xff]
        %v1063 = vld [vmem:[%s142 + $0x1c00] sm:$0xff]
        %v1064 = vld [vmem:[%s142 + $0x1c08] sm:$0xff]
        %v1065 = vld [vmem:[%s142 + $0x1c10] sm:$0xff]
        %v1066 = vld [vmem:[%s142 + $0x1c18] sm:$0xff]
        %v1067 = vld [vmem:[%s142 + $0x1c20] sm:$0xff]
        %v1068 = vld [vmem:[%s142 + $0x1c28] sm:$0xff]
        %v1069 = vld [vmem:[%s142 + $0x1c30] sm:$0xff]
        %v1070 = vld [vmem:[%s142 + $0x1c38] sm:$0xff]
        %v1071 = vld [vmem:[%s142 + $0x1c40] sm:$0xff]
        %v1072 = vld [vmem:[%s142 + $0x1c48] sm:$0xff]
        %v1073 = vld [vmem:[%s142 + $0x1c50] sm:$0xff]
        %v1074 = vld [vmem:[%s142 + $0x1c58] sm:$0xff]
        %v1075 = vld [vmem:[%s142 + $0x1c60] sm:$0xff]
        %v1076 = vld [vmem:[%s142 + $0x1c68] sm:$0xff]
        %v1077 = vld [vmem:[%s142 + $0x1c70] sm:$0xff]
        %v1078 = vld [vmem:[%s142 + $0x1c78] sm:$0xff]
        %v1079 = vld [vmem:[%s142 + $0x1c80] sm:$0xff]
        %v1080 = vld [vmem:[%s142 + $0x1c88] sm:$0xff]
        %v1081 = vld [vmem:[%s142 + $0x1c90] sm:$0xff]
        %v1082 = vld [vmem:[%s142 + $0x1c98] sm:$0xff]
        %v1083 = vld [vmem:[%s142 + $0x1ca0] sm:$0xff]
        %v1084 = vld [vmem:[%s142 + $0x1ca8] sm:$0xff]
        %v1085 = vld [vmem:[%s142 + $0x1cb0] sm:$0xff]
        %v1086 = vld [vmem:[%s142 + $0x1cb8] sm:$0xff]
        %v1087 = vld [vmem:[%s142 + $0x1cc0] sm:$0xff]
        %v1088 = vld [vmem:[%s142 + $0x1cc8] sm:$0xff]
        %v1089 = vld [vmem:[%s142 + $0x1cd0] sm:$0xff]
        %v1090 = vld [vmem:[%s142 + $0x1cd8] sm:$0xff]
        %v1091 = vld [vmem:[%s142 + $0x1ce0] sm:$0xff]
        %v1092 = vld [vmem:[%s142 + $0x1ce8] sm:$0xff]
        %v1093 = vld [vmem:[%s142 + $0x1cf0] sm:$0xff]
        %v1094 = vld [vmem:[%s142 + $0x1cf8] sm:$0xff]
        %v1095 = vld [vmem:[%s142 + $0x1d00] sm:$0xff]
        %v1096 = vld [vmem:[%s142 + $0x1d08] sm:$0xff]
        %v1097 = vld [vmem:[%s142 + $0x1d10] sm:$0xff]
        %v1098 = vld [vmem:[%s142 + $0x1d18] sm:$0xff]
        %v1099 = vld [vmem:[%s142 + $0x1d20] sm:$0xff]
        %v1100 = vld [vmem:[%s142 + $0x1d28] sm:$0xff]
        %v1101 = vld [vmem:[%s142 + $0x1d30] sm:$0xff]
        %v1102 = vld [vmem:[%s142 + $0x1d38] sm:$0xff]
        %v1103 = vld [vmem:[%s142 + $0x1d40] sm:$0xff]
        %v1104 = vld [vmem:[%s142 + $0x1d48] sm:$0xff]
        %v1105 = vld [vmem:[%s142 + $0x1d50] sm:$0xff]
        %v1106 = vld [vmem:[%s142 + $0x1d58] sm:$0xff]
        %v1107 = vld [vmem:[%s142 + $0x1d60] sm:$0xff]
        %v1108 = vld [vmem:[%s142 + $0x1d68] sm:$0xff]
        %v1109 = vld [vmem:[%s142 + $0x1d70] sm:$0xff]
        %v1110 = vld [vmem:[%s142 + $0x1d78] sm:$0xff]
        %v1111 = vld [vmem:[%s142 + $0x1d80] sm:$0xff]
        %v1112 = vld [vmem:[%s142 + $0x1d88] sm:$0xff]
        %v1113 = vld [vmem:[%s142 + $0x1d90] sm:$0xff]
        %v1114 = vld [vmem:[%s142 + $0x1d98] sm:$0xff]
        %v1115 = vld [vmem:[%s142 + $0x1da0] sm:$0xff]
        %v1116 = vld [vmem:[%s142 + $0x1da8] sm:$0xff]
        %v1117 = vld [vmem:[%s142 + $0x1db0] sm:$0xff]
        %v1118 = vld [vmem:[%s142 + $0x1db8] sm:$0xff]
        %v1119 = vld [vmem:[%s142 + $0x1dc0] sm:$0xff]
        %v1120 = vld [vmem:[%s142 + $0x1dc8] sm:$0xff]
        %v1121 = vld [vmem:[%s142 + $0x1dd0] sm:$0xff]
        %v1122 = vld [vmem:[%s142 + $0x1dd8] sm:$0xff]
        %v1123 = vld [vmem:[%s142 + $0x1de0] sm:$0xff]
        %v1124 = vld [vmem:[%s142 + $0x1de8] sm:$0xff]
        %v1125 = vld [vmem:[%s142 + $0x1df0] sm:$0xff]
        %v1126 = vld [vmem:[%s142 + $0x1df8] sm:$0xff]
        %v1127 = vld [vmem:[%s142 + $0x1e00] sm:$0xff]
        %v1128 = vld [vmem:[%s142 + $0x1e08] sm:$0xff]
        %v1129 = vld [vmem:[%s142 + $0x1e10] sm:$0xff]
        %v1130 = vld [vmem:[%s142 + $0x1e18] sm:$0xff]
        %v1131 = vld [vmem:[%s142 + $0x1e20] sm:$0xff]
        %v1132 = vld [vmem:[%s142 + $0x1e28] sm:$0xff]
        %v1133 = vld [vmem:[%s142 + $0x1e30] sm:$0xff]
        %v1134 = vld [vmem:[%s142 + $0x1e38] sm:$0xff]
        %v1135 = vld [vmem:[%s142 + $0x1e40] sm:$0xff]
        %v1136 = vld [vmem:[%s142 + $0x1e48] sm:$0xff]
        %v1137 = vld [vmem:[%s142 + $0x1e50] sm:$0xff]
        %v1138 = vld [vmem:[%s142 + $0x1e58] sm:$0xff]
        %v1139 = vld [vmem:[%s142 + $0x1e60] sm:$0xff]
        %v1140 = vld [vmem:[%s142 + $0x1e68] sm:$0xff]
        %v1141 = vld [vmem:[%s142 + $0x1e70] sm:$0xff]
        %v1142 = vld [vmem:[%s142 + $0x1e78] sm:$0xff]
        %v1143 = vld [vmem:[%s142 + $0x1e80] sm:$0xff]
        %v1144 = vld [vmem:[%s142 + $0x1e88] sm:$0xff]
        %v1145 = vld [vmem:[%s142 + $0x1e90] sm:$0xff]
        %v1146 = vld [vmem:[%s142 + $0x1e98] sm:$0xff]
        %v1147 = vld [vmem:[%s142 + $0x1ea0] sm:$0xff]
        %v1148 = vld [vmem:[%s142 + $0x1ea8] sm:$0xff]
        %v1149 = vld [vmem:[%s142 + $0x1eb0] sm:$0xff]
        %v1150 = vld [vmem:[%s142 + $0x1eb8] sm:$0xff]
        %v1151 = vld [vmem:[%s142 + $0x1ec0] sm:$0xff]
        %v1152 = vld [vmem:[%s142 + $0x1ec8] sm:$0xff]
        %v1153 = vld [vmem:[%s142 + $0x1ed0] sm:$0xff]
        %v1154 = vld [vmem:[%s142 + $0x1ed8] sm:$0xff]
        %v1155 = vld [vmem:[%s142 + $0x1ee0] sm:$0xff]
        %v1156 = vld [vmem:[%s142 + $0x1ee8] sm:$0xff]
        %v1157 = vld [vmem:[%s142 + $0x1ef0] sm:$0xff]
        %v1158 = vld [vmem:[%s142 + $0x1ef8] sm:$0xff]
        %v1159 = vld [vmem:[%s142 + $0x1f00] sm:$0xff]
        %v1160 = vld [vmem:[%s142 + $0x1f08] sm:$0xff]
        %v1161 = vld [vmem:[%s142 + $0x1f10] sm:$0xff]
        %v1162 = vld [vmem:[%s142 + $0x1f18] sm:$0xff]
        %v1163 = vld [vmem:[%s142 + $0x1f20] sm:$0xff]
        %v1164 = vld [vmem:[%s142 + $0x1f28] sm:$0xff]
        %v1165 = vld [vmem:[%s142 + $0x1f30] sm:$0xff]
        %v1166 = vld [vmem:[%s142 + $0x1f38] sm:$0xff]
        %v1167 = vld [vmem:[%s142 + $0x1f40] sm:$0xff]
        %v1168 = vld [vmem:[%s142 + $0x1f48] sm:$0xff]
        %v1169 = vld [vmem:[%s142 + $0x1f50] sm:$0xff]
        %v1170 = vld [vmem:[%s142 + $0x1f58] sm:$0xff]
        %v1171 = vld [vmem:[%s142 + $0x1f60] sm:$0xff]
        %v1172 = vld [vmem:[%s142 + $0x1f68] sm:$0xff]
        %v1173 = vld [vmem:[%s142 + $0x1f70] sm:$0xff]
        %v1174 = vld [vmem:[%s142 + $0x1f78] sm:$0xff]
        %v1175 = vld [vmem:[%s142 + $0x1f80] sm:$0xff]
        %v1176 = vld [vmem:[%s142 + $0x1f88] sm:$0xff]
        %v1177 = vld [vmem:[%s142 + $0x1f90] sm:$0xff]
        %v1178 = vld [vmem:[%s142 + $0x1f98] sm:$0xff]
        %v1179 = vld [vmem:[%s142 + $0x1fa0] sm:$0xff]
        %v1180 = vld [vmem:[%s142 + $0x1fa8] sm:$0xff]
        %v1181 = vld [vmem:[%s142 + $0x1fb0] sm:$0xff]
        %v1182 = vld [vmem:[%s142 + $0x1fb8] sm:$0xff]
        %v1183 = vld [vmem:[%s142 + $0x1fc0] sm:$0xff]
        %v1184 = vld [vmem:[%s142 + $0x1fc8] sm:$0xff]
        %v1185 = vld [vmem:[%s142 + $0x1fd0] sm:$0xff]
        %v1186 = vld [vmem:[%s142 + $0x1fd8] sm:$0xff]
        %v1187 = vld [vmem:[%s142 + $0x1fe0] sm:$0xff]
        %v1188 = vld [vmem:[%s142 + $0x1fe8] sm:$0xff]
        %v1189 = vld [vmem:[%s142 + $0x1ff0] sm:$0xff]
        %v1190 = vld [vmem:[%s142 + $0x1ff8] sm:$0xff]
        %v1191 = vstv %s166
        %v1192 = vmul.f32 %v167, %v1191
        %v1193 = vmul.f32 %v168, %v1191
        %v1194 = vmul.f32 %v169, %v1191
        %v1195 = vmul.f32 %v170, %v1191
        %v1196 = vmul.f32 %v171, %v1191
        %v1197 = vmul.f32 %v172, %v1191
        %v1198 = vmul.f32 %v173, %v1191
        %v1199 = vmul.f32 %v174, %v1191
        %v1200 = vmul.f32 %v175, %v1191
        %v1201 = vmul.f32 %v176, %v1191
        %v1202 = vmul.f32 %v177, %v1191
        %v1203 = vmul.f32 %v178, %v1191
        %v1204 = vmul.f32 %v179, %v1191
        %v1205 = vmul.f32 %v180, %v1191
        %v1206 = vmul.f32 %v181, %v1191
        %v1207 = vmul.f32 %v182, %v1191
        %v1208 = vmul.f32 %v183, %v1191
        %v1209 = vmul.f32 %v184, %v1191
        %v1210 = vmul.f32 %v185, %v1191
        %v1211 = vmul.f32 %v186, %v1191
        %v1212 = vmul.f32 %v187, %v1191
        %v1213 = vmul.f32 %v188, %v1191
        %v1214 = vmul.f32 %v189, %v1191
        %v1215 = vmul.f32 %v190, %v1191
        %v1216 = vmul.f32 %v191, %v1191
        %v1217 = vmul.f32 %v192, %v1191
        %v1218 = vmul.f32 %v193, %v1191
        %v1219 = vmul.f32 %v194, %v1191
        %v1220 = vmul.f32 %v195, %v1191
        %v1221 = vmul.f32 %v196, %v1191
        %v1222 = vmul.f32 %v197, %v1191
        %v1223 = vmul.f32 %v198, %v1191
        %v1224 = vmul.f32 %v199, %v1191
        %v1225 = vmul.f32 %v200, %v1191
        %v1226 = vmul.f32 %v201, %v1191
        %v1227 = vmul.f32 %v202, %v1191
        %v1228 = vmul.f32 %v203, %v1191
        %v1229 = vmul.f32 %v204, %v1191
        %v1230 = vmul.f32 %v205, %v1191
        %v1231 = vmul.f32 %v206, %v1191
        %v1232 = vmul.f32 %v207, %v1191
        %v1233 = vmul.f32 %v208, %v1191
        %v1234 = vmul.f32 %v209, %v1191
        %v1235 = vmul.f32 %v210, %v1191
        %v1236 = vmul.f32 %v211, %v1191
        %v1237 = vmul.f32 %v212, %v1191
        %v1238 = vmul.f32 %v213, %v1191
        %v1239 = vmul.f32 %v214, %v1191
        %v1240 = vmul.f32 %v215, %v1191
        %v1241 = vmul.f32 %v216, %v1191
        %v1242 = vmul.f32 %v217, %v1191
        %v1243 = vmul.f32 %v218, %v1191
        %v1244 = vmul.f32 %v219, %v1191
        %v1245 = vmul.f32 %v220, %v1191
        %v1246 = vmul.f32 %v221, %v1191
        %v1247 = vmul.f32 %v222, %v1191
        %v1248 = vmul.f32 %v223, %v1191
        %v1249 = vmul.f32 %v224, %v1191
        %v1250 = vmul.f32 %v225, %v1191
        %v1251 = vmul.f32 %v226, %v1191
        %v1252 = vmul.f32 %v227, %v1191
        %v1253 = vmul.f32 %v228, %v1191
        %v1254 = vmul.f32 %v229, %v1191
        %v1255 = vmul.f32 %v230, %v1191
        %v1256 = vmul.f32 %v231, %v1191
        %v1257 = vmul.f32 %v232, %v1191
        %v1258 = vmul.f32 %v233, %v1191
        %v1259 = vmul.f32 %v234, %v1191
        %v1260 = vmul.f32 %v235, %v1191
        %v1261 = vmul.f32 %v236, %v1191
        %v1262 = vmul.f32 %v237, %v1191
        %v1263 = vmul.f32 %v238, %v1191
        %v1264 = vmul.f32 %v239, %v1191
        %v1265 = vmul.f32 %v240, %v1191
        %v1266 = vmul.f32 %v241, %v1191
        %v1267 = vmul.f32 %v242, %v1191
        %v1268 = vmul.f32 %v243, %v1191
        %v1269 = vmul.f32 %v244, %v1191
        %v1270 = vmul.f32 %v245, %v1191
        %v1271 = vmul.f32 %v246, %v1191
        %v1272 = vmul.f32 %v247, %v1191
        %v1273 = vmul.f32 %v248, %v1191
        %v1274 = vmul.f32 %v249, %v1191
        %v1275 = vmul.f32 %v250, %v1191
        %v1276 = vmul.f32 %v251, %v1191
        %v1277 = vmul.f32 %v252, %v1191
        %v1278 = vmul.f32 %v253, %v1191
        %v1279 = vmul.f32 %v254, %v1191
        %v1280 = vmul.f32 %v255, %v1191
        %v1281 = vmul.f32 %v256, %v1191
        %v1282 = vmul.f32 %v257, %v1191
        %v1283 = vmul.f32 %v258, %v1191
        %v1284 = vmul.f32 %v259, %v1191
        %v1285 = vmul.f32 %v260, %v1191
        %v1286 = vmul.f32 %v261, %v1191
        %v1287 = vmul.f32 %v262, %v1191
        %v1288 = vmul.f32 %v263, %v1191
        %v1289 = vmul.f32 %v264, %v1191
        %v1290 = vmul.f32 %v265, %v1191
        %v1291 = vmul.f32 %v266, %v1191
        %v1292 = vmul.f32 %v267, %v1191
        %v1293 = vmul.f32 %v268, %v1191
        %v1294 = vmul.f32 %v269, %v1191
        %v1295 = vmul.f32 %v270, %v1191
        %v1296 = vmul.f32 %v271, %v1191
        %v1297 = vmul.f32 %v272, %v1191
        %v1298 = vmul.f32 %v273, %v1191
        %v1299 = vmul.f32 %v274, %v1191
        %v1300 = vmul.f32 %v275, %v1191
        %v1301 = vmul.f32 %v276, %v1191
        %v1302 = vmul.f32 %v277, %v1191
        %v1303 = vmul.f32 %v278, %v1191
        %v1304 = vmul.f32 %v279, %v1191
        %v1305 = vmul.f32 %v280, %v1191
        %v1306 = vmul.f32 %v281, %v1191
        %v1307 = vmul.f32 %v282, %v1191
        %v1308 = vmul.f32 %v283, %v1191
        %v1309 = vmul.f32 %v284, %v1191
        %v1310 = vmul.f32 %v285, %v1191
        %v1311 = vmul.f32 %v286, %v1191
        %v1312 = vmul.f32 %v287, %v1191
        %v1313 = vmul.f32 %v288, %v1191
        %v1314 = vmul.f32 %v289, %v1191
        %v1315 = vmul.f32 %v290, %v1191
        %v1316 = vmul.f32 %v291, %v1191
        %v1317 = vmul.f32 %v292, %v1191
        %v1318 = vmul.f32 %v293, %v1191
        %v1319 = vmul.f32 %v294, %v1191
        %v1320 = vmul.f32 %v295, %v1191
        %v1321 = vmul.f32 %v296, %v1191
        %v1322 = vmul.f32 %v297, %v1191
        %v1323 = vmul.f32 %v298, %v1191
        %v1324 = vmul.f32 %v299, %v1191
        %v1325 = vmul.f32 %v300, %v1191
        %v1326 = vmul.f32 %v301, %v1191
        %v1327 = vmul.f32 %v302, %v1191
        %v1328 = vmul.f32 %v303, %v1191
        %v1329 = vmul.f32 %v304, %v1191
        %v1330 = vmul.f32 %v305, %v1191
        %v1331 = vmul.f32 %v306, %v1191
        %v1332 = vmul.f32 %v307, %v1191
        %v1333 = vmul.f32 %v308, %v1191
        %v1334 = vmul.f32 %v309, %v1191
        %v1335 = vmul.f32 %v310, %v1191
        %v1336 = vmul.f32 %v311, %v1191
        %v1337 = vmul.f32 %v312, %v1191
        %v1338 = vmul.f32 %v313, %v1191
        %v1339 = vmul.f32 %v314, %v1191
        %v1340 = vmul.f32 %v315, %v1191
        %v1341 = vmul.f32 %v316, %v1191
        %v1342 = vmul.f32 %v317, %v1191
        %v1343 = vmul.f32 %v318, %v1191
        %v1344 = vmul.f32 %v319, %v1191
        %v1345 = vmul.f32 %v320, %v1191
        %v1346 = vmul.f32 %v321, %v1191
        %v1347 = vmul.f32 %v322, %v1191
        %v1348 = vmul.f32 %v323, %v1191
        %v1349 = vmul.f32 %v324, %v1191
        %v1350 = vmul.f32 %v325, %v1191
        %v1351 = vmul.f32 %v326, %v1191
        %v1352 = vmul.f32 %v327, %v1191
        %v1353 = vmul.f32 %v328, %v1191
        %v1354 = vmul.f32 %v329, %v1191
        %v1355 = vmul.f32 %v330, %v1191
        %v1356 = vmul.f32 %v331, %v1191
        %v1357 = vmul.f32 %v332, %v1191
        %v1358 = vmul.f32 %v333, %v1191
        %v1359 = vmul.f32 %v334, %v1191
        %v1360 = vmul.f32 %v335, %v1191
        %v1361 = vmul.f32 %v336, %v1191
        %v1362 = vmul.f32 %v337, %v1191
        %v1363 = vmul.f32 %v338, %v1191
        %v1364 = vmul.f32 %v339, %v1191
        %v1365 = vmul.f32 %v340, %v1191
        %v1366 = vmul.f32 %v341, %v1191
        %v1367 = vmul.f32 %v342, %v1191
        %v1368 = vmul.f32 %v343, %v1191
        %v1369 = vmul.f32 %v344, %v1191
        %v1370 = vmul.f32 %v345, %v1191
        %v1371 = vmul.f32 %v346, %v1191
        %v1372 = vmul.f32 %v347, %v1191
        %v1373 = vmul.f32 %v348, %v1191
        %v1374 = vmul.f32 %v349, %v1191
        %v1375 = vmul.f32 %v350, %v1191
        %v1376 = vmul.f32 %v351, %v1191
        %v1377 = vmul.f32 %v352, %v1191
        %v1378 = vmul.f32 %v353, %v1191
        %v1379 = vmul.f32 %v354, %v1191
        %v1380 = vmul.f32 %v355, %v1191
        %v1381 = vmul.f32 %v356, %v1191
        %v1382 = vmul.f32 %v357, %v1191
        %v1383 = vmul.f32 %v358, %v1191
        %v1384 = vmul.f32 %v359, %v1191
        %v1385 = vmul.f32 %v360, %v1191
        %v1386 = vmul.f32 %v361, %v1191
        %v1387 = vmul.f32 %v362, %v1191
        %v1388 = vmul.f32 %v363, %v1191
        %v1389 = vmul.f32 %v364, %v1191
        %v1390 = vmul.f32 %v365, %v1191
        %v1391 = vmul.f32 %v366, %v1191
        %v1392 = vmul.f32 %v367, %v1191
        %v1393 = vmul.f32 %v368, %v1191
        %v1394 = vmul.f32 %v369, %v1191
        %v1395 = vmul.f32 %v370, %v1191
        %v1396 = vmul.f32 %v371, %v1191
        %v1397 = vmul.f32 %v372, %v1191
        %v1398 = vmul.f32 %v373, %v1191
        %v1399 = vmul.f32 %v374, %v1191
        %v1400 = vmul.f32 %v375, %v1191
        %v1401 = vmul.f32 %v376, %v1191
        %v1402 = vmul.f32 %v377, %v1191
        %v1403 = vmul.f32 %v378, %v1191
        %v1404 = vmul.f32 %v379, %v1191
        %v1405 = vmul.f32 %v380, %v1191
        %v1406 = vmul.f32 %v381, %v1191
        %v1407 = vmul.f32 %v382, %v1191
        %v1408 = vmul.f32 %v383, %v1191
        %v1409 = vmul.f32 %v384, %v1191
        %v1410 = vmul.f32 %v385, %v1191
        %v1411 = vmul.f32 %v386, %v1191
        %v1412 = vmul.f32 %v387, %v1191
        %v1413 = vmul.f32 %v388, %v1191
        %v1414 = vmul.f32 %v389, %v1191
        %v1415 = vmul.f32 %v390, %v1191
        %v1416 = vmul.f32 %v391, %v1191
        %v1417 = vmul.f32 %v392, %v1191
        %v1418 = vmul.f32 %v393, %v1191
        %v1419 = vmul.f32 %v394, %v1191
        %v1420 = vmul.f32 %v395, %v1191
        %v1421 = vmul.f32 %v396, %v1191
        %v1422 = vmul.f32 %v397, %v1191
        %v1423 = vmul.f32 %v398, %v1191
        %v1424 = vmul.f32 %v399, %v1191
        %v1425 = vmul.f32 %v400, %v1191
        %v1426 = vmul.f32 %v401, %v1191
        %v1427 = vmul.f32 %v402, %v1191
        %v1428 = vmul.f32 %v403, %v1191
        %v1429 = vmul.f32 %v404, %v1191
        %v1430 = vmul.f32 %v405, %v1191
        %v1431 = vmul.f32 %v406, %v1191
        %v1432 = vmul.f32 %v407, %v1191
        %v1433 = vmul.f32 %v408, %v1191
        %v1434 = vmul.f32 %v409, %v1191
        %v1435 = vmul.f32 %v410, %v1191
        %v1436 = vmul.f32 %v411, %v1191
        %v1437 = vmul.f32 %v412, %v1191
        %v1438 = vmul.f32 %v413, %v1191
        %v1439 = vmul.f32 %v414, %v1191
        %v1440 = vmul.f32 %v415, %v1191
        %v1441 = vmul.f32 %v416, %v1191
        %v1442 = vmul.f32 %v417, %v1191
        %v1443 = vmul.f32 %v418, %v1191
        %v1444 = vmul.f32 %v419, %v1191
        %v1445 = vmul.f32 %v420, %v1191
        %v1446 = vmul.f32 %v421, %v1191
        %v1447 = vmul.f32 %v422, %v1191
        %v1448 = vmul.f32 %v423, %v1191
        %v1449 = vmul.f32 %v424, %v1191
        %v1450 = vmul.f32 %v425, %v1191
        %v1451 = vmul.f32 %v426, %v1191
        %v1452 = vmul.f32 %v427, %v1191
        %v1453 = vmul.f32 %v428, %v1191
        %v1454 = vmul.f32 %v429, %v1191
        %v1455 = vmul.f32 %v430, %v1191
        %v1456 = vmul.f32 %v431, %v1191
        %v1457 = vmul.f32 %v432, %v1191
        %v1458 = vmul.f32 %v433, %v1191
        %v1459 = vmul.f32 %v434, %v1191
        %v1460 = vmul.f32 %v435, %v1191
        %v1461 = vmul.f32 %v436, %v1191
        %v1462 = vmul.f32 %v437, %v1191
        %v1463 = vmul.f32 %v438, %v1191
        %v1464 = vmul.f32 %v439, %v1191
        %v1465 = vmul.f32 %v440, %v1191
        %v1466 = vmul.f32 %v441, %v1191
        %v1467 = vmul.f32 %v442, %v1191
        %v1468 = vmul.f32 %v443, %v1191
        %v1469 = vmul.f32 %v444, %v1191
        %v1470 = vmul.f32 %v445, %v1191
        %v1471 = vmul.f32 %v446, %v1191
        %v1472 = vmul.f32 %v447, %v1191
        %v1473 = vmul.f32 %v448, %v1191
        %v1474 = vmul.f32 %v449, %v1191
        %v1475 = vmul.f32 %v450, %v1191
        %v1476 = vmul.f32 %v451, %v1191
        %v1477 = vmul.f32 %v452, %v1191
        %v1478 = vmul.f32 %v453, %v1191
        %v1479 = vmul.f32 %v454, %v1191
        %v1480 = vmul.f32 %v455, %v1191
        %v1481 = vmul.f32 %v456, %v1191
        %v1482 = vmul.f32 %v457, %v1191
        %v1483 = vmul.f32 %v458, %v1191
        %v1484 = vmul.f32 %v459, %v1191
        %v1485 = vmul.f32 %v460, %v1191
        %v1486 = vmul.f32 %v461, %v1191
        %v1487 = vmul.f32 %v462, %v1191
        %v1488 = vmul.f32 %v463, %v1191
        %v1489 = vmul.f32 %v464, %v1191
        %v1490 = vmul.f32 %v465, %v1191
        %v1491 = vmul.f32 %v466, %v1191
        %v1492 = vmul.f32 %v467, %v1191
        %v1493 = vmul.f32 %v468, %v1191
        %v1494 = vmul.f32 %v469, %v1191
        %v1495 = vmul.f32 %v470, %v1191
        %v1496 = vmul.f32 %v471, %v1191
        %v1497 = vmul.f32 %v472, %v1191
        %v1498 = vmul.f32 %v473, %v1191
        %v1499 = vmul.f32 %v474, %v1191
        %v1500 = vmul.f32 %v475, %v1191
        %v1501 = vmul.f32 %v476, %v1191
        %v1502 = vmul.f32 %v477, %v1191
        %v1503 = vmul.f32 %v478, %v1191
        %v1504 = vmul.f32 %v479, %v1191
        %v1505 = vmul.f32 %v480, %v1191
        %v1506 = vmul.f32 %v481, %v1191
        %v1507 = vmul.f32 %v482, %v1191
        %v1508 = vmul.f32 %v483, %v1191
        %v1509 = vmul.f32 %v484, %v1191
        %v1510 = vmul.f32 %v485, %v1191
        %v1511 = vmul.f32 %v486, %v1191
        %v1512 = vmul.f32 %v487, %v1191
        %v1513 = vmul.f32 %v488, %v1191
        %v1514 = vmul.f32 %v489, %v1191
        %v1515 = vmul.f32 %v490, %v1191
        %v1516 = vmul.f32 %v491, %v1191
        %v1517 = vmul.f32 %v492, %v1191
        %v1518 = vmul.f32 %v493, %v1191
        %v1519 = vmul.f32 %v494, %v1191
        %v1520 = vmul.f32 %v495, %v1191
        %v1521 = vmul.f32 %v496, %v1191
        %v1522 = vmul.f32 %v497, %v1191
        %v1523 = vmul.f32 %v498, %v1191
        %v1524 = vmul.f32 %v499, %v1191
        %v1525 = vmul.f32 %v500, %v1191
        %v1526 = vmul.f32 %v501, %v1191
        %v1527 = vmul.f32 %v502, %v1191
        %v1528 = vmul.f32 %v503, %v1191
        %v1529 = vmul.f32 %v504, %v1191
        %v1530 = vmul.f32 %v505, %v1191
        %v1531 = vmul.f32 %v506, %v1191
        %v1532 = vmul.f32 %v507, %v1191
        %v1533 = vmul.f32 %v508, %v1191
        %v1534 = vmul.f32 %v509, %v1191
        %v1535 = vmul.f32 %v510, %v1191
        %v1536 = vmul.f32 %v511, %v1191
        %v1537 = vmul.f32 %v512, %v1191
        %v1538 = vmul.f32 %v513, %v1191
        %v1539 = vmul.f32 %v514, %v1191
        %v1540 = vmul.f32 %v515, %v1191
        %v1541 = vmul.f32 %v516, %v1191
        %v1542 = vmul.f32 %v517, %v1191
        %v1543 = vmul.f32 %v518, %v1191
        %v1544 = vmul.f32 %v519, %v1191
        %v1545 = vmul.f32 %v520, %v1191
        %v1546 = vmul.f32 %v521, %v1191
        %v1547 = vmul.f32 %v522, %v1191
        %v1548 = vmul.f32 %v523, %v1191
        %v1549 = vmul.f32 %v524, %v1191
        %v1550 = vmul.f32 %v525, %v1191
        %v1551 = vmul.f32 %v526, %v1191
        %v1552 = vmul.f32 %v527, %v1191
        %v1553 = vmul.f32 %v528, %v1191
        %v1554 = vmul.f32 %v529, %v1191
        %v1555 = vmul.f32 %v530, %v1191
        %v1556 = vmul.f32 %v531, %v1191
        %v1557 = vmul.f32 %v532, %v1191
        %v1558 = vmul.f32 %v533, %v1191
        %v1559 = vmul.f32 %v534, %v1191
        %v1560 = vmul.f32 %v535, %v1191
        %v1561 = vmul.f32 %v536, %v1191
        %v1562 = vmul.f32 %v537, %v1191
        %v1563 = vmul.f32 %v538, %v1191
        %v1564 = vmul.f32 %v539, %v1191
        %v1565 = vmul.f32 %v540, %v1191
        %v1566 = vmul.f32 %v541, %v1191
        %v1567 = vmul.f32 %v542, %v1191
        %v1568 = vmul.f32 %v543, %v1191
        %v1569 = vmul.f32 %v544, %v1191
        %v1570 = vmul.f32 %v545, %v1191
        %v1571 = vmul.f32 %v546, %v1191
        %v1572 = vmul.f32 %v547, %v1191
        %v1573 = vmul.f32 %v548, %v1191
        %v1574 = vmul.f32 %v549, %v1191
        %v1575 = vmul.f32 %v550, %v1191
        %v1576 = vmul.f32 %v551, %v1191
        %v1577 = vmul.f32 %v552, %v1191
        %v1578 = vmul.f32 %v553, %v1191
        %v1579 = vmul.f32 %v554, %v1191
        %v1580 = vmul.f32 %v555, %v1191
        %v1581 = vmul.f32 %v556, %v1191
        %v1582 = vmul.f32 %v557, %v1191
        %v1583 = vmul.f32 %v558, %v1191
        %v1584 = vmul.f32 %v559, %v1191
        %v1585 = vmul.f32 %v560, %v1191
        %v1586 = vmul.f32 %v561, %v1191
        %v1587 = vmul.f32 %v562, %v1191
        %v1588 = vmul.f32 %v563, %v1191
        %v1589 = vmul.f32 %v564, %v1191
        %v1590 = vmul.f32 %v565, %v1191
        %v1591 = vmul.f32 %v566, %v1191
        %v1592 = vmul.f32 %v567, %v1191
        %v1593 = vmul.f32 %v568, %v1191
        %v1594 = vmul.f32 %v569, %v1191
        %v1595 = vmul.f32 %v570, %v1191
        %v1596 = vmul.f32 %v571, %v1191
        %v1597 = vmul.f32 %v572, %v1191
        %v1598 = vmul.f32 %v573, %v1191
        %v1599 = vmul.f32 %v574, %v1191
        %v1600 = vmul.f32 %v575, %v1191
        %v1601 = vmul.f32 %v576, %v1191
        %v1602 = vmul.f32 %v577, %v1191
        %v1603 = vmul.f32 %v578, %v1191
        %v1604 = vmul.f32 %v579, %v1191
        %v1605 = vmul.f32 %v580, %v1191
        %v1606 = vmul.f32 %v581, %v1191
        %v1607 = vmul.f32 %v582, %v1191
        %v1608 = vmul.f32 %v583, %v1191
        %v1609 = vmul.f32 %v584, %v1191
        %v1610 = vmul.f32 %v585, %v1191
        %v1611 = vmul.f32 %v586, %v1191
        %v1612 = vmul.f32 %v587, %v1191
        %v1613 = vmul.f32 %v588, %v1191
        %v1614 = vmul.f32 %v589, %v1191
        %v1615 = vmul.f32 %v590, %v1191
        %v1616 = vmul.f32 %v591, %v1191
        %v1617 = vmul.f32 %v592, %v1191
        %v1618 = vmul.f32 %v593, %v1191
        %v1619 = vmul.f32 %v594, %v1191
        %v1620 = vmul.f32 %v595, %v1191
        %v1621 = vmul.f32 %v596, %v1191
        %v1622 = vmul.f32 %v597, %v1191
        %v1623 = vmul.f32 %v598, %v1191
        %v1624 = vmul.f32 %v599, %v1191
        %v1625 = vmul.f32 %v600, %v1191
        %v1626 = vmul.f32 %v601, %v1191
        %v1627 = vmul.f32 %v602, %v1191
        %v1628 = vmul.f32 %v603, %v1191
        %v1629 = vmul.f32 %v604, %v1191
        %v1630 = vmul.f32 %v605, %v1191
        %v1631 = vmul.f32 %v606, %v1191
        %v1632 = vmul.f32 %v607, %v1191
        %v1633 = vmul.f32 %v608, %v1191
        %v1634 = vmul.f32 %v609, %v1191
        %v1635 = vmul.f32 %v610, %v1191
        %v1636 = vmul.f32 %v611, %v1191
        %v1637 = vmul.f32 %v612, %v1191
        %v1638 = vmul.f32 %v613, %v1191
        %v1639 = vmul.f32 %v614, %v1191
        %v1640 = vmul.f32 %v615, %v1191
        %v1641 = vmul.f32 %v616, %v1191
        %v1642 = vmul.f32 %v617, %v1191
        %v1643 = vmul.f32 %v618, %v1191
        %v1644 = vmul.f32 %v619, %v1191
        %v1645 = vmul.f32 %v620, %v1191
        %v1646 = vmul.f32 %v621, %v1191
        %v1647 = vmul.f32 %v622, %v1191
        %v1648 = vmul.f32 %v623, %v1191
        %v1649 = vmul.f32 %v624, %v1191
        %v1650 = vmul.f32 %v625, %v1191
        %v1651 = vmul.f32 %v626, %v1191
        %v1652 = vmul.f32 %v627, %v1191
        %v1653 = vmul.f32 %v628, %v1191
        %v1654 = vmul.f32 %v629, %v1191
        %v1655 = vmul.f32 %v630, %v1191
        %v1656 = vmul.f32 %v631, %v1191
        %v1657 = vmul.f32 %v632, %v1191
        %v1658 = vmul.f32 %v633, %v1191
        %v1659 = vmul.f32 %v634, %v1191
        %v1660 = vmul.f32 %v635, %v1191
        %v1661 = vmul.f32 %v636, %v1191
        %v1662 = vmul.f32 %v637, %v1191
        %v1663 = vmul.f32 %v638, %v1191
        %v1664 = vmul.f32 %v639, %v1191
        %v1665 = vmul.f32 %v640, %v1191
        %v1666 = vmul.f32 %v641, %v1191
        %v1667 = vmul.f32 %v642, %v1191
        %v1668 = vmul.f32 %v643, %v1191
        %v1669 = vmul.f32 %v644, %v1191
        %v1670 = vmul.f32 %v645, %v1191
        %v1671 = vmul.f32 %v646, %v1191
        %v1672 = vmul.f32 %v647, %v1191
        %v1673 = vmul.f32 %v648, %v1191
        %v1674 = vmul.f32 %v649, %v1191
        %v1675 = vmul.f32 %v650, %v1191
        %v1676 = vmul.f32 %v651, %v1191
        %v1677 = vmul.f32 %v652, %v1191
        %v1678 = vmul.f32 %v653, %v1191
        %v1679 = vmul.f32 %v654, %v1191
        %v1680 = vmul.f32 %v655, %v1191
        %v1681 = vmul.f32 %v656, %v1191
        %v1682 = vmul.f32 %v657, %v1191
        %v1683 = vmul.f32 %v658, %v1191
        %v1684 = vmul.f32 %v659, %v1191
        %v1685 = vmul.f32 %v660, %v1191
        %v1686 = vmul.f32 %v661, %v1191
        %v1687 = vmul.f32 %v662, %v1191
        %v1688 = vmul.f32 %v663, %v1191
        %v1689 = vmul.f32 %v664, %v1191
        %v1690 = vmul.f32 %v665, %v1191
        %v1691 = vmul.f32 %v666, %v1191
        %v1692 = vmul.f32 %v667, %v1191
        %v1693 = vmul.f32 %v668, %v1191
        %v1694 = vmul.f32 %v669, %v1191
        %v1695 = vmul.f32 %v670, %v1191
        %v1696 = vmul.f32 %v671, %v1191
        %v1697 = vmul.f32 %v672, %v1191
        %v1698 = vmul.f32 %v673, %v1191
        %v1699 = vmul.f32 %v674, %v1191
        %v1700 = vmul.f32 %v675, %v1191
        %v1701 = vmul.f32 %v676, %v1191
        %v1702 = vmul.f32 %v677, %v1191
        %v1703 = vmul.f32 %v678, %v1191
        %v1704 = vmul.f32 %v679, %v1191
        %v1705 = vmul.f32 %v680, %v1191
        %v1706 = vmul.f32 %v681, %v1191
        %v1707 = vmul.f32 %v682, %v1191
        %v1708 = vmul.f32 %v683, %v1191
        %v1709 = vmul.f32 %v684, %v1191
        %v1710 = vmul.f32 %v685, %v1191
        %v1711 = vmul.f32 %v686, %v1191
        %v1712 = vmul.f32 %v687, %v1191
        %v1713 = vmul.f32 %v688, %v1191
        %v1714 = vmul.f32 %v689, %v1191
        %v1715 = vmul.f32 %v690, %v1191
        %v1716 = vmul.f32 %v691, %v1191
        %v1717 = vmul.f32 %v692, %v1191
        %v1718 = vmul.f32 %v693, %v1191
        %v1719 = vmul.f32 %v694, %v1191
        %v1720 = vmul.f32 %v695, %v1191
        %v1721 = vmul.f32 %v696, %v1191
        %v1722 = vmul.f32 %v697, %v1191
        %v1723 = vmul.f32 %v698, %v1191
        %v1724 = vmul.f32 %v699, %v1191
        %v1725 = vmul.f32 %v700, %v1191
        %v1726 = vmul.f32 %v701, %v1191
        %v1727 = vmul.f32 %v702, %v1191
        %v1728 = vmul.f32 %v703, %v1191
        %v1729 = vmul.f32 %v704, %v1191
        %v1730 = vmul.f32 %v705, %v1191
        %v1731 = vmul.f32 %v706, %v1191
        %v1732 = vmul.f32 %v707, %v1191
        %v1733 = vmul.f32 %v708, %v1191
        %v1734 = vmul.f32 %v709, %v1191
        %v1735 = vmul.f32 %v710, %v1191
        %v1736 = vmul.f32 %v711, %v1191
        %v1737 = vmul.f32 %v712, %v1191
        %v1738 = vmul.f32 %v713, %v1191
        %v1739 = vmul.f32 %v714, %v1191
        %v1740 = vmul.f32 %v715, %v1191
        %v1741 = vmul.f32 %v716, %v1191
        %v1742 = vmul.f32 %v717, %v1191
        %v1743 = vmul.f32 %v718, %v1191
        %v1744 = vmul.f32 %v719, %v1191
        %v1745 = vmul.f32 %v720, %v1191
        %v1746 = vmul.f32 %v721, %v1191
        %v1747 = vmul.f32 %v722, %v1191
        %v1748 = vmul.f32 %v723, %v1191
        %v1749 = vmul.f32 %v724, %v1191
        %v1750 = vmul.f32 %v725, %v1191
        %v1751 = vmul.f32 %v726, %v1191
        %v1752 = vmul.f32 %v727, %v1191
        %v1753 = vmul.f32 %v728, %v1191
        %v1754 = vmul.f32 %v729, %v1191
        %v1755 = vmul.f32 %v730, %v1191
        %v1756 = vmul.f32 %v731, %v1191
        %v1757 = vmul.f32 %v732, %v1191
        %v1758 = vmul.f32 %v733, %v1191
        %v1759 = vmul.f32 %v734, %v1191
        %v1760 = vmul.f32 %v735, %v1191
        %v1761 = vmul.f32 %v736, %v1191
        %v1762 = vmul.f32 %v737, %v1191
        %v1763 = vmul.f32 %v738, %v1191
        %v1764 = vmul.f32 %v739, %v1191
        %v1765 = vmul.f32 %v740, %v1191
        %v1766 = vmul.f32 %v741, %v1191
        %v1767 = vmul.f32 %v742, %v1191
        %v1768 = vmul.f32 %v743, %v1191
        %v1769 = vmul.f32 %v744, %v1191
        %v1770 = vmul.f32 %v745, %v1191
        %v1771 = vmul.f32 %v746, %v1191
        %v1772 = vmul.f32 %v747, %v1191
        %v1773 = vmul.f32 %v748, %v1191
        %v1774 = vmul.f32 %v749, %v1191
        %v1775 = vmul.f32 %v750, %v1191
        %v1776 = vmul.f32 %v751, %v1191
        %v1777 = vmul.f32 %v752, %v1191
        %v1778 = vmul.f32 %v753, %v1191
        %v1779 = vmul.f32 %v754, %v1191
        %v1780 = vmul.f32 %v755, %v1191
        %v1781 = vmul.f32 %v756, %v1191
        %v1782 = vmul.f32 %v757, %v1191
        %v1783 = vmul.f32 %v758, %v1191
        %v1784 = vmul.f32 %v759, %v1191
        %v1785 = vmul.f32 %v760, %v1191
        %v1786 = vmul.f32 %v761, %v1191
        %v1787 = vmul.f32 %v762, %v1191
        %v1788 = vmul.f32 %v763, %v1191
        %v1789 = vmul.f32 %v764, %v1191
        %v1790 = vmul.f32 %v765, %v1191
        %v1791 = vmul.f32 %v766, %v1191
        %v1792 = vmul.f32 %v767, %v1191
        %v1793 = vmul.f32 %v768, %v1191
        %v1794 = vmul.f32 %v769, %v1191
        %v1795 = vmul.f32 %v770, %v1191
        %v1796 = vmul.f32 %v771, %v1191
        %v1797 = vmul.f32 %v772, %v1191
        %v1798 = vmul.f32 %v773, %v1191
        %v1799 = vmul.f32 %v774, %v1191
        %v1800 = vmul.f32 %v775, %v1191
        %v1801 = vmul.f32 %v776, %v1191
        %v1802 = vmul.f32 %v777, %v1191
        %v1803 = vmul.f32 %v778, %v1191
        %v1804 = vmul.f32 %v779, %v1191
        %v1805 = vmul.f32 %v780, %v1191
        %v1806 = vmul.f32 %v781, %v1191
        %v1807 = vmul.f32 %v782, %v1191
        %v1808 = vmul.f32 %v783, %v1191
        %v1809 = vmul.f32 %v784, %v1191
        %v1810 = vmul.f32 %v785, %v1191
        %v1811 = vmul.f32 %v786, %v1191
        %v1812 = vmul.f32 %v787, %v1191
        %v1813 = vmul.f32 %v788, %v1191
        %v1814 = vmul.f32 %v789, %v1191
        %v1815 = vmul.f32 %v790, %v1191
        %v1816 = vmul.f32 %v791, %v1191
        %v1817 = vmul.f32 %v792, %v1191
        %v1818 = vmul.f32 %v793, %v1191
        %v1819 = vmul.f32 %v794, %v1191
        %v1820 = vmul.f32 %v795, %v1191
        %v1821 = vmul.f32 %v796, %v1191
        %v1822 = vmul.f32 %v797, %v1191
        %v1823 = vmul.f32 %v798, %v1191
        %v1824 = vmul.f32 %v799, %v1191
        %v1825 = vmul.f32 %v800, %v1191
        %v1826 = vmul.f32 %v801, %v1191
        %v1827 = vmul.f32 %v802, %v1191
        %v1828 = vmul.f32 %v803, %v1191
        %v1829 = vmul.f32 %v804, %v1191
        %v1830 = vmul.f32 %v805, %v1191
        %v1831 = vmul.f32 %v806, %v1191
        %v1832 = vmul.f32 %v807, %v1191
        %v1833 = vmul.f32 %v808, %v1191
        %v1834 = vmul.f32 %v809, %v1191
        %v1835 = vmul.f32 %v810, %v1191
        %v1836 = vmul.f32 %v811, %v1191
        %v1837 = vmul.f32 %v812, %v1191
        %v1838 = vmul.f32 %v813, %v1191
        %v1839 = vmul.f32 %v814, %v1191
        %v1840 = vmul.f32 %v815, %v1191
        %v1841 = vmul.f32 %v816, %v1191
        %v1842 = vmul.f32 %v817, %v1191
        %v1843 = vmul.f32 %v818, %v1191
        %v1844 = vmul.f32 %v819, %v1191
        %v1845 = vmul.f32 %v820, %v1191
        %v1846 = vmul.f32 %v821, %v1191
        %v1847 = vmul.f32 %v822, %v1191
        %v1848 = vmul.f32 %v823, %v1191
        %v1849 = vmul.f32 %v824, %v1191
        %v1850 = vmul.f32 %v825, %v1191
        %v1851 = vmul.f32 %v826, %v1191
        %v1852 = vmul.f32 %v827, %v1191
        %v1853 = vmul.f32 %v828, %v1191
        %v1854 = vmul.f32 %v829, %v1191
        %v1855 = vmul.f32 %v830, %v1191
        %v1856 = vmul.f32 %v831, %v1191
        %v1857 = vmul.f32 %v832, %v1191
        %v1858 = vmul.f32 %v833, %v1191
        %v1859 = vmul.f32 %v834, %v1191
        %v1860 = vmul.f32 %v835, %v1191
        %v1861 = vmul.f32 %v836, %v1191
        %v1862 = vmul.f32 %v837, %v1191
        %v1863 = vmul.f32 %v838, %v1191
        %v1864 = vmul.f32 %v839, %v1191
        %v1865 = vmul.f32 %v840, %v1191
        %v1866 = vmul.f32 %v841, %v1191
        %v1867 = vmul.f32 %v842, %v1191
        %v1868 = vmul.f32 %v843, %v1191
        %v1869 = vmul.f32 %v844, %v1191
        %v1870 = vmul.f32 %v845, %v1191
        %v1871 = vmul.f32 %v846, %v1191
        %v1872 = vmul.f32 %v847, %v1191
        %v1873 = vmul.f32 %v848, %v1191
        %v1874 = vmul.f32 %v849, %v1191
        %v1875 = vmul.f32 %v850, %v1191
        %v1876 = vmul.f32 %v851, %v1191
        %v1877 = vmul.f32 %v852, %v1191
        %v1878 = vmul.f32 %v853, %v1191
        %v1879 = vmul.f32 %v854, %v1191
        %v1880 = vmul.f32 %v855, %v1191
        %v1881 = vmul.f32 %v856, %v1191
        %v1882 = vmul.f32 %v857, %v1191
        %v1883 = vmul.f32 %v858, %v1191
        %v1884 = vmul.f32 %v859, %v1191
        %v1885 = vmul.f32 %v860, %v1191
        %v1886 = vmul.f32 %v861, %v1191
        %v1887 = vmul.f32 %v862, %v1191
        %v1888 = vmul.f32 %v863, %v1191
        %v1889 = vmul.f32 %v864, %v1191
        %v1890 = vmul.f32 %v865, %v1191
        %v1891 = vmul.f32 %v866, %v1191
        %v1892 = vmul.f32 %v867, %v1191
        %v1893 = vmul.f32 %v868, %v1191
        %v1894 = vmul.f32 %v869, %v1191
        %v1895 = vmul.f32 %v870, %v1191
        %v1896 = vmul.f32 %v871, %v1191
        %v1897 = vmul.f32 %v872, %v1191
        %v1898 = vmul.f32 %v873, %v1191
        %v1899 = vmul.f32 %v874, %v1191
        %v1900 = vmul.f32 %v875, %v1191
        %v1901 = vmul.f32 %v876, %v1191
        %v1902 = vmul.f32 %v877, %v1191
        %v1903 = vmul.f32 %v878, %v1191
        %v1904 = vmul.f32 %v879, %v1191
        %v1905 = vmul.f32 %v880, %v1191
        %v1906 = vmul.f32 %v881, %v1191
        %v1907 = vmul.f32 %v882, %v1191
        %v1908 = vmul.f32 %v883, %v1191
        %v1909 = vmul.f32 %v884, %v1191
        %v1910 = vmul.f32 %v885, %v1191
        %v1911 = vmul.f32 %v886, %v1191
        %v1912 = vmul.f32 %v887, %v1191
        %v1913 = vmul.f32 %v888, %v1191
        %v1914 = vmul.f32 %v889, %v1191
        %v1915 = vmul.f32 %v890, %v1191
        %v1916 = vmul.f32 %v891, %v1191
        %v1917 = vmul.f32 %v892, %v1191
        %v1918 = vmul.f32 %v893, %v1191
        %v1919 = vmul.f32 %v894, %v1191
        %v1920 = vmul.f32 %v895, %v1191
        %v1921 = vmul.f32 %v896, %v1191
        %v1922 = vmul.f32 %v897, %v1191
        %v1923 = vmul.f32 %v898, %v1191
        %v1924 = vmul.f32 %v899, %v1191
        %v1925 = vmul.f32 %v900, %v1191
        %v1926 = vmul.f32 %v901, %v1191
        %v1927 = vmul.f32 %v902, %v1191
        %v1928 = vmul.f32 %v903, %v1191
        %v1929 = vmul.f32 %v904, %v1191
        %v1930 = vmul.f32 %v905, %v1191
        %v1931 = vmul.f32 %v906, %v1191
        %v1932 = vmul.f32 %v907, %v1191
        %v1933 = vmul.f32 %v908, %v1191
        %v1934 = vmul.f32 %v909, %v1191
        %v1935 = vmul.f32 %v910, %v1191
        %v1936 = vmul.f32 %v911, %v1191
        %v1937 = vmul.f32 %v912, %v1191
        %v1938 = vmul.f32 %v913, %v1191
        %v1939 = vmul.f32 %v914, %v1191
        %v1940 = vmul.f32 %v915, %v1191
        %v1941 = vmul.f32 %v916, %v1191
        %v1942 = vmul.f32 %v917, %v1191
        %v1943 = vmul.f32 %v918, %v1191
        %v1944 = vmul.f32 %v919, %v1191
        %v1945 = vmul.f32 %v920, %v1191
        %v1946 = vmul.f32 %v921, %v1191
        %v1947 = vmul.f32 %v922, %v1191
        %v1948 = vmul.f32 %v923, %v1191
        %v1949 = vmul.f32 %v924, %v1191
        %v1950 = vmul.f32 %v925, %v1191
        %v1951 = vmul.f32 %v926, %v1191
        %v1952 = vmul.f32 %v927, %v1191
        %v1953 = vmul.f32 %v928, %v1191
        %v1954 = vmul.f32 %v929, %v1191
        %v1955 = vmul.f32 %v930, %v1191
        %v1956 = vmul.f32 %v931, %v1191
        %v1957 = vmul.f32 %v932, %v1191
        %v1958 = vmul.f32 %v933, %v1191
        %v1959 = vmul.f32 %v934, %v1191
        %v1960 = vmul.f32 %v935, %v1191
        %v1961 = vmul.f32 %v936, %v1191
        %v1962 = vmul.f32 %v937, %v1191
        %v1963 = vmul.f32 %v938, %v1191
        %v1964 = vmul.f32 %v939, %v1191
        %v1965 = vmul.f32 %v940, %v1191
        %v1966 = vmul.f32 %v941, %v1191
        %v1967 = vmul.f32 %v942, %v1191
        %v1968 = vmul.f32 %v943, %v1191
        %v1969 = vmul.f32 %v944, %v1191
        %v1970 = vmul.f32 %v945, %v1191
        %v1971 = vmul.f32 %v946, %v1191
        %v1972 = vmul.f32 %v947, %v1191
        %v1973 = vmul.f32 %v948, %v1191
        %v1974 = vmul.f32 %v949, %v1191
        %v1975 = vmul.f32 %v950, %v1191
        %v1976 = vmul.f32 %v951, %v1191
        %v1977 = vmul.f32 %v952, %v1191
        %v1978 = vmul.f32 %v953, %v1191
        %v1979 = vmul.f32 %v954, %v1191
        %v1980 = vmul.f32 %v955, %v1191
        %v1981 = vmul.f32 %v956, %v1191
        %v1982 = vmul.f32 %v957, %v1191
        %v1983 = vmul.f32 %v958, %v1191
        %v1984 = vmul.f32 %v959, %v1191
        %v1985 = vmul.f32 %v960, %v1191
        %v1986 = vmul.f32 %v961, %v1191
        %v1987 = vmul.f32 %v962, %v1191
        %v1988 = vmul.f32 %v963, %v1191
        %v1989 = vmul.f32 %v964, %v1191
        %v1990 = vmul.f32 %v965, %v1191
        %v1991 = vmul.f32 %v966, %v1191
        %v1992 = vmul.f32 %v967, %v1191
        %v1993 = vmul.f32 %v968, %v1191
        %v1994 = vmul.f32 %v969, %v1191
        %v1995 = vmul.f32 %v970, %v1191
        %v1996 = vmul.f32 %v971, %v1191
        %v1997 = vmul.f32 %v972, %v1191
        %v1998 = vmul.f32 %v973, %v1191
        %v1999 = vmul.f32 %v974, %v1191
        %v2000 = vmul.f32 %v975, %v1191
        %v2001 = vmul.f32 %v976, %v1191
        %v2002 = vmul.f32 %v977, %v1191
        %v2003 = vmul.f32 %v978, %v1191
        %v2004 = vmul.f32 %v979, %v1191
        %v2005 = vmul.f32 %v980, %v1191
        %v2006 = vmul.f32 %v981, %v1191
        %v2007 = vmul.f32 %v982, %v1191
        %v2008 = vmul.f32 %v983, %v1191
        %v2009 = vmul.f32 %v984, %v1191
        %v2010 = vmul.f32 %v985, %v1191
        %v2011 = vmul.f32 %v986, %v1191
        %v2012 = vmul.f32 %v987, %v1191
        %v2013 = vmul.f32 %v988, %v1191
        %v2014 = vmul.f32 %v989, %v1191
        %v2015 = vmul.f32 %v990, %v1191
        %v2016 = vmul.f32 %v991, %v1191
        %v2017 = vmul.f32 %v992, %v1191
        %v2018 = vmul.f32 %v993, %v1191
        %v2019 = vmul.f32 %v994, %v1191
        %v2020 = vmul.f32 %v995, %v1191
        %v2021 = vmul.f32 %v996, %v1191
        %v2022 = vmul.f32 %v997, %v1191
        %v2023 = vmul.f32 %v998, %v1191
        %v2024 = vmul.f32 %v999, %v1191
        %v2025 = vmul.f32 %v1000, %v1191
        %v2026 = vmul.f32 %v1001, %v1191
        %v2027 = vmul.f32 %v1002, %v1191
        %v2028 = vmul.f32 %v1003, %v1191
        %v2029 = vmul.f32 %v1004, %v1191
        %v2030 = vmul.f32 %v1005, %v1191
        %v2031 = vmul.f32 %v1006, %v1191
        %v2032 = vmul.f32 %v1007, %v1191
        %v2033 = vmul.f32 %v1008, %v1191
        %v2034 = vmul.f32 %v1009, %v1191
        %v2035 = vmul.f32 %v1010, %v1191
        %v2036 = vmul.f32 %v1011, %v1191
        %v2037 = vmul.f32 %v1012, %v1191
        %v2038 = vmul.f32 %v1013, %v1191
        %v2039 = vmul.f32 %v1014, %v1191
        %v2040 = vmul.f32 %v1015, %v1191
        %v2041 = vmul.f32 %v1016, %v1191
        %v2042 = vmul.f32 %v1017, %v1191
        %v2043 = vmul.f32 %v1018, %v1191
        %v2044 = vmul.f32 %v1019, %v1191
        %v2045 = vmul.f32 %v1020, %v1191
        %v2046 = vmul.f32 %v1021, %v1191
        %v2047 = vmul.f32 %v1022, %v1191
        %v2048 = vmul.f32 %v1023, %v1191
        %v2049 = vmul.f32 %v1024, %v1191
        %v2050 = vmul.f32 %v1025, %v1191
        %v2051 = vmul.f32 %v1026, %v1191
        %v2052 = vmul.f32 %v1027, %v1191
        %v2053 = vmul.f32 %v1028, %v1191
        %v2054 = vmul.f32 %v1029, %v1191
        %v2055 = vmul.f32 %v1030, %v1191
        %v2056 = vmul.f32 %v1031, %v1191
        %v2057 = vmul.f32 %v1032, %v1191
        %v2058 = vmul.f32 %v1033, %v1191
        %v2059 = vmul.f32 %v1034, %v1191
        %v2060 = vmul.f32 %v1035, %v1191
        %v2061 = vmul.f32 %v1036, %v1191
        %v2062 = vmul.f32 %v1037, %v1191
        %v2063 = vmul.f32 %v1038, %v1191
        %v2064 = vmul.f32 %v1039, %v1191
        %v2065 = vmul.f32 %v1040, %v1191
        %v2066 = vmul.f32 %v1041, %v1191
        %v2067 = vmul.f32 %v1042, %v1191
        %v2068 = vmul.f32 %v1043, %v1191
        %v2069 = vmul.f32 %v1044, %v1191
        %v2070 = vmul.f32 %v1045, %v1191
        %v2071 = vmul.f32 %v1046, %v1191
        %v2072 = vmul.f32 %v1047, %v1191
        %v2073 = vmul.f32 %v1048, %v1191
        %v2074 = vmul.f32 %v1049, %v1191
        %v2075 = vmul.f32 %v1050, %v1191
        %v2076 = vmul.f32 %v1051, %v1191
        %v2077 = vmul.f32 %v1052, %v1191
        %v2078 = vmul.f32 %v1053, %v1191
        %v2079 = vmul.f32 %v1054, %v1191
        %v2080 = vmul.f32 %v1055, %v1191
        %v2081 = vmul.f32 %v1056, %v1191
        %v2082 = vmul.f32 %v1057, %v1191
        %v2083 = vmul.f32 %v1058, %v1191
        %v2084 = vmul.f32 %v1059, %v1191
        %v2085 = vmul.f32 %v1060, %v1191
        %v2086 = vmul.f32 %v1061, %v1191
        %v2087 = vmul.f32 %v1062, %v1191
        %v2088 = vmul.f32 %v1063, %v1191
        %v2089 = vmul.f32 %v1064, %v1191
        %v2090 = vmul.f32 %v1065, %v1191
        %v2091 = vmul.f32 %v1066, %v1191
        %v2092 = vmul.f32 %v1067, %v1191
        %v2093 = vmul.f32 %v1068, %v1191
        %v2094 = vmul.f32 %v1069, %v1191
        %v2095 = vmul.f32 %v1070, %v1191
        %v2096 = vmul.f32 %v1071, %v1191
        %v2097 = vmul.f32 %v1072, %v1191
        %v2098 = vmul.f32 %v1073, %v1191
        %v2099 = vmul.f32 %v1074, %v1191
        %v2100 = vmul.f32 %v1075, %v1191
        %v2101 = vmul.f32 %v1076, %v1191
        %v2102 = vmul.f32 %v1077, %v1191
        %v2103 = vmul.f32 %v1078, %v1191
        %v2104 = vmul.f32 %v1079, %v1191
        %v2105 = vmul.f32 %v1080, %v1191
        %v2106 = vmul.f32 %v1081, %v1191
        %v2107 = vmul.f32 %v1082, %v1191
        %v2108 = vmul.f32 %v1083, %v1191
        %v2109 = vmul.f32 %v1084, %v1191
        %v2110 = vmul.f32 %v1085, %v1191
        %v2111 = vmul.f32 %v1086, %v1191
        %v2112 = vmul.f32 %v1087, %v1191
        %v2113 = vmul.f32 %v1088, %v1191
        %v2114 = vmul.f32 %v1089, %v1191
        %v2115 = vmul.f32 %v1090, %v1191
        %v2116 = vmul.f32 %v1091, %v1191
        %v2117 = vmul.f32 %v1092, %v1191
        %v2118 = vmul.f32 %v1093, %v1191
        %v2119 = vmul.f32 %v1094, %v1191
        %v2120 = vmul.f32 %v1095, %v1191
        %v2121 = vmul.f32 %v1096, %v1191
        %v2122 = vmul.f32 %v1097, %v1191
        %v2123 = vmul.f32 %v1098, %v1191
        %v2124 = vmul.f32 %v1099, %v1191
        %v2125 = vmul.f32 %v1100, %v1191
        %v2126 = vmul.f32 %v1101, %v1191
        %v2127 = vmul.f32 %v1102, %v1191
        %v2128 = vmul.f32 %v1103, %v1191
        %v2129 = vmul.f32 %v1104, %v1191
        %v2130 = vmul.f32 %v1105, %v1191
        %v2131 = vmul.f32 %v1106, %v1191
        %v2132 = vmul.f32 %v1107, %v1191
        %v2133 = vmul.f32 %v1108, %v1191
        %v2134 = vmul.f32 %v1109, %v1191
        %v2135 = vmul.f32 %v1110, %v1191
        %v2136 = vmul.f32 %v1111, %v1191
        %v2137 = vmul.f32 %v1112, %v1191
        %v2138 = vmul.f32 %v1113, %v1191
        %v2139 = vmul.f32 %v1114, %v1191
        %v2140 = vmul.f32 %v1115, %v1191
        %v2141 = vmul.f32 %v1116, %v1191
        %v2142 = vmul.f32 %v1117, %v1191
        %v2143 = vmul.f32 %v1118, %v1191
        %v2144 = vmul.f32 %v1119, %v1191
        %v2145 = vmul.f32 %v1120, %v1191
        %v2146 = vmul.f32 %v1121, %v1191
        %v2147 = vmul.f32 %v1122, %v1191
        %v2148 = vmul.f32 %v1123, %v1191
        %v2149 = vmul.f32 %v1124, %v1191
        %v2150 = vmul.f32 %v1125, %v1191
        %v2151 = vmul.f32 %v1126, %v1191
        %v2152 = vmul.f32 %v1127, %v1191
        %v2153 = vmul.f32 %v1128, %v1191
        %v2154 = vmul.f32 %v1129, %v1191
        %v2155 = vmul.f32 %v1130, %v1191
        %v2156 = vmul.f32 %v1131, %v1191
        %v2157 = vmul.f32 %v1132, %v1191
        %v2158 = vmul.f32 %v1133, %v1191
        %v2159 = vmul.f32 %v1134, %v1191
        %v2160 = vmul.f32 %v1135, %v1191
        %v2161 = vmul.f32 %v1136, %v1191
        %v2162 = vmul.f32 %v1137, %v1191
        %v2163 = vmul.f32 %v1138, %v1191
        %v2164 = vmul.f32 %v1139, %v1191
        %v2165 = vmul.f32 %v1140, %v1191
        %v2166 = vmul.f32 %v1141, %v1191
        %v2167 = vmul.f32 %v1142, %v1191
        %v2168 = vmul.f32 %v1143, %v1191
        %v2169 = vmul.f32 %v1144, %v1191
        %v2170 = vmul.f32 %v1145, %v1191
        %v2171 = vmul.f32 %v1146, %v1191
        %v2172 = vmul.f32 %v1147, %v1191
        %v2173 = vmul.f32 %v1148, %v1191
        %v2174 = vmul.f32 %v1149, %v1191
        %v2175 = vmul.f32 %v1150, %v1191
        %v2176 = vmul.f32 %v1151, %v1191
        %v2177 = vmul.f32 %v1152, %v1191
        %v2178 = vmul.f32 %v1153, %v1191
        %v2179 = vmul.f32 %v1154, %v1191
        %v2180 = vmul.f32 %v1155, %v1191
        %v2181 = vmul.f32 %v1156, %v1191
        %v2182 = vmul.f32 %v1157, %v1191
        %v2183 = vmul.f32 %v1158, %v1191
        %v2184 = vmul.f32 %v1159, %v1191
        %v2185 = vmul.f32 %v1160, %v1191
        %v2186 = vmul.f32 %v1161, %v1191
        %v2187 = vmul.f32 %v1162, %v1191
        %v2188 = vmul.f32 %v1163, %v1191
        %v2189 = vmul.f32 %v1164, %v1191
        %v2190 = vmul.f32 %v1165, %v1191
        %v2191 = vmul.f32 %v1166, %v1191
        %v2192 = vmul.f32 %v1167, %v1191
        %v2193 = vmul.f32 %v1168, %v1191
        %v2194 = vmul.f32 %v1169, %v1191
        %v2195 = vmul.f32 %v1170, %v1191
        %v2196 = vmul.f32 %v1171, %v1191
        %v2197 = vmul.f32 %v1172, %v1191
        %v2198 = vmul.f32 %v1173, %v1191
        %v2199 = vmul.f32 %v1174, %v1191
        %v2200 = vmul.f32 %v1175, %v1191
        %v2201 = vmul.f32 %v1176, %v1191
        %v2202 = vmul.f32 %v1177, %v1191
        %v2203 = vmul.f32 %v1178, %v1191
        %v2204 = vmul.f32 %v1179, %v1191
        %v2205 = vmul.f32 %v1180, %v1191
        %v2206 = vmul.f32 %v1181, %v1191
        %v2207 = vmul.f32 %v1182, %v1191
        %v2208 = vmul.f32 %v1183, %v1191
        %v2209 = vmul.f32 %v1184, %v1191
        %v2210 = vmul.f32 %v1185, %v1191
        %v2211 = vmul.f32 %v1186, %v1191
        %v2212 = vmul.f32 %v1187, %v1191
        %v2213 = vmul.f32 %v1188, %v1191
        %v2214 = vmul.f32 %v1189, %v1191
        %v2215 = vmul.f32 %v1190, %v1191
        %2216 = vst [vmem:[%s162] sm:$0xff] %v1192
        %2217 = vst [vmem:[%s162 + $0x8] sm:$0xff] %v1193
        %2218 = vst [vmem:[%s162 + $0x10] sm:$0xff] %v1194
        %2219 = vst [vmem:[%s162 + $0x18] sm:$0xff] %v1195
        %2220 = vst [vmem:[%s162 + $0x20] sm:$0xff] %v1196
        %2221 = vst [vmem:[%s162 + $0x28] sm:$0xff] %v1197
        %2222 = vst [vmem:[%s162 + $0x30] sm:$0xff] %v1198
        %2223 = vst [vmem:[%s162 + $0x38] sm:$0xff] %v1199
        %2224 = vst [vmem:[%s162 + $0x40] sm:$0xff] %v1200
        %2225 = vst [vmem:[%s162 + $0x48] sm:$0xff] %v1201
        %2226 = vst [vmem:[%s162 + $0x50] sm:$0xff] %v1202
        %2227 = vst [vmem:[%s162 + $0x58] sm:$0xff] %v1203
        %2228 = vst [vmem:[%s162 + $0x60] sm:$0xff] %v1204
        %2229 = vst [vmem:[%s162 + $0x68] sm:$0xff] %v1205
        %2230 = vst [vmem:[%s162 + $0x70] sm:$0xff] %v1206
        %2231 = vst [vmem:[%s162 + $0x78] sm:$0xff] %v1207
        %2232 = vst [vmem:[%s162 + $0x80] sm:$0xff] %v1208
        %2233 = vst [vmem:[%s162 + $0x88] sm:$0xff] %v1209
        %2234 = vst [vmem:[%s162 + $0x90] sm:$0xff] %v1210
        %2235 = vst [vmem:[%s162 + $0x98] sm:$0xff] %v1211
        %2236 = vst [vmem:[%s162 + $0xa0] sm:$0xff] %v1212
        %2237 = vst [vmem:[%s162 + $0xa8] sm:$0xff] %v1213
        %2238 = vst [vmem:[%s162 + $0xb0] sm:$0xff] %v1214
        %2239 = vst [vmem:[%s162 + $0xb8] sm:$0xff] %v1215
        %2240 = vst [vmem:[%s162 + $0xc0] sm:$0xff] %v1216
        %2241 = vst [vmem:[%s162 + $0xc8] sm:$0xff] %v1217
        %2242 = vst [vmem:[%s162 + $0xd0] sm:$0xff] %v1218
        %2243 = vst [vmem:[%s162 + $0xd8] sm:$0xff] %v1219
        %2244 = vst [vmem:[%s162 + $0xe0] sm:$0xff] %v1220
        %2245 = vst [vmem:[%s162 + $0xe8] sm:$0xff] %v1221
        %2246 = vst [vmem:[%s162 + $0xf0] sm:$0xff] %v1222
        %2247 = vst [vmem:[%s162 + $0xf8] sm:$0xff] %v1223
        %2248 = vst [vmem:[%s162 + $0x100] sm:$0xff] %v1224
        %2249 = vst [vmem:[%s162 + $0x108] sm:$0xff] %v1225
        %2250 = vst [vmem:[%s162 + $0x110] sm:$0xff] %v1226
        %2251 = vst [vmem:[%s162 + $0x118] sm:$0xff] %v1227
        %2252 = vst [vmem:[%s162 + $0x120] sm:$0xff] %v1228
        %2253 = vst [vmem:[%s162 + $0x128] sm:$0xff] %v1229
        %2254 = vst [vmem:[%s162 + $0x130] sm:$0xff] %v1230
        %2255 = vst [vmem:[%s162 + $0x138] sm:$0xff] %v1231
        %2256 = vst [vmem:[%s162 + $0x140] sm:$0xff] %v1232
        %2257 = vst [vmem:[%s162 + $0x148] sm:$0xff] %v1233
        %2258 = vst [vmem:[%s162 + $0x150] sm:$0xff] %v1234
        %2259 = vst [vmem:[%s162 + $0x158] sm:$0xff] %v1235
        %2260 = vst [vmem:[%s162 + $0x160] sm:$0xff] %v1236
        %2261 = vst [vmem:[%s162 + $0x168] sm:$0xff] %v1237
        %2262 = vst [vmem:[%s162 + $0x170] sm:$0xff] %v1238
        %2263 = vst [vmem:[%s162 + $0x178] sm:$0xff] %v1239
        %2264 = vst [vmem:[%s162 + $0x180] sm:$0xff] %v1240
        %2265 = vst [vmem:[%s162 + $0x188] sm:$0xff] %v1241
        %2266 = vst [vmem:[%s162 + $0x190] sm:$0xff] %v1242
        %2267 = vst [vmem:[%s162 + $0x198] sm:$0xff] %v1243
        %2268 = vst [vmem:[%s162 + $0x1a0] sm:$0xff] %v1244
        %2269 = vst [vmem:[%s162 + $0x1a8] sm:$0xff] %v1245
        %2270 = vst [vmem:[%s162 + $0x1b0] sm:$0xff] %v1246
        %2271 = vst [vmem:[%s162 + $0x1b8] sm:$0xff] %v1247
        %2272 = vst [vmem:[%s162 + $0x1c0] sm:$0xff] %v1248
        %2273 = vst [vmem:[%s162 + $0x1c8] sm:$0xff] %v1249
        %2274 = vst [vmem:[%s162 + $0x1d0] sm:$0xff] %v1250
        %2275 = vst [vmem:[%s162 + $0x1d8] sm:$0xff] %v1251
        %2276 = vst [vmem:[%s162 + $0x1e0] sm:$0xff] %v1252
        %2277 = vst [vmem:[%s162 + $0x1e8] sm:$0xff] %v1253
        %2278 = vst [vmem:[%s162 + $0x1f0] sm:$0xff] %v1254
        %2279 = vst [vmem:[%s162 + $0x1f8] sm:$0xff] %v1255
        %2280 = vst [vmem:[%s162 + $0x200] sm:$0xff] %v1256
        %2281 = vst [vmem:[%s162 + $0x208] sm:$0xff] %v1257
        %2282 = vst [vmem:[%s162 + $0x210] sm:$0xff] %v1258
        %2283 = vst [vmem:[%s162 + $0x218] sm:$0xff] %v1259
        %2284 = vst [vmem:[%s162 + $0x220] sm:$0xff] %v1260
        %2285 = vst [vmem:[%s162 + $0x228] sm:$0xff] %v1261
        %2286 = vst [vmem:[%s162 + $0x230] sm:$0xff] %v1262
        %2287 = vst [vmem:[%s162 + $0x238] sm:$0xff] %v1263
        %2288 = vst [vmem:[%s162 + $0x240] sm:$0xff] %v1264
        %2289 = vst [vmem:[%s162 + $0x248] sm:$0xff] %v1265
        %2290 = vst [vmem:[%s162 + $0x250] sm:$0xff] %v1266
        %2291 = vst [vmem:[%s162 + $0x258] sm:$0xff] %v1267
        %2292 = vst [vmem:[%s162 + $0x260] sm:$0xff] %v1268
        %2293 = vst [vmem:[%s162 + $0x268] sm:$0xff] %v1269
        %2294 = vst [vmem:[%s162 + $0x270] sm:$0xff] %v1270
        %2295 = vst [vmem:[%s162 + $0x278] sm:$0xff] %v1271
        %2296 = vst [vmem:[%s162 + $0x280] sm:$0xff] %v1272
        %2297 = vst [vmem:[%s162 + $0x288] sm:$0xff] %v1273
        %2298 = vst [vmem:[%s162 + $0x290] sm:$0xff] %v1274
        %2299 = vst [vmem:[%s162 + $0x298] sm:$0xff] %v1275
        %2300 = vst [vmem:[%s162 + $0x2a0] sm:$0xff] %v1276
        %2301 = vst [vmem:[%s162 + $0x2a8] sm:$0xff] %v1277
        %2302 = vst [vmem:[%s162 + $0x2b0] sm:$0xff] %v1278
        %2303 = vst [vmem:[%s162 + $0x2b8] sm:$0xff] %v1279
        %2304 = vst [vmem:[%s162 + $0x2c0] sm:$0xff] %v1280
        %2305 = vst [vmem:[%s162 + $0x2c8] sm:$0xff] %v1281
        %2306 = vst [vmem:[%s162 + $0x2d0] sm:$0xff] %v1282
        %2307 = vst [vmem:[%s162 + $0x2d8] sm:$0xff] %v1283
        %2308 = vst [vmem:[%s162 + $0x2e0] sm:$0xff] %v1284
        %2309 = vst [vmem:[%s162 + $0x2e8] sm:$0xff] %v1285
        %2310 = vst [vmem:[%s162 + $0x2f0] sm:$0xff] %v1286
        %2311 = vst [vmem:[%s162 + $0x2f8] sm:$0xff] %v1287
        %2312 = vst [vmem:[%s162 + $0x300] sm:$0xff] %v1288
        %2313 = vst [vmem:[%s162 + $0x308] sm:$0xff] %v1289
        %2314 = vst [vmem:[%s162 + $0x310] sm:$0xff] %v1290
        %2315 = vst [vmem:[%s162 + $0x318] sm:$0xff] %v1291
        %2316 = vst [vmem:[%s162 + $0x320] sm:$0xff] %v1292
        %2317 = vst [vmem:[%s162 + $0x328] sm:$0xff] %v1293
        %2318 = vst [vmem:[%s162 + $0x330] sm:$0xff] %v1294
        %2319 = vst [vmem:[%s162 + $0x338] sm:$0xff] %v1295
        %2320 = vst [vmem:[%s162 + $0x340] sm:$0xff] %v1296
        %2321 = vst [vmem:[%s162 + $0x348] sm:$0xff] %v1297
        %2322 = vst [vmem:[%s162 + $0x350] sm:$0xff] %v1298
        %2323 = vst [vmem:[%s162 + $0x358] sm:$0xff] %v1299
        %2324 = vst [vmem:[%s162 + $0x360] sm:$0xff] %v1300
        %2325 = vst [vmem:[%s162 + $0x368] sm:$0xff] %v1301
        %2326 = vst [vmem:[%s162 + $0x370] sm:$0xff] %v1302
        %2327 = vst [vmem:[%s162 + $0x378] sm:$0xff] %v1303
        %2328 = vst [vmem:[%s162 + $0x380] sm:$0xff] %v1304
        %2329 = vst [vmem:[%s162 + $0x388] sm:$0xff] %v1305
        %2330 = vst [vmem:[%s162 + $0x390] sm:$0xff] %v1306
        %2331 = vst [vmem:[%s162 + $0x398] sm:$0xff] %v1307
        %2332 = vst [vmem:[%s162 + $0x3a0] sm:$0xff] %v1308
        %2333 = vst [vmem:[%s162 + $0x3a8] sm:$0xff] %v1309
        %2334 = vst [vmem:[%s162 + $0x3b0] sm:$0xff] %v1310
        %2335 = vst [vmem:[%s162 + $0x3b8] sm:$0xff] %v1311
        %2336 = vst [vmem:[%s162 + $0x3c0] sm:$0xff] %v1312
        %2337 = vst [vmem:[%s162 + $0x3c8] sm:$0xff] %v1313
        %2338 = vst [vmem:[%s162 + $0x3d0] sm:$0xff] %v1314
        %2339 = vst [vmem:[%s162 + $0x3d8] sm:$0xff] %v1315
        %2340 = vst [vmem:[%s162 + $0x3e0] sm:$0xff] %v1316
        %2341 = vst [vmem:[%s162 + $0x3e8] sm:$0xff] %v1317
        %2342 = vst [vmem:[%s162 + $0x3f0] sm:$0xff] %v1318
        %2343 = vst [vmem:[%s162 + $0x3f8] sm:$0xff] %v1319
        %2344 = vst [vmem:[%s162 + $0x400] sm:$0xff] %v1320
        %2345 = vst [vmem:[%s162 + $0x408] sm:$0xff] %v1321
        %2346 = vst [vmem:[%s162 + $0x410] sm:$0xff] %v1322
        %2347 = vst [vmem:[%s162 + $0x418] sm:$0xff] %v1323
        %2348 = vst [vmem:[%s162 + $0x420] sm:$0xff] %v1324
        %2349 = vst [vmem:[%s162 + $0x428] sm:$0xff] %v1325
        %2350 = vst [vmem:[%s162 + $0x430] sm:$0xff] %v1326
        %2351 = vst [vmem:[%s162 + $0x438] sm:$0xff] %v1327
        %2352 = vst [vmem:[%s162 + $0x440] sm:$0xff] %v1328
        %2353 = vst [vmem:[%s162 + $0x448] sm:$0xff] %v1329
        %2354 = vst [vmem:[%s162 + $0x450] sm:$0xff] %v1330
        %2355 = vst [vmem:[%s162 + $0x458] sm:$0xff] %v1331
        %2356 = vst [vmem:[%s162 + $0x460] sm:$0xff] %v1332
        %2357 = vst [vmem:[%s162 + $0x468] sm:$0xff] %v1333
        %2358 = vst [vmem:[%s162 + $0x470] sm:$0xff] %v1334
        %2359 = vst [vmem:[%s162 + $0x478] sm:$0xff] %v1335
        %2360 = vst [vmem:[%s162 + $0x480] sm:$0xff] %v1336
        %2361 = vst [vmem:[%s162 + $0x488] sm:$0xff] %v1337
        %2362 = vst [vmem:[%s162 + $0x490] sm:$0xff] %v1338
        %2363 = vst [vmem:[%s162 + $0x498] sm:$0xff] %v1339
        %2364 = vst [vmem:[%s162 + $0x4a0] sm:$0xff] %v1340
        %2365 = vst [vmem:[%s162 + $0x4a8] sm:$0xff] %v1341
        %2366 = vst [vmem:[%s162 + $0x4b0] sm:$0xff] %v1342
        %2367 = vst [vmem:[%s162 + $0x4b8] sm:$0xff] %v1343
        %2368 = vst [vmem:[%s162 + $0x4c0] sm:$0xff] %v1344
        %2369 = vst [vmem:[%s162 + $0x4c8] sm:$0xff] %v1345
        %2370 = vst [vmem:[%s162 + $0x4d0] sm:$0xff] %v1346
        %2371 = vst [vmem:[%s162 + $0x4d8] sm:$0xff] %v1347
        %2372 = vst [vmem:[%s162 + $0x4e0] sm:$0xff] %v1348
        %2373 = vst [vmem:[%s162 + $0x4e8] sm:$0xff] %v1349
        %2374 = vst [vmem:[%s162 + $0x4f0] sm:$0xff] %v1350
        %2375 = vst [vmem:[%s162 + $0x4f8] sm:$0xff] %v1351
        %2376 = vst [vmem:[%s162 + $0x500] sm:$0xff] %v1352
        %2377 = vst [vmem:[%s162 + $0x508] sm:$0xff] %v1353
        %2378 = vst [vmem:[%s162 + $0x510] sm:$0xff] %v1354
        %2379 = vst [vmem:[%s162 + $0x518] sm:$0xff] %v1355
        %2380 = vst [vmem:[%s162 + $0x520] sm:$0xff] %v1356
        %2381 = vst [vmem:[%s162 + $0x528] sm:$0xff] %v1357
        %2382 = vst [vmem:[%s162 + $0x530] sm:$0xff] %v1358
        %2383 = vst [vmem:[%s162 + $0x538] sm:$0xff] %v1359
        %2384 = vst [vmem:[%s162 + $0x540] sm:$0xff] %v1360
        %2385 = vst [vmem:[%s162 + $0x548] sm:$0xff] %v1361
        %2386 = vst [vmem:[%s162 + $0x550] sm:$0xff] %v1362
        %2387 = vst [vmem:[%s162 + $0x558] sm:$0xff] %v1363
        %2388 = vst [vmem:[%s162 + $0x560] sm:$0xff] %v1364
        %2389 = vst [vmem:[%s162 + $0x568] sm:$0xff] %v1365
        %2390 = vst [vmem:[%s162 + $0x570] sm:$0xff] %v1366
        %2391 = vst [vmem:[%s162 + $0x578] sm:$0xff] %v1367
        %2392 = vst [vmem:[%s162 + $0x580] sm:$0xff] %v1368
        %2393 = vst [vmem:[%s162 + $0x588] sm:$0xff] %v1369
        %2394 = vst [vmem:[%s162 + $0x590] sm:$0xff] %v1370
        %2395 = vst [vmem:[%s162 + $0x598] sm:$0xff] %v1371
        %2396 = vst [vmem:[%s162 + $0x5a0] sm:$0xff] %v1372
        %2397 = vst [vmem:[%s162 + $0x5a8] sm:$0xff] %v1373
        %2398 = vst [vmem:[%s162 + $0x5b0] sm:$0xff] %v1374
        %2399 = vst [vmem:[%s162 + $0x5b8] sm:$0xff] %v1375
        %2400 = vst [vmem:[%s162 + $0x5c0] sm:$0xff] %v1376
        %2401 = vst [vmem:[%s162 + $0x5c8] sm:$0xff] %v1377
        %2402 = vst [vmem:[%s162 + $0x5d0] sm:$0xff] %v1378
        %2403 = vst [vmem:[%s162 + $0x5d8] sm:$0xff] %v1379
        %2404 = vst [vmem:[%s162 + $0x5e0] sm:$0xff] %v1380
        %2405 = vst [vmem:[%s162 + $0x5e8] sm:$0xff] %v1381
        %2406 = vst [vmem:[%s162 + $0x5f0] sm:$0xff] %v1382
        %2407 = vst [vmem:[%s162 + $0x5f8] sm:$0xff] %v1383
        %2408 = vst [vmem:[%s162 + $0x600] sm:$0xff] %v1384
        %2409 = vst [vmem:[%s162 + $0x608] sm:$0xff] %v1385
        %2410 = vst [vmem:[%s162 + $0x610] sm:$0xff] %v1386
        %2411 = vst [vmem:[%s162 + $0x618] sm:$0xff] %v1387
        %2412 = vst [vmem:[%s162 + $0x620] sm:$0xff] %v1388
        %2413 = vst [vmem:[%s162 + $0x628] sm:$0xff] %v1389
        %2414 = vst [vmem:[%s162 + $0x630] sm:$0xff] %v1390
        %2415 = vst [vmem:[%s162 + $0x638] sm:$0xff] %v1391
        %2416 = vst [vmem:[%s162 + $0x640] sm:$0xff] %v1392
        %2417 = vst [vmem:[%s162 + $0x648] sm:$0xff] %v1393
        %2418 = vst [vmem:[%s162 + $0x650] sm:$0xff] %v1394
        %2419 = vst [vmem:[%s162 + $0x658] sm:$0xff] %v1395
        %2420 = vst [vmem:[%s162 + $0x660] sm:$0xff] %v1396
        %2421 = vst [vmem:[%s162 + $0x668] sm:$0xff] %v1397
        %2422 = vst [vmem:[%s162 + $0x670] sm:$0xff] %v1398
        %2423 = vst [vmem:[%s162 + $0x678] sm:$0xff] %v1399
        %2424 = vst [vmem:[%s162 + $0x680] sm:$0xff] %v1400
        %2425 = vst [vmem:[%s162 + $0x688] sm:$0xff] %v1401
        %2426 = vst [vmem:[%s162 + $0x690] sm:$0xff] %v1402
        %2427 = vst [vmem:[%s162 + $0x698] sm:$0xff] %v1403
        %2428 = vst [vmem:[%s162 + $0x6a0] sm:$0xff] %v1404
        %2429 = vst [vmem:[%s162 + $0x6a8] sm:$0xff] %v1405
        %2430 = vst [vmem:[%s162 + $0x6b0] sm:$0xff] %v1406
        %2431 = vst [vmem:[%s162 + $0x6b8] sm:$0xff] %v1407
        %2432 = vst [vmem:[%s162 + $0x6c0] sm:$0xff] %v1408
        %2433 = vst [vmem:[%s162 + $0x6c8] sm:$0xff] %v1409
        %2434 = vst [vmem:[%s162 + $0x6d0] sm:$0xff] %v1410
        %2435 = vst [vmem:[%s162 + $0x6d8] sm:$0xff] %v1411
        %2436 = vst [vmem:[%s162 + $0x6e0] sm:$0xff] %v1412
        %2437 = vst [vmem:[%s162 + $0x6e8] sm:$0xff] %v1413
        %2438 = vst [vmem:[%s162 + $0x6f0] sm:$0xff] %v1414
        %2439 = vst [vmem:[%s162 + $0x6f8] sm:$0xff] %v1415
        %2440 = vst [vmem:[%s162 + $0x700] sm:$0xff] %v1416
        %2441 = vst [vmem:[%s162 + $0x708] sm:$0xff] %v1417
        %2442 = vst [vmem:[%s162 + $0x710] sm:$0xff] %v1418
        %2443 = vst [vmem:[%s162 + $0x718] sm:$0xff] %v1419
        %2444 = vst [vmem:[%s162 + $0x720] sm:$0xff] %v1420
        %2445 = vst [vmem:[%s162 + $0x728] sm:$0xff] %v1421
        %2446 = vst [vmem:[%s162 + $0x730] sm:$0xff] %v1422
        %2447 = vst [vmem:[%s162 + $0x738] sm:$0xff] %v1423
        %2448 = vst [vmem:[%s162 + $0x740] sm:$0xff] %v1424
        %2449 = vst [vmem:[%s162 + $0x748] sm:$0xff] %v1425
        %2450 = vst [vmem:[%s162 + $0x750] sm:$0xff] %v1426
        %2451 = vst [vmem:[%s162 + $0x758] sm:$0xff] %v1427
        %2452 = vst [vmem:[%s162 + $0x760] sm:$0xff] %v1428
        %2453 = vst [vmem:[%s162 + $0x768] sm:$0xff] %v1429
        %2454 = vst [vmem:[%s162 + $0x770] sm:$0xff] %v1430
        %2455 = vst [vmem:[%s162 + $0x778] sm:$0xff] %v1431
        %2456 = vst [vmem:[%s162 + $0x780] sm:$0xff] %v1432
        %2457 = vst [vmem:[%s162 + $0x788] sm:$0xff] %v1433
        %2458 = vst [vmem:[%s162 + $0x790] sm:$0xff] %v1434
        %2459 = vst [vmem:[%s162 + $0x798] sm:$0xff] %v1435
        %2460 = vst [vmem:[%s162 + $0x7a0] sm:$0xff] %v1436
        %2461 = vst [vmem:[%s162 + $0x7a8] sm:$0xff] %v1437
        %2462 = vst [vmem:[%s162 + $0x7b0] sm:$0xff] %v1438
        %2463 = vst [vmem:[%s162 + $0x7b8] sm:$0xff] %v1439
        %2464 = vst [vmem:[%s162 + $0x7c0] sm:$0xff] %v1440
        %2465 = vst [vmem:[%s162 + $0x7c8] sm:$0xff] %v1441
        %2466 = vst [vmem:[%s162 + $0x7d0] sm:$0xff] %v1442
        %2467 = vst [vmem:[%s162 + $0x7d8] sm:$0xff] %v1443
        %2468 = vst [vmem:[%s162 + $0x7e0] sm:$0xff] %v1444
        %2469 = vst [vmem:[%s162 + $0x7e8] sm:$0xff] %v1445
        %2470 = vst [vmem:[%s162 + $0x7f0] sm:$0xff] %v1446
        %2471 = vst [vmem:[%s162 + $0x7f8] sm:$0xff] %v1447
        %2472 = vst [vmem:[%s162 + $0x800] sm:$0xff] %v1448
        %2473 = vst [vmem:[%s162 + $0x808] sm:$0xff] %v1449
        %2474 = vst [vmem:[%s162 + $0x810] sm:$0xff] %v1450
        %2475 = vst [vmem:[%s162 + $0x818] sm:$0xff] %v1451
        %2476 = vst [vmem:[%s162 + $0x820] sm:$0xff] %v1452
        %2477 = vst [vmem:[%s162 + $0x828] sm:$0xff] %v1453
        %2478 = vst [vmem:[%s162 + $0x830] sm:$0xff] %v1454
        %2479 = vst [vmem:[%s162 + $0x838] sm:$0xff] %v1455
        %2480 = vst [vmem:[%s162 + $0x840] sm:$0xff] %v1456
        %2481 = vst [vmem:[%s162 + $0x848] sm:$0xff] %v1457
        %2482 = vst [vmem:[%s162 + $0x850] sm:$0xff] %v1458
        %2483 = vst [vmem:[%s162 + $0x858] sm:$0xff] %v1459
        %2484 = vst [vmem:[%s162 + $0x860] sm:$0xff] %v1460
        %2485 = vst [vmem:[%s162 + $0x868] sm:$0xff] %v1461
        %2486 = vst [vmem:[%s162 + $0x870] sm:$0xff] %v1462
        %2487 = vst [vmem:[%s162 + $0x878] sm:$0xff] %v1463
        %2488 = vst [vmem:[%s162 + $0x880] sm:$0xff] %v1464
        %2489 = vst [vmem:[%s162 + $0x888] sm:$0xff] %v1465
        %2490 = vst [vmem:[%s162 + $0x890] sm:$0xff] %v1466
        %2491 = vst [vmem:[%s162 + $0x898] sm:$0xff] %v1467
        %2492 = vst [vmem:[%s162 + $0x8a0] sm:$0xff] %v1468
        %2493 = vst [vmem:[%s162 + $0x8a8] sm:$0xff] %v1469
        %2494 = vst [vmem:[%s162 + $0x8b0] sm:$0xff] %v1470
        %2495 = vst [vmem:[%s162 + $0x8b8] sm:$0xff] %v1471
        %2496 = vst [vmem:[%s162 + $0x8c0] sm:$0xff] %v1472
        %2497 = vst [vmem:[%s162 + $0x8c8] sm:$0xff] %v1473
        %2498 = vst [vmem:[%s162 + $0x8d0] sm:$0xff] %v1474
        %2499 = vst [vmem:[%s162 + $0x8d8] sm:$0xff] %v1475
        %2500 = vst [vmem:[%s162 + $0x8e0] sm:$0xff] %v1476
        %2501 = vst [vmem:[%s162 + $0x8e8] sm:$0xff] %v1477
        %2502 = vst [vmem:[%s162 + $0x8f0] sm:$0xff] %v1478
        %2503 = vst [vmem:[%s162 + $0x8f8] sm:$0xff] %v1479
        %2504 = vst [vmem:[%s162 + $0x900] sm:$0xff] %v1480
        %2505 = vst [vmem:[%s162 + $0x908] sm:$0xff] %v1481
        %2506 = vst [vmem:[%s162 + $0x910] sm:$0xff] %v1482
        %2507 = vst [vmem:[%s162 + $0x918] sm:$0xff] %v1483
        %2508 = vst [vmem:[%s162 + $0x920] sm:$0xff] %v1484
        %2509 = vst [vmem:[%s162 + $0x928] sm:$0xff] %v1485
        %2510 = vst [vmem:[%s162 + $0x930] sm:$0xff] %v1486
        %2511 = vst [vmem:[%s162 + $0x938] sm:$0xff] %v1487
        %2512 = vst [vmem:[%s162 + $0x940] sm:$0xff] %v1488
        %2513 = vst [vmem:[%s162 + $0x948] sm:$0xff] %v1489
        %2514 = vst [vmem:[%s162 + $0x950] sm:$0xff] %v1490
        %2515 = vst [vmem:[%s162 + $0x958] sm:$0xff] %v1491
        %2516 = vst [vmem:[%s162 + $0x960] sm:$0xff] %v1492
        %2517 = vst [vmem:[%s162 + $0x968] sm:$0xff] %v1493
        %2518 = vst [vmem:[%s162 + $0x970] sm:$0xff] %v1494
        %2519 = vst [vmem:[%s162 + $0x978] sm:$0xff] %v1495
        %2520 = vst [vmem:[%s162 + $0x980] sm:$0xff] %v1496
        %2521 = vst [vmem:[%s162 + $0x988] sm:$0xff] %v1497
        %2522 = vst [vmem:[%s162 + $0x990] sm:$0xff] %v1498
        %2523 = vst [vmem:[%s162 + $0x998] sm:$0xff] %v1499
        %2524 = vst [vmem:[%s162 + $0x9a0] sm:$0xff] %v1500
        %2525 = vst [vmem:[%s162 + $0x9a8] sm:$0xff] %v1501
        %2526 = vst [vmem:[%s162 + $0x9b0] sm:$0xff] %v1502
        %2527 = vst [vmem:[%s162 + $0x9b8] sm:$0xff] %v1503
        %2528 = vst [vmem:[%s162 + $0x9c0] sm:$0xff] %v1504
        %2529 = vst [vmem:[%s162 + $0x9c8] sm:$0xff] %v1505
        %2530 = vst [vmem:[%s162 + $0x9d0] sm:$0xff] %v1506
        %2531 = vst [vmem:[%s162 + $0x9d8] sm:$0xff] %v1507
        %2532 = vst [vmem:[%s162 + $0x9e0] sm:$0xff] %v1508
        %2533 = vst [vmem:[%s162 + $0x9e8] sm:$0xff] %v1509
        %2534 = vst [vmem:[%s162 + $0x9f0] sm:$0xff] %v1510
        %2535 = vst [vmem:[%s162 + $0x9f8] sm:$0xff] %v1511
        %2536 = vst [vmem:[%s162 + $0xa00] sm:$0xff] %v1512
        %2537 = vst [vmem:[%s162 + $0xa08] sm:$0xff] %v1513
        %2538 = vst [vmem:[%s162 + $0xa10] sm:$0xff] %v1514
        %2539 = vst [vmem:[%s162 + $0xa18] sm:$0xff] %v1515
        %2540 = vst [vmem:[%s162 + $0xa20] sm:$0xff] %v1516
        %2541 = vst [vmem:[%s162 + $0xa28] sm:$0xff] %v1517
        %2542 = vst [vmem:[%s162 + $0xa30] sm:$0xff] %v1518
        %2543 = vst [vmem:[%s162 + $0xa38] sm:$0xff] %v1519
        %2544 = vst [vmem:[%s162 + $0xa40] sm:$0xff] %v1520
        %2545 = vst [vmem:[%s162 + $0xa48] sm:$0xff] %v1521
        %2546 = vst [vmem:[%s162 + $0xa50] sm:$0xff] %v1522
        %2547 = vst [vmem:[%s162 + $0xa58] sm:$0xff] %v1523
        %2548 = vst [vmem:[%s162 + $0xa60] sm:$0xff] %v1524
        %2549 = vst [vmem:[%s162 + $0xa68] sm:$0xff] %v1525
        %2550 = vst [vmem:[%s162 + $0xa70] sm:$0xff] %v1526
        %2551 = vst [vmem:[%s162 + $0xa78] sm:$0xff] %v1527
        %2552 = vst [vmem:[%s162 + $0xa80] sm:$0xff] %v1528
        %2553 = vst [vmem:[%s162 + $0xa88] sm:$0xff] %v1529
        %2554 = vst [vmem:[%s162 + $0xa90] sm:$0xff] %v1530
        %2555 = vst [vmem:[%s162 + $0xa98] sm:$0xff] %v1531
        %2556 = vst [vmem:[%s162 + $0xaa0] sm:$0xff] %v1532
        %2557 = vst [vmem:[%s162 + $0xaa8] sm:$0xff] %v1533
        %2558 = vst [vmem:[%s162 + $0xab0] sm:$0xff] %v1534
        %2559 = vst [vmem:[%s162 + $0xab8] sm:$0xff] %v1535
        %2560 = vst [vmem:[%s162 + $0xac0] sm:$0xff] %v1536
        %2561 = vst [vmem:[%s162 + $0xac8] sm:$0xff] %v1537
        %2562 = vst [vmem:[%s162 + $0xad0] sm:$0xff] %v1538
        %2563 = vst [vmem:[%s162 + $0xad8] sm:$0xff] %v1539
        %2564 = vst [vmem:[%s162 + $0xae0] sm:$0xff] %v1540
        %2565 = vst [vmem:[%s162 + $0xae8] sm:$0xff] %v1541
        %2566 = vst [vmem:[%s162 + $0xaf0] sm:$0xff] %v1542
        %2567 = vst [vmem:[%s162 + $0xaf8] sm:$0xff] %v1543
        %2568 = vst [vmem:[%s162 + $0xb00] sm:$0xff] %v1544
        %2569 = vst [vmem:[%s162 + $0xb08] sm:$0xff] %v1545
        %2570 = vst [vmem:[%s162 + $0xb10] sm:$0xff] %v1546
        %2571 = vst [vmem:[%s162 + $0xb18] sm:$0xff] %v1547
        %2572 = vst [vmem:[%s162 + $0xb20] sm:$0xff] %v1548
        %2573 = vst [vmem:[%s162 + $0xb28] sm:$0xff] %v1549
        %2574 = vst [vmem:[%s162 + $0xb30] sm:$0xff] %v1550
        %2575 = vst [vmem:[%s162 + $0xb38] sm:$0xff] %v1551
        %2576 = vst [vmem:[%s162 + $0xb40] sm:$0xff] %v1552
        %2577 = vst [vmem:[%s162 + $0xb48] sm:$0xff] %v1553
        %2578 = vst [vmem:[%s162 + $0xb50] sm:$0xff] %v1554
        %2579 = vst [vmem:[%s162 + $0xb58] sm:$0xff] %v1555
        %2580 = vst [vmem:[%s162 + $0xb60] sm:$0xff] %v1556
        %2581 = vst [vmem:[%s162 + $0xb68] sm:$0xff] %v1557
        %2582 = vst [vmem:[%s162 + $0xb70] sm:$0xff] %v1558
        %2583 = vst [vmem:[%s162 + $0xb78] sm:$0xff] %v1559
        %2584 = vst [vmem:[%s162 + $0xb80] sm:$0xff] %v1560
        %2585 = vst [vmem:[%s162 + $0xb88] sm:$0xff] %v1561
        %2586 = vst [vmem:[%s162 + $0xb90] sm:$0xff] %v1562
        %2587 = vst [vmem:[%s162 + $0xb98] sm:$0xff] %v1563
        %2588 = vst [vmem:[%s162 + $0xba0] sm:$0xff] %v1564
        %2589 = vst [vmem:[%s162 + $0xba8] sm:$0xff] %v1565
        %2590 = vst [vmem:[%s162 + $0xbb0] sm:$0xff] %v1566
        %2591 = vst [vmem:[%s162 + $0xbb8] sm:$0xff] %v1567
        %2592 = vst [vmem:[%s162 + $0xbc0] sm:$0xff] %v1568
        %2593 = vst [vmem:[%s162 + $0xbc8] sm:$0xff] %v1569
        %2594 = vst [vmem:[%s162 + $0xbd0] sm:$0xff] %v1570
        %2595 = vst [vmem:[%s162 + $0xbd8] sm:$0xff] %v1571
        %2596 = vst [vmem:[%s162 + $0xbe0] sm:$0xff] %v1572
        %2597 = vst [vmem:[%s162 + $0xbe8] sm:$0xff] %v1573
        %2598 = vst [vmem:[%s162 + $0xbf0] sm:$0xff] %v1574
        %2599 = vst [vmem:[%s162 + $0xbf8] sm:$0xff] %v1575
        %2600 = vst [vmem:[%s162 + $0xc00] sm:$0xff] %v1576
        %2601 = vst [vmem:[%s162 + $0xc08] sm:$0xff] %v1577
        %2602 = vst [vmem:[%s162 + $0xc10] sm:$0xff] %v1578
        %2603 = vst [vmem:[%s162 + $0xc18] sm:$0xff] %v1579
        %2604 = vst [vmem:[%s162 + $0xc20] sm:$0xff] %v1580
        %2605 = vst [vmem:[%s162 + $0xc28] sm:$0xff] %v1581
        %2606 = vst [vmem:[%s162 + $0xc30] sm:$0xff] %v1582
        %2607 = vst [vmem:[%s162 + $0xc38] sm:$0xff] %v1583
        %2608 = vst [vmem:[%s162 + $0xc40] sm:$0xff] %v1584
        %2609 = vst [vmem:[%s162 + $0xc48] sm:$0xff] %v1585
        %2610 = vst [vmem:[%s162 + $0xc50] sm:$0xff] %v1586
        %2611 = vst [vmem:[%s162 + $0xc58] sm:$0xff] %v1587
        %2612 = vst [vmem:[%s162 + $0xc60] sm:$0xff] %v1588
        %2613 = vst [vmem:[%s162 + $0xc68] sm:$0xff] %v1589
        %2614 = vst [vmem:[%s162 + $0xc70] sm:$0xff] %v1590
        %2615 = vst [vmem:[%s162 + $0xc78] sm:$0xff] %v1591
        %2616 = vst [vmem:[%s162 + $0xc80] sm:$0xff] %v1592
        %2617 = vst [vmem:[%s162 + $0xc88] sm:$0xff] %v1593
        %2618 = vst [vmem:[%s162 + $0xc90] sm:$0xff] %v1594
        %2619 = vst [vmem:[%s162 + $0xc98] sm:$0xff] %v1595
        %2620 = vst [vmem:[%s162 + $0xca0] sm:$0xff] %v1596
        %2621 = vst [vmem:[%s162 + $0xca8] sm:$0xff] %v1597
        %2622 = vst [vmem:[%s162 + $0xcb0] sm:$0xff] %v1598
        %2623 = vst [vmem:[%s162 + $0xcb8] sm:$0xff] %v1599
        %2624 = vst [vmem:[%s162 + $0xcc0] sm:$0xff] %v1600
        %2625 = vst [vmem:[%s162 + $0xcc8] sm:$0xff] %v1601
        %2626 = vst [vmem:[%s162 + $0xcd0] sm:$0xff] %v1602
        %2627 = vst [vmem:[%s162 + $0xcd8] sm:$0xff] %v1603
        %2628 = vst [vmem:[%s162 + $0xce0] sm:$0xff] %v1604
        %2629 = vst [vmem:[%s162 + $0xce8] sm:$0xff] %v1605
        %2630 = vst [vmem:[%s162 + $0xcf0] sm:$0xff] %v1606
        %2631 = vst [vmem:[%s162 + $0xcf8] sm:$0xff] %v1607
        %2632 = vst [vmem:[%s162 + $0xd00] sm:$0xff] %v1608
        %2633 = vst [vmem:[%s162 + $0xd08] sm:$0xff] %v1609
        %2634 = vst [vmem:[%s162 + $0xd10] sm:$0xff] %v1610
        %2635 = vst [vmem:[%s162 + $0xd18] sm:$0xff] %v1611
        %2636 = vst [vmem:[%s162 + $0xd20] sm:$0xff] %v1612
        %2637 = vst [vmem:[%s162 + $0xd28] sm:$0xff] %v1613
        %2638 = vst [vmem:[%s162 + $0xd30] sm:$0xff] %v1614
        %2639 = vst [vmem:[%s162 + $0xd38] sm:$0xff] %v1615
        %2640 = vst [vmem:[%s162 + $0xd40] sm:$0xff] %v1616
        %2641 = vst [vmem:[%s162 + $0xd48] sm:$0xff] %v1617
        %2642 = vst [vmem:[%s162 + $0xd50] sm:$0xff] %v1618
        %2643 = vst [vmem:[%s162 + $0xd58] sm:$0xff] %v1619
        %2644 = vst [vmem:[%s162 + $0xd60] sm:$0xff] %v1620
        %2645 = vst [vmem:[%s162 + $0xd68] sm:$0xff] %v1621
        %2646 = vst [vmem:[%s162 + $0xd70] sm:$0xff] %v1622
        %2647 = vst [vmem:[%s162 + $0xd78] sm:$0xff] %v1623
        %2648 = vst [vmem:[%s162 + $0xd80] sm:$0xff] %v1624
        %2649 = vst [vmem:[%s162 + $0xd88] sm:$0xff] %v1625
        %2650 = vst [vmem:[%s162 + $0xd90] sm:$0xff] %v1626
        %2651 = vst [vmem:[%s162 + $0xd98] sm:$0xff] %v1627
        %2652 = vst [vmem:[%s162 + $0xda0] sm:$0xff] %v1628
        %2653 = vst [vmem:[%s162 + $0xda8] sm:$0xff] %v1629
        %2654 = vst [vmem:[%s162 + $0xdb0] sm:$0xff] %v1630
        %2655 = vst [vmem:[%s162 + $0xdb8] sm:$0xff] %v1631
        %2656 = vst [vmem:[%s162 + $0xdc0] sm:$0xff] %v1632
        %2657 = vst [vmem:[%s162 + $0xdc8] sm:$0xff] %v1633
        %2658 = vst [vmem:[%s162 + $0xdd0] sm:$0xff] %v1634
        %2659 = vst [vmem:[%s162 + $0xdd8] sm:$0xff] %v1635
        %2660 = vst [vmem:[%s162 + $0xde0] sm:$0xff] %v1636
        %2661 = vst [vmem:[%s162 + $0xde8] sm:$0xff] %v1637
        %2662 = vst [vmem:[%s162 + $0xdf0] sm:$0xff] %v1638
        %2663 = vst [vmem:[%s162 + $0xdf8] sm:$0xff] %v1639
        %2664 = vst [vmem:[%s162 + $0xe00] sm:$0xff] %v1640
        %2665 = vst [vmem:[%s162 + $0xe08] sm:$0xff] %v1641
        %2666 = vst [vmem:[%s162 + $0xe10] sm:$0xff] %v1642
        %2667 = vst [vmem:[%s162 + $0xe18] sm:$0xff] %v1643
        %2668 = vst [vmem:[%s162 + $0xe20] sm:$0xff] %v1644
        %2669 = vst [vmem:[%s162 + $0xe28] sm:$0xff] %v1645
        %2670 = vst [vmem:[%s162 + $0xe30] sm:$0xff] %v1646
        %2671 = vst [vmem:[%s162 + $0xe38] sm:$0xff] %v1647
        %2672 = vst [vmem:[%s162 + $0xe40] sm:$0xff] %v1648
        %2673 = vst [vmem:[%s162 + $0xe48] sm:$0xff] %v1649
        %2674 = vst [vmem:[%s162 + $0xe50] sm:$0xff] %v1650
        %2675 = vst [vmem:[%s162 + $0xe58] sm:$0xff] %v1651
        %2676 = vst [vmem:[%s162 + $0xe60] sm:$0xff] %v1652
        %2677 = vst [vmem:[%s162 + $0xe68] sm:$0xff] %v1653
        %2678 = vst [vmem:[%s162 + $0xe70] sm:$0xff] %v1654
        %2679 = vst [vmem:[%s162 + $0xe78] sm:$0xff] %v1655
        %2680 = vst [vmem:[%s162 + $0xe80] sm:$0xff] %v1656
        %2681 = vst [vmem:[%s162 + $0xe88] sm:$0xff] %v1657
        %2682 = vst [vmem:[%s162 + $0xe90] sm:$0xff] %v1658
        %2683 = vst [vmem:[%s162 + $0xe98] sm:$0xff] %v1659
        %2684 = vst [vmem:[%s162 + $0xea0] sm:$0xff] %v1660
        %2685 = vst [vmem:[%s162 + $0xea8] sm:$0xff] %v1661
        %2686 = vst [vmem:[%s162 + $0xeb0] sm:$0xff] %v1662
        %2687 = vst [vmem:[%s162 + $0xeb8] sm:$0xff] %v1663
        %2688 = vst [vmem:[%s162 + $0xec0] sm:$0xff] %v1664
        %2689 = vst [vmem:[%s162 + $0xec8] sm:$0xff] %v1665
        %2690 = vst [vmem:[%s162 + $0xed0] sm:$0xff] %v1666
        %2691 = vst [vmem:[%s162 + $0xed8] sm:$0xff] %v1667
        %2692 = vst [vmem:[%s162 + $0xee0] sm:$0xff] %v1668
        %2693 = vst [vmem:[%s162 + $0xee8] sm:$0xff] %v1669
        %2694 = vst [vmem:[%s162 + $0xef0] sm:$0xff] %v1670
        %2695 = vst [vmem:[%s162 + $0xef8] sm:$0xff] %v1671
        %2696 = vst [vmem:[%s162 + $0xf00] sm:$0xff] %v1672
        %2697 = vst [vmem:[%s162 + $0xf08] sm:$0xff] %v1673
        %2698 = vst [vmem:[%s162 + $0xf10] sm:$0xff] %v1674
        %2699 = vst [vmem:[%s162 + $0xf18] sm:$0xff] %v1675
        %2700 = vst [vmem:[%s162 + $0xf20] sm:$0xff] %v1676
        %2701 = vst [vmem:[%s162 + $0xf28] sm:$0xff] %v1677
        %2702 = vst [vmem:[%s162 + $0xf30] sm:$0xff] %v1678
        %2703 = vst [vmem:[%s162 + $0xf38] sm:$0xff] %v1679
        %2704 = vst [vmem:[%s162 + $0xf40] sm:$0xff] %v1680
        %2705 = vst [vmem:[%s162 + $0xf48] sm:$0xff] %v1681
        %2706 = vst [vmem:[%s162 + $0xf50] sm:$0xff] %v1682
        %2707 = vst [vmem:[%s162 + $0xf58] sm:$0xff] %v1683
        %2708 = vst [vmem:[%s162 + $0xf60] sm:$0xff] %v1684
        %2709 = vst [vmem:[%s162 + $0xf68] sm:$0xff] %v1685
        %2710 = vst [vmem:[%s162 + $0xf70] sm:$0xff] %v1686
        %2711 = vst [vmem:[%s162 + $0xf78] sm:$0xff] %v1687
        %2712 = vst [vmem:[%s162 + $0xf80] sm:$0xff] %v1688
        %2713 = vst [vmem:[%s162 + $0xf88] sm:$0xff] %v1689
        %2714 = vst [vmem:[%s162 + $0xf90] sm:$0xff] %v1690
        %2715 = vst [vmem:[%s162 + $0xf98] sm:$0xff] %v1691
        %2716 = vst [vmem:[%s162 + $0xfa0] sm:$0xff] %v1692
        %2717 = vst [vmem:[%s162 + $0xfa8] sm:$0xff] %v1693
        %2718 = vst [vmem:[%s162 + $0xfb0] sm:$0xff] %v1694
        %2719 = vst [vmem:[%s162 + $0xfb8] sm:$0xff] %v1695
        %2720 = vst [vmem:[%s162 + $0xfc0] sm:$0xff] %v1696
        %2721 = vst [vmem:[%s162 + $0xfc8] sm:$0xff] %v1697
        %2722 = vst [vmem:[%s162 + $0xfd0] sm:$0xff] %v1698
        %2723 = vst [vmem:[%s162 + $0xfd8] sm:$0xff] %v1699
        %2724 = vst [vmem:[%s162 + $0xfe0] sm:$0xff] %v1700
        %2725 = vst [vmem:[%s162 + $0xfe8] sm:$0xff] %v1701
        %2726 = vst [vmem:[%s162 + $0xff0] sm:$0xff] %v1702
        %2727 = vst [vmem:[%s162 + $0xff8] sm:$0xff] %v1703
        %2728 = vst [vmem:[%s162 + $0x1000] sm:$0xff] %v1704
        %2729 = vst [vmem:[%s162 + $0x1008] sm:$0xff] %v1705
        %2730 = vst [vmem:[%s162 + $0x1010] sm:$0xff] %v1706
        %2731 = vst [vmem:[%s162 + $0x1018] sm:$0xff] %v1707
        %2732 = vst [vmem:[%s162 + $0x1020] sm:$0xff] %v1708
        %2733 = vst [vmem:[%s162 + $0x1028] sm:$0xff] %v1709
        %2734 = vst [vmem:[%s162 + $0x1030] sm:$0xff] %v1710
        %2735 = vst [vmem:[%s162 + $0x1038] sm:$0xff] %v1711
        %2736 = vst [vmem:[%s162 + $0x1040] sm:$0xff] %v1712
        %2737 = vst [vmem:[%s162 + $0x1048] sm:$0xff] %v1713
        %2738 = vst [vmem:[%s162 + $0x1050] sm:$0xff] %v1714
        %2739 = vst [vmem:[%s162 + $0x1058] sm:$0xff] %v1715
        %2740 = vst [vmem:[%s162 + $0x1060] sm:$0xff] %v1716
        %2741 = vst [vmem:[%s162 + $0x1068] sm:$0xff] %v1717
        %2742 = vst [vmem:[%s162 + $0x1070] sm:$0xff] %v1718
        %2743 = vst [vmem:[%s162 + $0x1078] sm:$0xff] %v1719
        %2744 = vst [vmem:[%s162 + $0x1080] sm:$0xff] %v1720
        %2745 = vst [vmem:[%s162 + $0x1088] sm:$0xff] %v1721
        %2746 = vst [vmem:[%s162 + $0x1090] sm:$0xff] %v1722
        %2747 = vst [vmem:[%s162 + $0x1098] sm:$0xff] %v1723
        %2748 = vst [vmem:[%s162 + $0x10a0] sm:$0xff] %v1724
        %2749 = vst [vmem:[%s162 + $0x10a8] sm:$0xff] %v1725
        %2750 = vst [vmem:[%s162 + $0x10b0] sm:$0xff] %v1726
        %2751 = vst [vmem:[%s162 + $0x10b8] sm:$0xff] %v1727
        %2752 = vst [vmem:[%s162 + $0x10c0] sm:$0xff] %v1728
        %2753 = vst [vmem:[%s162 + $0x10c8] sm:$0xff] %v1729
        %2754 = vst [vmem:[%s162 + $0x10d0] sm:$0xff] %v1730
        %2755 = vst [vmem:[%s162 + $0x10d8] sm:$0xff] %v1731
        %2756 = vst [vmem:[%s162 + $0x10e0] sm:$0xff] %v1732
        %2757 = vst [vmem:[%s162 + $0x10e8] sm:$0xff] %v1733
        %2758 = vst [vmem:[%s162 + $0x10f0] sm:$0xff] %v1734
        %2759 = vst [vmem:[%s162 + $0x10f8] sm:$0xff] %v1735
        %2760 = vst [vmem:[%s162 + $0x1100] sm:$0xff] %v1736
        %2761 = vst [vmem:[%s162 + $0x1108] sm:$0xff] %v1737
        %2762 = vst [vmem:[%s162 + $0x1110] sm:$0xff] %v1738
        %2763 = vst [vmem:[%s162 + $0x1118] sm:$0xff] %v1739
        %2764 = vst [vmem:[%s162 + $0x1120] sm:$0xff] %v1740
        %2765 = vst [vmem:[%s162 + $0x1128] sm:$0xff] %v1741
        %2766 = vst [vmem:[%s162 + $0x1130] sm:$0xff] %v1742
        %2767 = vst [vmem:[%s162 + $0x1138] sm:$0xff] %v1743
        %2768 = vst [vmem:[%s162 + $0x1140] sm:$0xff] %v1744
        %2769 = vst [vmem:[%s162 + $0x1148] sm:$0xff] %v1745
        %2770 = vst [vmem:[%s162 + $0x1150] sm:$0xff] %v1746
        %2771 = vst [vmem:[%s162 + $0x1158] sm:$0xff] %v1747
        %2772 = vst [vmem:[%s162 + $0x1160] sm:$0xff] %v1748
        %2773 = vst [vmem:[%s162 + $0x1168] sm:$0xff] %v1749
        %2774 = vst [vmem:[%s162 + $0x1170] sm:$0xff] %v1750
        %2775 = vst [vmem:[%s162 + $0x1178] sm:$0xff] %v1751
        %2776 = vst [vmem:[%s162 + $0x1180] sm:$0xff] %v1752
        %2777 = vst [vmem:[%s162 + $0x1188] sm:$0xff] %v1753
        %2778 = vst [vmem:[%s162 + $0x1190] sm:$0xff] %v1754
        %2779 = vst [vmem:[%s162 + $0x1198] sm:$0xff] %v1755
        %2780 = vst [vmem:[%s162 + $0x11a0] sm:$0xff] %v1756
        %2781 = vst [vmem:[%s162 + $0x11a8] sm:$0xff] %v1757
        %2782 = vst [vmem:[%s162 + $0x11b0] sm:$0xff] %v1758
        %2783 = vst [vmem:[%s162 + $0x11b8] sm:$0xff] %v1759
        %2784 = vst [vmem:[%s162 + $0x11c0] sm:$0xff] %v1760
        %2785 = vst [vmem:[%s162 + $0x11c8] sm:$0xff] %v1761
        %2786 = vst [vmem:[%s162 + $0x11d0] sm:$0xff] %v1762
        %2787 = vst [vmem:[%s162 + $0x11d8] sm:$0xff] %v1763
        %2788 = vst [vmem:[%s162 + $0x11e0] sm:$0xff] %v1764
        %2789 = vst [vmem:[%s162 + $0x11e8] sm:$0xff] %v1765
        %2790 = vst [vmem:[%s162 + $0x11f0] sm:$0xff] %v1766
        %2791 = vst [vmem:[%s162 + $0x11f8] sm:$0xff] %v1767
        %2792 = vst [vmem:[%s162 + $0x1200] sm:$0xff] %v1768
        %2793 = vst [vmem:[%s162 + $0x1208] sm:$0xff] %v1769
        %2794 = vst [vmem:[%s162 + $0x1210] sm:$0xff] %v1770
        %2795 = vst [vmem:[%s162 + $0x1218] sm:$0xff] %v1771
        %2796 = vst [vmem:[%s162 + $0x1220] sm:$0xff] %v1772
        %2797 = vst [vmem:[%s162 + $0x1228] sm:$0xff] %v1773
        %2798 = vst [vmem:[%s162 + $0x1230] sm:$0xff] %v1774
        %2799 = vst [vmem:[%s162 + $0x1238] sm:$0xff] %v1775
        %2800 = vst [vmem:[%s162 + $0x1240] sm:$0xff] %v1776
        %2801 = vst [vmem:[%s162 + $0x1248] sm:$0xff] %v1777
        %2802 = vst [vmem:[%s162 + $0x1250] sm:$0xff] %v1778
        %2803 = vst [vmem:[%s162 + $0x1258] sm:$0xff] %v1779
        %2804 = vst [vmem:[%s162 + $0x1260] sm:$0xff] %v1780
        %2805 = vst [vmem:[%s162 + $0x1268] sm:$0xff] %v1781
        %2806 = vst [vmem:[%s162 + $0x1270] sm:$0xff] %v1782
        %2807 = vst [vmem:[%s162 + $0x1278] sm:$0xff] %v1783
        %2808 = vst [vmem:[%s162 + $0x1280] sm:$0xff] %v1784
        %2809 = vst [vmem:[%s162 + $0x1288] sm:$0xff] %v1785
        %2810 = vst [vmem:[%s162 + $0x1290] sm:$0xff] %v1786
        %2811 = vst [vmem:[%s162 + $0x1298] sm:$0xff] %v1787
        %2812 = vst [vmem:[%s162 + $0x12a0] sm:$0xff] %v1788
        %2813 = vst [vmem:[%s162 + $0x12a8] sm:$0xff] %v1789
        %2814 = vst [vmem:[%s162 + $0x12b0] sm:$0xff] %v1790
        %2815 = vst [vmem:[%s162 + $0x12b8] sm:$0xff] %v1791
        %2816 = vst [vmem:[%s162 + $0x12c0] sm:$0xff] %v1792
        %2817 = vst [vmem:[%s162 + $0x12c8] sm:$0xff] %v1793
        %2818 = vst [vmem:[%s162 + $0x12d0] sm:$0xff] %v1794
        %2819 = vst [vmem:[%s162 + $0x12d8] sm:$0xff] %v1795
        %2820 = vst [vmem:[%s162 + $0x12e0] sm:$0xff] %v1796
        %2821 = vst [vmem:[%s162 + $0x12e8] sm:$0xff] %v1797
        %2822 = vst [vmem:[%s162 + $0x12f0] sm:$0xff] %v1798
        %2823 = vst [vmem:[%s162 + $0x12f8] sm:$0xff] %v1799
        %2824 = vst [vmem:[%s162 + $0x1300] sm:$0xff] %v1800
        %2825 = vst [vmem:[%s162 + $0x1308] sm:$0xff] %v1801
        %2826 = vst [vmem:[%s162 + $0x1310] sm:$0xff] %v1802
        %2827 = vst [vmem:[%s162 + $0x1318] sm:$0xff] %v1803
        %2828 = vst [vmem:[%s162 + $0x1320] sm:$0xff] %v1804
        %2829 = vst [vmem:[%s162 + $0x1328] sm:$0xff] %v1805
        %2830 = vst [vmem:[%s162 + $0x1330] sm:$0xff] %v1806
        %2831 = vst [vmem:[%s162 + $0x1338] sm:$0xff] %v1807
        %2832 = vst [vmem:[%s162 + $0x1340] sm:$0xff] %v1808
        %2833 = vst [vmem:[%s162 + $0x1348] sm:$0xff] %v1809
        %2834 = vst [vmem:[%s162 + $0x1350] sm:$0xff] %v1810
        %2835 = vst [vmem:[%s162 + $0x1358] sm:$0xff] %v1811
        %2836 = vst [vmem:[%s162 + $0x1360] sm:$0xff] %v1812
        %2837 = vst [vmem:[%s162 + $0x1368] sm:$0xff] %v1813
        %2838 = vst [vmem:[%s162 + $0x1370] sm:$0xff] %v1814
        %2839 = vst [vmem:[%s162 + $0x1378] sm:$0xff] %v1815
        %2840 = vst [vmem:[%s162 + $0x1380] sm:$0xff] %v1816
        %2841 = vst [vmem:[%s162 + $0x1388] sm:$0xff] %v1817
        %2842 = vst [vmem:[%s162 + $0x1390] sm:$0xff] %v1818
        %2843 = vst [vmem:[%s162 + $0x1398] sm:$0xff] %v1819
        %2844 = vst [vmem:[%s162 + $0x13a0] sm:$0xff] %v1820
        %2845 = vst [vmem:[%s162 + $0x13a8] sm:$0xff] %v1821
        %2846 = vst [vmem:[%s162 + $0x13b0] sm:$0xff] %v1822
        %2847 = vst [vmem:[%s162 + $0x13b8] sm:$0xff] %v1823
        %2848 = vst [vmem:[%s162 + $0x13c0] sm:$0xff] %v1824
        %2849 = vst [vmem:[%s162 + $0x13c8] sm:$0xff] %v1825
        %2850 = vst [vmem:[%s162 + $0x13d0] sm:$0xff] %v1826
        %2851 = vst [vmem:[%s162 + $0x13d8] sm:$0xff] %v1827
        %2852 = vst [vmem:[%s162 + $0x13e0] sm:$0xff] %v1828
        %2853 = vst [vmem:[%s162 + $0x13e8] sm:$0xff] %v1829
        %2854 = vst [vmem:[%s162 + $0x13f0] sm:$0xff] %v1830
        %2855 = vst [vmem:[%s162 + $0x13f8] sm:$0xff] %v1831
        %2856 = vst [vmem:[%s162 + $0x1400] sm:$0xff] %v1832
        %2857 = vst [vmem:[%s162 + $0x1408] sm:$0xff] %v1833
        %2858 = vst [vmem:[%s162 + $0x1410] sm:$0xff] %v1834
        %2859 = vst [vmem:[%s162 + $0x1418] sm:$0xff] %v1835
        %2860 = vst [vmem:[%s162 + $0x1420] sm:$0xff] %v1836
        %2861 = vst [vmem:[%s162 + $0x1428] sm:$0xff] %v1837
        %2862 = vst [vmem:[%s162 + $0x1430] sm:$0xff] %v1838
        %2863 = vst [vmem:[%s162 + $0x1438] sm:$0xff] %v1839
        %2864 = vst [vmem:[%s162 + $0x1440] sm:$0xff] %v1840
        %2865 = vst [vmem:[%s162 + $0x1448] sm:$0xff] %v1841
        %2866 = vst [vmem:[%s162 + $0x1450] sm:$0xff] %v1842
        %2867 = vst [vmem:[%s162 + $0x1458] sm:$0xff] %v1843
        %2868 = vst [vmem:[%s162 + $0x1460] sm:$0xff] %v1844
        %2869 = vst [vmem:[%s162 + $0x1468] sm:$0xff] %v1845
        %2870 = vst [vmem:[%s162 + $0x1470] sm:$0xff] %v1846
        %2871 = vst [vmem:[%s162 + $0x1478] sm:$0xff] %v1847
        %2872 = vst [vmem:[%s162 + $0x1480] sm:$0xff] %v1848
        %2873 = vst [vmem:[%s162 + $0x1488] sm:$0xff] %v1849
        %2874 = vst [vmem:[%s162 + $0x1490] sm:$0xff] %v1850
        %2875 = vst [vmem:[%s162 + $0x1498] sm:$0xff] %v1851
        %2876 = vst [vmem:[%s162 + $0x14a0] sm:$0xff] %v1852
        %2877 = vst [vmem:[%s162 + $0x14a8] sm:$0xff] %v1853
        %2878 = vst [vmem:[%s162 + $0x14b0] sm:$0xff] %v1854
        %2879 = vst [vmem:[%s162 + $0x14b8] sm:$0xff] %v1855
        %2880 = vst [vmem:[%s162 + $0x14c0] sm:$0xff] %v1856
        %2881 = vst [vmem:[%s162 + $0x14c8] sm:$0xff] %v1857
        %2882 = vst [vmem:[%s162 + $0x14d0] sm:$0xff] %v1858
        %2883 = vst [vmem:[%s162 + $0x14d8] sm:$0xff] %v1859
        %2884 = vst [vmem:[%s162 + $0x14e0] sm:$0xff] %v1860
        %2885 = vst [vmem:[%s162 + $0x14e8] sm:$0xff] %v1861
        %2886 = vst [vmem:[%s162 + $0x14f0] sm:$0xff] %v1862
        %2887 = vst [vmem:[%s162 + $0x14f8] sm:$0xff] %v1863
        %2888 = vst [vmem:[%s162 + $0x1500] sm:$0xff] %v1864
        %2889 = vst [vmem:[%s162 + $0x1508] sm:$0xff] %v1865
        %2890 = vst [vmem:[%s162 + $0x1510] sm:$0xff] %v1866
        %2891 = vst [vmem:[%s162 + $0x1518] sm:$0xff] %v1867
        %2892 = vst [vmem:[%s162 + $0x1520] sm:$0xff] %v1868
        %2893 = vst [vmem:[%s162 + $0x1528] sm:$0xff] %v1869
        %2894 = vst [vmem:[%s162 + $0x1530] sm:$0xff] %v1870
        %2895 = vst [vmem:[%s162 + $0x1538] sm:$0xff] %v1871
        %2896 = vst [vmem:[%s162 + $0x1540] sm:$0xff] %v1872
        %2897 = vst [vmem:[%s162 + $0x1548] sm:$0xff] %v1873
        %2898 = vst [vmem:[%s162 + $0x1550] sm:$0xff] %v1874
        %2899 = vst [vmem:[%s162 + $0x1558] sm:$0xff] %v1875
        %2900 = vst [vmem:[%s162 + $0x1560] sm:$0xff] %v1876
        %2901 = vst [vmem:[%s162 + $0x1568] sm:$0xff] %v1877
        %2902 = vst [vmem:[%s162 + $0x1570] sm:$0xff] %v1878
        %2903 = vst [vmem:[%s162 + $0x1578] sm:$0xff] %v1879
        %2904 = vst [vmem:[%s162 + $0x1580] sm:$0xff] %v1880
        %2905 = vst [vmem:[%s162 + $0x1588] sm:$0xff] %v1881
        %2906 = vst [vmem:[%s162 + $0x1590] sm:$0xff] %v1882
        %2907 = vst [vmem:[%s162 + $0x1598] sm:$0xff] %v1883
        %2908 = vst [vmem:[%s162 + $0x15a0] sm:$0xff] %v1884
        %2909 = vst [vmem:[%s162 + $0x15a8] sm:$0xff] %v1885
        %2910 = vst [vmem:[%s162 + $0x15b0] sm:$0xff] %v1886
        %2911 = vst [vmem:[%s162 + $0x15b8] sm:$0xff] %v1887
        %2912 = vst [vmem:[%s162 + $0x15c0] sm:$0xff] %v1888
        %2913 = vst [vmem:[%s162 + $0x15c8] sm:$0xff] %v1889
        %2914 = vst [vmem:[%s162 + $0x15d0] sm:$0xff] %v1890
        %2915 = vst [vmem:[%s162 + $0x15d8] sm:$0xff] %v1891
        %2916 = vst [vmem:[%s162 + $0x15e0] sm:$0xff] %v1892
        %2917 = vst [vmem:[%s162 + $0x15e8] sm:$0xff] %v1893
        %2918 = vst [vmem:[%s162 + $0x15f0] sm:$0xff] %v1894
        %2919 = vst [vmem:[%s162 + $0x15f8] sm:$0xff] %v1895
        %2920 = vst [vmem:[%s162 + $0x1600] sm:$0xff] %v1896
        %2921 = vst [vmem:[%s162 + $0x1608] sm:$0xff] %v1897
        %2922 = vst [vmem:[%s162 + $0x1610] sm:$0xff] %v1898
        %2923 = vst [vmem:[%s162 + $0x1618] sm:$0xff] %v1899
        %2924 = vst [vmem:[%s162 + $0x1620] sm:$0xff] %v1900
        %2925 = vst [vmem:[%s162 + $0x1628] sm:$0xff] %v1901
        %2926 = vst [vmem:[%s162 + $0x1630] sm:$0xff] %v1902
        %2927 = vst [vmem:[%s162 + $0x1638] sm:$0xff] %v1903
        %2928 = vst [vmem:[%s162 + $0x1640] sm:$0xff] %v1904
        %2929 = vst [vmem:[%s162 + $0x1648] sm:$0xff] %v1905
        %2930 = vst [vmem:[%s162 + $0x1650] sm:$0xff] %v1906
        %2931 = vst [vmem:[%s162 + $0x1658] sm:$0xff] %v1907
        %2932 = vst [vmem:[%s162 + $0x1660] sm:$0xff] %v1908
        %2933 = vst [vmem:[%s162 + $0x1668] sm:$0xff] %v1909
        %2934 = vst [vmem:[%s162 + $0x1670] sm:$0xff] %v1910
        %2935 = vst [vmem:[%s162 + $0x1678] sm:$0xff] %v1911
        %2936 = vst [vmem:[%s162 + $0x1680] sm:$0xff] %v1912
        %2937 = vst [vmem:[%s162 + $0x1688] sm:$0xff] %v1913
        %2938 = vst [vmem:[%s162 + $0x1690] sm:$0xff] %v1914
        %2939 = vst [vmem:[%s162 + $0x1698] sm:$0xff] %v1915
        %2940 = vst [vmem:[%s162 + $0x16a0] sm:$0xff] %v1916
        %2941 = vst [vmem:[%s162 + $0x16a8] sm:$0xff] %v1917
        %2942 = vst [vmem:[%s162 + $0x16b0] sm:$0xff] %v1918
        %2943 = vst [vmem:[%s162 + $0x16b8] sm:$0xff] %v1919
        %2944 = vst [vmem:[%s162 + $0x16c0] sm:$0xff] %v1920
        %2945 = vst [vmem:[%s162 + $0x16c8] sm:$0xff] %v1921
        %2946 = vst [vmem:[%s162 + $0x16d0] sm:$0xff] %v1922
        %2947 = vst [vmem:[%s162 + $0x16d8] sm:$0xff] %v1923
        %2948 = vst [vmem:[%s162 + $0x16e0] sm:$0xff] %v1924
        %2949 = vst [vmem:[%s162 + $0x16e8] sm:$0xff] %v1925
        %2950 = vst [vmem:[%s162 + $0x16f0] sm:$0xff] %v1926
        %2951 = vst [vmem:[%s162 + $0x16f8] sm:$0xff] %v1927
        %2952 = vst [vmem:[%s162 + $0x1700] sm:$0xff] %v1928
        %2953 = vst [vmem:[%s162 + $0x1708] sm:$0xff] %v1929
        %2954 = vst [vmem:[%s162 + $0x1710] sm:$0xff] %v1930
        %2955 = vst [vmem:[%s162 + $0x1718] sm:$0xff] %v1931
        %2956 = vst [vmem:[%s162 + $0x1720] sm:$0xff] %v1932
        %2957 = vst [vmem:[%s162 + $0x1728] sm:$0xff] %v1933
        %2958 = vst [vmem:[%s162 + $0x1730] sm:$0xff] %v1934
        %2959 = vst [vmem:[%s162 + $0x1738] sm:$0xff] %v1935
        %2960 = vst [vmem:[%s162 + $0x1740] sm:$0xff] %v1936
        %2961 = vst [vmem:[%s162 + $0x1748] sm:$0xff] %v1937
        %2962 = vst [vmem:[%s162 + $0x1750] sm:$0xff] %v1938
        %2963 = vst [vmem:[%s162 + $0x1758] sm:$0xff] %v1939
        %2964 = vst [vmem:[%s162 + $0x1760] sm:$0xff] %v1940
        %2965 = vst [vmem:[%s162 + $0x1768] sm:$0xff] %v1941
        %2966 = vst [vmem:[%s162 + $0x1770] sm:$0xff] %v1942
        %2967 = vst [vmem:[%s162 + $0x1778] sm:$0xff] %v1943
        %2968 = vst [vmem:[%s162 + $0x1780] sm:$0xff] %v1944
        %2969 = vst [vmem:[%s162 + $0x1788] sm:$0xff] %v1945
        %2970 = vst [vmem:[%s162 + $0x1790] sm:$0xff] %v1946
        %2971 = vst [vmem:[%s162 + $0x1798] sm:$0xff] %v1947
        %2972 = vst [vmem:[%s162 + $0x17a0] sm:$0xff] %v1948
        %2973 = vst [vmem:[%s162 + $0x17a8] sm:$0xff] %v1949
        %2974 = vst [vmem:[%s162 + $0x17b0] sm:$0xff] %v1950
        %2975 = vst [vmem:[%s162 + $0x17b8] sm:$0xff] %v1951
        %2976 = vst [vmem:[%s162 + $0x17c0] sm:$0xff] %v1952
        %2977 = vst [vmem:[%s162 + $0x17c8] sm:$0xff] %v1953
        %2978 = vst [vmem:[%s162 + $0x17d0] sm:$0xff] %v1954
        %2979 = vst [vmem:[%s162 + $0x17d8] sm:$0xff] %v1955
        %2980 = vst [vmem:[%s162 + $0x17e0] sm:$0xff] %v1956
        %2981 = vst [vmem:[%s162 + $0x17e8] sm:$0xff] %v1957
        %2982 = vst [vmem:[%s162 + $0x17f0] sm:$0xff] %v1958
        %2983 = vst [vmem:[%s162 + $0x17f8] sm:$0xff] %v1959
        %2984 = vst [vmem:[%s162 + $0x1800] sm:$0xff] %v1960
        %2985 = vst [vmem:[%s162 + $0x1808] sm:$0xff] %v1961
        %2986 = vst [vmem:[%s162 + $0x1810] sm:$0xff] %v1962
        %2987 = vst [vmem:[%s162 + $0x1818] sm:$0xff] %v1963
        %2988 = vst [vmem:[%s162 + $0x1820] sm:$0xff] %v1964
        %2989 = vst [vmem:[%s162 + $0x1828] sm:$0xff] %v1965
        %2990 = vst [vmem:[%s162 + $0x1830] sm:$0xff] %v1966
        %2991 = vst [vmem:[%s162 + $0x1838] sm:$0xff] %v1967
        %2992 = vst [vmem:[%s162 + $0x1840] sm:$0xff] %v1968
        %2993 = vst [vmem:[%s162 + $0x1848] sm:$0xff] %v1969
        %2994 = vst [vmem:[%s162 + $0x1850] sm:$0xff] %v1970
        %2995 = vst [vmem:[%s162 + $0x1858] sm:$0xff] %v1971
        %2996 = vst [vmem:[%s162 + $0x1860] sm:$0xff] %v1972
        %2997 = vst [vmem:[%s162 + $0x1868] sm:$0xff] %v1973
        %2998 = vst [vmem:[%s162 + $0x1870] sm:$0xff] %v1974
        %2999 = vst [vmem:[%s162 + $0x1878] sm:$0xff] %v1975
        %3000 = vst [vmem:[%s162 + $0x1880] sm:$0xff] %v1976
        %3001 = vst [vmem:[%s162 + $0x1888] sm:$0xff] %v1977
        %3002 = vst [vmem:[%s162 + $0x1890] sm:$0xff] %v1978
        %3003 = vst [vmem:[%s162 + $0x1898] sm:$0xff] %v1979
        %3004 = vst [vmem:[%s162 + $0x18a0] sm:$0xff] %v1980
        %3005 = vst [vmem:[%s162 + $0x18a8] sm:$0xff] %v1981
        %3006 = vst [vmem:[%s162 + $0x18b0] sm:$0xff] %v1982
        %3007 = vst [vmem:[%s162 + $0x18b8] sm:$0xff] %v1983
        %3008 = vst [vmem:[%s162 + $0x18c0] sm:$0xff] %v1984
        %3009 = vst [vmem:[%s162 + $0x18c8] sm:$0xff] %v1985
        %3010 = vst [vmem:[%s162 + $0x18d0] sm:$0xff] %v1986
        %3011 = vst [vmem:[%s162 + $0x18d8] sm:$0xff] %v1987
        %3012 = vst [vmem:[%s162 + $0x18e0] sm:$0xff] %v1988
        %3013 = vst [vmem:[%s162 + $0x18e8] sm:$0xff] %v1989
        %3014 = vst [vmem:[%s162 + $0x18f0] sm:$0xff] %v1990
        %3015 = vst [vmem:[%s162 + $0x18f8] sm:$0xff] %v1991
        %3016 = vst [vmem:[%s162 + $0x1900] sm:$0xff] %v1992
        %3017 = vst [vmem:[%s162 + $0x1908] sm:$0xff] %v1993
        %3018 = vst [vmem:[%s162 + $0x1910] sm:$0xff] %v1994
        %3019 = vst [vmem:[%s162 + $0x1918] sm:$0xff] %v1995
        %3020 = vst [vmem:[%s162 + $0x1920] sm:$0xff] %v1996
        %3021 = vst [vmem:[%s162 + $0x1928] sm:$0xff] %v1997
        %3022 = vst [vmem:[%s162 + $0x1930] sm:$0xff] %v1998
        %3023 = vst [vmem:[%s162 + $0x1938] sm:$0xff] %v1999
        %3024 = vst [vmem:[%s162 + $0x1940] sm:$0xff] %v2000
        %3025 = vst [vmem:[%s162 + $0x1948] sm:$0xff] %v2001
        %3026 = vst [vmem:[%s162 + $0x1950] sm:$0xff] %v2002
        %3027 = vst [vmem:[%s162 + $0x1958] sm:$0xff] %v2003
        %3028 = vst [vmem:[%s162 + $0x1960] sm:$0xff] %v2004
        %3029 = vst [vmem:[%s162 + $0x1968] sm:$0xff] %v2005
        %3030 = vst [vmem:[%s162 + $0x1970] sm:$0xff] %v2006
        %3031 = vst [vmem:[%s162 + $0x1978] sm:$0xff] %v2007
        %3032 = vst [vmem:[%s162 + $0x1980] sm:$0xff] %v2008
        %3033 = vst [vmem:[%s162 + $0x1988] sm:$0xff] %v2009
        %3034 = vst [vmem:[%s162 + $0x1990] sm:$0xff] %v2010
        %3035 = vst [vmem:[%s162 + $0x1998] sm:$0xff] %v2011
        %3036 = vst [vmem:[%s162 + $0x19a0] sm:$0xff] %v2012
        %3037 = vst [vmem:[%s162 + $0x19a8] sm:$0xff] %v2013
        %3038 = vst [vmem:[%s162 + $0x19b0] sm:$0xff] %v2014
        %3039 = vst [vmem:[%s162 + $0x19b8] sm:$0xff] %v2015
        %3040 = vst [vmem:[%s162 + $0x19c0] sm:$0xff] %v2016
        %3041 = vst [vmem:[%s162 + $0x19c8] sm:$0xff] %v2017
        %3042 = vst [vmem:[%s162 + $0x19d0] sm:$0xff] %v2018
        %3043 = vst [vmem:[%s162 + $0x19d8] sm:$0xff] %v2019
        %3044 = vst [vmem:[%s162 + $0x19e0] sm:$0xff] %v2020
        %3045 = vst [vmem:[%s162 + $0x19e8] sm:$0xff] %v2021
        %3046 = vst [vmem:[%s162 + $0x19f0] sm:$0xff] %v2022
        %3047 = vst [vmem:[%s162 + $0x19f8] sm:$0xff] %v2023
        %3048 = vst [vmem:[%s162 + $0x1a00] sm:$0xff] %v2024
        %3049 = vst [vmem:[%s162 + $0x1a08] sm:$0xff] %v2025
        %3050 = vst [vmem:[%s162 + $0x1a10] sm:$0xff] %v2026
        %3051 = vst [vmem:[%s162 + $0x1a18] sm:$0xff] %v2027
        %3052 = vst [vmem:[%s162 + $0x1a20] sm:$0xff] %v2028
        %3053 = vst [vmem:[%s162 + $0x1a28] sm:$0xff] %v2029
        %3054 = vst [vmem:[%s162 + $0x1a30] sm:$0xff] %v2030
        %3055 = vst [vmem:[%s162 + $0x1a38] sm:$0xff] %v2031
        %3056 = vst [vmem:[%s162 + $0x1a40] sm:$0xff] %v2032
        %3057 = vst [vmem:[%s162 + $0x1a48] sm:$0xff] %v2033
        %3058 = vst [vmem:[%s162 + $0x1a50] sm:$0xff] %v2034
        %3059 = vst [vmem:[%s162 + $0x1a58] sm:$0xff] %v2035
        %3060 = vst [vmem:[%s162 + $0x1a60] sm:$0xff] %v2036
        %3061 = vst [vmem:[%s162 + $0x1a68] sm:$0xff] %v2037
        %3062 = vst [vmem:[%s162 + $0x1a70] sm:$0xff] %v2038
        %3063 = vst [vmem:[%s162 + $0x1a78] sm:$0xff] %v2039
        %3064 = vst [vmem:[%s162 + $0x1a80] sm:$0xff] %v2040
        %3065 = vst [vmem:[%s162 + $0x1a88] sm:$0xff] %v2041
        %3066 = vst [vmem:[%s162 + $0x1a90] sm:$0xff] %v2042
        %3067 = vst [vmem:[%s162 + $0x1a98] sm:$0xff] %v2043
        %3068 = vst [vmem:[%s162 + $0x1aa0] sm:$0xff] %v2044
        %3069 = vst [vmem:[%s162 + $0x1aa8] sm:$0xff] %v2045
        %3070 = vst [vmem:[%s162 + $0x1ab0] sm:$0xff] %v2046
        %3071 = vst [vmem:[%s162 + $0x1ab8] sm:$0xff] %v2047
        %3072 = vst [vmem:[%s162 + $0x1ac0] sm:$0xff] %v2048
        %3073 = vst [vmem:[%s162 + $0x1ac8] sm:$0xff] %v2049
        %3074 = vst [vmem:[%s162 + $0x1ad0] sm:$0xff] %v2050
        %3075 = vst [vmem:[%s162 + $0x1ad8] sm:$0xff] %v2051
        %3076 = vst [vmem:[%s162 + $0x1ae0] sm:$0xff] %v2052
        %3077 = vst [vmem:[%s162 + $0x1ae8] sm:$0xff] %v2053
        %3078 = vst [vmem:[%s162 + $0x1af0] sm:$0xff] %v2054
        %3079 = vst [vmem:[%s162 + $0x1af8] sm:$0xff] %v2055
        %3080 = vst [vmem:[%s162 + $0x1b00] sm:$0xff] %v2056
        %3081 = vst [vmem:[%s162 + $0x1b08] sm:$0xff] %v2057
        %3082 = vst [vmem:[%s162 + $0x1b10] sm:$0xff] %v2058
        %3083 = vst [vmem:[%s162 + $0x1b18] sm:$0xff] %v2059
        %3084 = vst [vmem:[%s162 + $0x1b20] sm:$0xff] %v2060
        %3085 = vst [vmem:[%s162 + $0x1b28] sm:$0xff] %v2061
        %3086 = vst [vmem:[%s162 + $0x1b30] sm:$0xff] %v2062
        %3087 = vst [vmem:[%s162 + $0x1b38] sm:$0xff] %v2063
        %3088 = vst [vmem:[%s162 + $0x1b40] sm:$0xff] %v2064
        %3089 = vst [vmem:[%s162 + $0x1b48] sm:$0xff] %v2065
        %3090 = vst [vmem:[%s162 + $0x1b50] sm:$0xff] %v2066
        %3091 = vst [vmem:[%s162 + $0x1b58] sm:$0xff] %v2067
        %3092 = vst [vmem:[%s162 + $0x1b60] sm:$0xff] %v2068
        %3093 = vst [vmem:[%s162 + $0x1b68] sm:$0xff] %v2069
        %3094 = vst [vmem:[%s162 + $0x1b70] sm:$0xff] %v2070
        %3095 = vst [vmem:[%s162 + $0x1b78] sm:$0xff] %v2071
        %3096 = vst [vmem:[%s162 + $0x1b80] sm:$0xff] %v2072
        %3097 = vst [vmem:[%s162 + $0x1b88] sm:$0xff] %v2073
        %3098 = vst [vmem:[%s162 + $0x1b90] sm:$0xff] %v2074
        %3099 = vst [vmem:[%s162 + $0x1b98] sm:$0xff] %v2075
        %3100 = vst [vmem:[%s162 + $0x1ba0] sm:$0xff] %v2076
        %3101 = vst [vmem:[%s162 + $0x1ba8] sm:$0xff] %v2077
        %3102 = vst [vmem:[%s162 + $0x1bb0] sm:$0xff] %v2078
        %3103 = vst [vmem:[%s162 + $0x1bb8] sm:$0xff] %v2079
        %3104 = vst [vmem:[%s162 + $0x1bc0] sm:$0xff] %v2080
        %3105 = vst [vmem:[%s162 + $0x1bc8] sm:$0xff] %v2081
        %3106 = vst [vmem:[%s162 + $0x1bd0] sm:$0xff] %v2082
        %3107 = vst [vmem:[%s162 + $0x1bd8] sm:$0xff] %v2083
        %3108 = vst [vmem:[%s162 + $0x1be0] sm:$0xff] %v2084
        %3109 = vst [vmem:[%s162 + $0x1be8] sm:$0xff] %v2085
        %3110 = vst [vmem:[%s162 + $0x1bf0] sm:$0xff] %v2086
        %3111 = vst [vmem:[%s162 + $0x1bf8] sm:$0xff] %v2087
        %3112 = vst [vmem:[%s162 + $0x1c00] sm:$0xff] %v2088
        %3113 = vst [vmem:[%s162 + $0x1c08] sm:$0xff] %v2089
        %3114 = vst [vmem:[%s162 + $0x1c10] sm:$0xff] %v2090
        %3115 = vst [vmem:[%s162 + $0x1c18] sm:$0xff] %v2091
        %3116 = vst [vmem:[%s162 + $0x1c20] sm:$0xff] %v2092
        %3117 = vst [vmem:[%s162 + $0x1c28] sm:$0xff] %v2093
        %3118 = vst [vmem:[%s162 + $0x1c30] sm:$0xff] %v2094
        %3119 = vst [vmem:[%s162 + $0x1c38] sm:$0xff] %v2095
        %3120 = vst [vmem:[%s162 + $0x1c40] sm:$0xff] %v2096
        %3121 = vst [vmem:[%s162 + $0x1c48] sm:$0xff] %v2097
        %3122 = vst [vmem:[%s162 + $0x1c50] sm:$0xff] %v2098
        %3123 = vst [vmem:[%s162 + $0x1c58] sm:$0xff] %v2099
        %3124 = vst [vmem:[%s162 + $0x1c60] sm:$0xff] %v2100
        %3125 = vst [vmem:[%s162 + $0x1c68] sm:$0xff] %v2101
        %3126 = vst [vmem:[%s162 + $0x1c70] sm:$0xff] %v2102
        %3127 = vst [vmem:[%s162 + $0x1c78] sm:$0xff] %v2103
        %3128 = vst [vmem:[%s162 + $0x1c80] sm:$0xff] %v2104
        %3129 = vst [vmem:[%s162 + $0x1c88] sm:$0xff] %v2105
        %3130 = vst [vmem:[%s162 + $0x1c90] sm:$0xff] %v2106
        %3131 = vst [vmem:[%s162 + $0x1c98] sm:$0xff] %v2107
        %3132 = vst [vmem:[%s162 + $0x1ca0] sm:$0xff] %v2108
        %3133 = vst [vmem:[%s162 + $0x1ca8] sm:$0xff] %v2109
        %3134 = vst [vmem:[%s162 + $0x1cb0] sm:$0xff] %v2110
        %3135 = vst [vmem:[%s162 + $0x1cb8] sm:$0xff] %v2111
        %3136 = vst [vmem:[%s162 + $0x1cc0] sm:$0xff] %v2112
        %3137 = vst [vmem:[%s162 + $0x1cc8] sm:$0xff] %v2113
        %3138 = vst [vmem:[%s162 + $0x1cd0] sm:$0xff] %v2114
        %3139 = vst [vmem:[%s162 + $0x1cd8] sm:$0xff] %v2115
        %3140 = vst [vmem:[%s162 + $0x1ce0] sm:$0xff] %v2116
        %3141 = vst [vmem:[%s162 + $0x1ce8] sm:$0xff] %v2117
        %3142 = vst [vmem:[%s162 + $0x1cf0] sm:$0xff] %v2118
        %3143 = vst [vmem:[%s162 + $0x1cf8] sm:$0xff] %v2119
        %3144 = vst [vmem:[%s162 + $0x1d00] sm:$0xff] %v2120
        %3145 = vst [vmem:[%s162 + $0x1d08] sm:$0xff] %v2121
        %3146 = vst [vmem:[%s162 + $0x1d10] sm:$0xff] %v2122
        %3147 = vst [vmem:[%s162 + $0x1d18] sm:$0xff] %v2123
        %3148 = vst [vmem:[%s162 + $0x1d20] sm:$0xff] %v2124
        %3149 = vst [vmem:[%s162 + $0x1d28] sm:$0xff] %v2125
        %3150 = vst [vmem:[%s162 + $0x1d30] sm:$0xff] %v2126
        %3151 = vst [vmem:[%s162 + $0x1d38] sm:$0xff] %v2127
        %3152 = vst [vmem:[%s162 + $0x1d40] sm:$0xff] %v2128
        %3153 = vst [vmem:[%s162 + $0x1d48] sm:$0xff] %v2129
        %3154 = vst [vmem:[%s162 + $0x1d50] sm:$0xff] %v2130
        %3155 = vst [vmem:[%s162 + $0x1d58] sm:$0xff] %v2131
        %3156 = vst [vmem:[%s162 + $0x1d60] sm:$0xff] %v2132
        %3157 = vst [vmem:[%s162 + $0x1d68] sm:$0xff] %v2133
        %3158 = vst [vmem:[%s162 + $0x1d70] sm:$0xff] %v2134
        %3159 = vst [vmem:[%s162 + $0x1d78] sm:$0xff] %v2135
        %3160 = vst [vmem:[%s162 + $0x1d80] sm:$0xff] %v2136
        %3161 = vst [vmem:[%s162 + $0x1d88] sm:$0xff] %v2137
        %3162 = vst [vmem:[%s162 + $0x1d90] sm:$0xff] %v2138
        %3163 = vst [vmem:[%s162 + $0x1d98] sm:$0xff] %v2139
        %3164 = vst [vmem:[%s162 + $0x1da0] sm:$0xff] %v2140
        %3165 = vst [vmem:[%s162 + $0x1da8] sm:$0xff] %v2141
        %3166 = vst [vmem:[%s162 + $0x1db0] sm:$0xff] %v2142
        %3167 = vst [vmem:[%s162 + $0x1db8] sm:$0xff] %v2143
        %3168 = vst [vmem:[%s162 + $0x1dc0] sm:$0xff] %v2144
        %3169 = vst [vmem:[%s162 + $0x1dc8] sm:$0xff] %v2145
        %3170 = vst [vmem:[%s162 + $0x1dd0] sm:$0xff] %v2146
        %3171 = vst [vmem:[%s162 + $0x1dd8] sm:$0xff] %v2147
        %3172 = vst [vmem:[%s162 + $0x1de0] sm:$0xff] %v2148
        %3173 = vst [vmem:[%s162 + $0x1de8] sm:$0xff] %v2149
        %3174 = vst [vmem:[%s162 + $0x1df0] sm:$0xff] %v2150
        %3175 = vst [vmem:[%s162 + $0x1df8] sm:$0xff] %v2151
        %3176 = vst [vmem:[%s162 + $0x1e00] sm:$0xff] %v2152
        %3177 = vst [vmem:[%s162 + $0x1e08] sm:$0xff] %v2153
        %3178 = vst [vmem:[%s162 + $0x1e10] sm:$0xff] %v2154
        %3179 = vst [vmem:[%s162 + $0x1e18] sm:$0xff] %v2155
        %3180 = vst [vmem:[%s162 + $0x1e20] sm:$0xff] %v2156
        %3181 = vst [vmem:[%s162 + $0x1e28] sm:$0xff] %v2157
        %3182 = vst [vmem:[%s162 + $0x1e30] sm:$0xff] %v2158
        %3183 = vst [vmem:[%s162 + $0x1e38] sm:$0xff] %v2159
        %3184 = vst [vmem:[%s162 + $0x1e40] sm:$0xff] %v2160
        %3185 = vst [vmem:[%s162 + $0x1e48] sm:$0xff] %v2161
        %3186 = vst [vmem:[%s162 + $0x1e50] sm:$0xff] %v2162
        %3187 = vst [vmem:[%s162 + $0x1e58] sm:$0xff] %v2163
        %3188 = vst [vmem:[%s162 + $0x1e60] sm:$0xff] %v2164
        %3189 = vst [vmem:[%s162 + $0x1e68] sm:$0xff] %v2165
        %3190 = vst [vmem:[%s162 + $0x1e70] sm:$0xff] %v2166
        %3191 = vst [vmem:[%s162 + $0x1e78] sm:$0xff] %v2167
        %3192 = vst [vmem:[%s162 + $0x1e80] sm:$0xff] %v2168
        %3193 = vst [vmem:[%s162 + $0x1e88] sm:$0xff] %v2169
        %3194 = vst [vmem:[%s162 + $0x1e90] sm:$0xff] %v2170
        %3195 = vst [vmem:[%s162 + $0x1e98] sm:$0xff] %v2171
        %3196 = vst [vmem:[%s162 + $0x1ea0] sm:$0xff] %v2172
        %3197 = vst [vmem:[%s162 + $0x1ea8] sm:$0xff] %v2173
        %3198 = vst [vmem:[%s162 + $0x1eb0] sm:$0xff] %v2174
        %3199 = vst [vmem:[%s162 + $0x1eb8] sm:$0xff] %v2175
        %3200 = vst [vmem:[%s162 + $0x1ec0] sm:$0xff] %v2176
        %3201 = vst [vmem:[%s162 + $0x1ec8] sm:$0xff] %v2177
        %3202 = vst [vmem:[%s162 + $0x1ed0] sm:$0xff] %v2178
        %3203 = vst [vmem:[%s162 + $0x1ed8] sm:$0xff] %v2179
        %3204 = vst [vmem:[%s162 + $0x1ee0] sm:$0xff] %v2180
        %3205 = vst [vmem:[%s162 + $0x1ee8] sm:$0xff] %v2181
        %3206 = vst [vmem:[%s162 + $0x1ef0] sm:$0xff] %v2182
        %3207 = vst [vmem:[%s162 + $0x1ef8] sm:$0xff] %v2183
        %3208 = vst [vmem:[%s162 + $0x1f00] sm:$0xff] %v2184
        %3209 = vst [vmem:[%s162 + $0x1f08] sm:$0xff] %v2185
        %3210 = vst [vmem:[%s162 + $0x1f10] sm:$0xff] %v2186
        %3211 = vst [vmem:[%s162 + $0x1f18] sm:$0xff] %v2187
        %3212 = vst [vmem:[%s162 + $0x1f20] sm:$0xff] %v2188
        %3213 = vst [vmem:[%s162 + $0x1f28] sm:$0xff] %v2189
        %3214 = vst [vmem:[%s162 + $0x1f30] sm:$0xff] %v2190
        %3215 = vst [vmem:[%s162 + $0x1f38] sm:$0xff] %v2191
        %3216 = vst [vmem:[%s162 + $0x1f40] sm:$0xff] %v2192
        %3217 = vst [vmem:[%s162 + $0x1f48] sm:$0xff] %v2193
        %3218 = vst [vmem:[%s162 + $0x1f50] sm:$0xff] %v2194
        %3219 = vst [vmem:[%s162 + $0x1f58] sm:$0xff] %v2195
        %3220 = vst [vmem:[%s162 + $0x1f60] sm:$0xff] %v2196
        %3221 = vst [vmem:[%s162 + $0x1f68] sm:$0xff] %v2197
        %3222 = vst [vmem:[%s162 + $0x1f70] sm:$0xff] %v2198
        %3223 = vst [vmem:[%s162 + $0x1f78] sm:$0xff] %v2199
        %3224 = vst [vmem:[%s162 + $0x1f80] sm:$0xff] %v2200
        %3225 = vst [vmem:[%s162 + $0x1f88] sm:$0xff] %v2201
        %3226 = vst [vmem:[%s162 + $0x1f90] sm:$0xff] %v2202
        %3227 = vst [vmem:[%s162 + $0x1f98] sm:$0xff] %v2203
        %3228 = vst [vmem:[%s162 + $0x1fa0] sm:$0xff] %v2204
        %3229 = vst [vmem:[%s162 + $0x1fa8] sm:$0xff] %v2205
        %3230 = vst [vmem:[%s162 + $0x1fb0] sm:$0xff] %v2206
        %3231 = vst [vmem:[%s162 + $0x1fb8] sm:$0xff] %v2207
        %3232 = vst [vmem:[%s162 + $0x1fc0] sm:$0xff] %v2208
        %3233 = vst [vmem:[%s162 + $0x1fc8] sm:$0xff] %v2209
        %3234 = vst [vmem:[%s162 + $0x1fd0] sm:$0xff] %v2210
        %3235 = vst [vmem:[%s162 + $0x1fd8] sm:$0xff] %v2211
        %3236 = vst [vmem:[%s162 + $0x1fe0] sm:$0xff] %v2212
        %3237 = vst [vmem:[%s162 + $0x1fe8] sm:$0xff] %v2213
        %3238 = vst [vmem:[%s162 + $0x1ff0] sm:$0xff] %v2214
        %3239 = vst [vmem:[%s162 + $0x1ff8] sm:$0xff] %v2215
        %s3240 = sand.u32 %s75, 1
        %s3241 = scalar_lea.sflag [#allocation5], %s3240
        %s3242 = sand.u32 %s75, 1
        %s3243 = smul.addr %s3242, 8192
        %s3244 = scalar_lea.vmem [#allocation6], %s3243
        // Predicated region
        $region33: #{tpu_custom_call.1} parent=27 // pred_check
          %p3245 = pneg %p85
        $region34: #{tpu_custom_call.1} parent=27 // pred_check_branch
          %3247 = sbr.rel (%p3245) target = $region36
        $region35: #{tpu_custom_call.1} parent=27 // pred_region
          %s3248 = smul.u32 1024, %s20
          %s3250 = ssub.s32 131072, 131072
          %3251 = vsyncadd %s3241, %s3250
          %s3252 = smul.addr %s3248, 128
          %s3253 = scalar_lea.hbm %s2, %s3252
          %s3254 = sshll.u32 %s3244, 4
          %s3255 = int_to_ptr.vmem [resolvable:$true] %s3254
          %3260 = dma.vmem_to_hbm [thread:$0]  %s3255, 131072, %s3253, %s3241, 128, 128, 8
        $region36: #{tpu_custom_call.1} parent=27 // pred_fallthru
          _
      $region28: #{tpu_custom_call.1} parent=5 // pred_fallthru
        _
      %p3261 = scmp.le.s32.totalorder 2, %s15
      // Predicated region
      $region37: #{tpu_custom_call.1} parent=5 // pred_check
        %p3262 = pneg %p3261
      $region38: #{tpu_custom_call.1} parent=5 // pred_check_branch
        %3264 = sbr.rel (%p3262) target = $region40
      $region39: #{tpu_custom_call.1} parent=5 // pred_region
        %s3265 = ssub.s32 %s15, 2
        // Predicated region
        $region41: #{tpu_custom_call.1} parent=39 // pred_check
          %p3266 = pneg %p91
        $region42: #{tpu_custom_call.1} parent=39 // pred_check_branch
          %3268 = sbr.rel (%p3266) target = $region44
        $region43: #{tpu_custom_call.1} parent=39 // pred_region
          %s3269 = sand.u32 %s76, 1
          %s3270 = scalar_lea.sflag [#allocation5], %s3269
          %s3271 = sand.u32 %s76, 1
          %s3272 = smul.addr %s3271, 8192
          %s3273 = scalar_lea.vmem [#allocation6], %s3272
          %3274 = dma.done %s3270, 131072
        $region44: #{tpu_custom_call.1} parent=39 // pred_fallthru
          _
      $region40: #{tpu_custom_call.1} parent=5 // pred_fallthru
        _
    $region6: #{tpu_custom_call.1} parent=1 // loop_footer
      %s19 = sadd.s32 1, %s15
    $region7: #{tpu_custom_call.1} parent=1 // loop_footer_branch
      %14 = sbr.rel target = $region3
    $region8: #{tpu_custom_call.1} parent=1 // loop_exit
      _
    %3275 = vsyncpa [#allocation4], 1
    %s3276 = scalar_lea.sflag [#allocation4], 1
    %3277 = vsyncpa %s3276, 1
    %3278 = vsyncpa [#allocation5], 1
    %s3279 = scalar_lea.sflag [#allocation5], 1
    %3280 = vsyncpa %s3279, 1

</llo_original>
